<compile_context>
chip_gen: v5e
topology: v5e:2x2
jax: 0.10.0
libtpu: 0.0.40
codegen_flags: <defaults>
</compile_context>

<pallas_src>
import jax
import jax.numpy as jnp
import numpy as np
from jax import lax
from jax.experimental import pallas as pl
from jax.experimental.pallas import tpu as pltpu

N, H, W, CIN = 2, 16, 16, 4
C1, C2 = 8, 16
KH = KW = 3
M = N * H * W                       # 512 output pixels per image stack
K1 = KH * KW * CIN                  # 36  (layer-1 GEMM K)
K2 = KH * KW * C1                   # 72  (layer-2 GEMM K)
CENTER_LO = (KH * KW // 2) * CIN    # centre tap (kh=1,kw=1) -> cols 16:20


def self_loss_kernel(p_ref, w1_ref, b1_ref, w2_ref, out_ref, pad_ref):
    # p_ref : (2M, K1)  im2col of [I1; I2] stacked along M
    # w1_ref: (K1, C1), b1_ref: (1, C1), w2_ref: (K2, C2)
    # pad_ref: (N, H+2, W+2, C1) VMEM scratch for the padded ReLU difference
    p = p_ref[...].astype(jnp.float32)
    w1 = w1_ref[...].astype(jnp.float32)
    b1 = b1_ref[...].astype(jnp.float32)
    w2 = w2_ref[...].astype(jnp.float32)

    inv_img = 1.0 / float(M * CIN)
    inv_f1 = 1.0 / float(M * C1)
    inv_f2 = 1.0 / float(M * C2)

    # ---- term 0: pixel MSE, read off the centre-tap columns of the im2col ----
    dpix = p[:M, :] - p[M:, :]                       # (M, K1)
    lane = lax.broadcasted_iota(jnp.int32, (M, K1), 1)
    center = (lane >= CENTER_LO) & (lane < CENTER_LO + CIN)
    d0 = jnp.where(center, dpix, 0.0)
    loss = jnp.sum(d0 * d0) * inv_img

    # ---- layer 1: Conv3x3 (pad=1) on both images -> one GEMM ----
    f = jnp.dot(p, w1, preferred_element_type=jnp.float32) + b1   # (2M, C1)
    f1a = f[:M, :]
    f1b = f[M:, :]
    d1 = f1a - f1b
    loss = loss + jnp.sum(d1 * d1) * inv_f1

    # ---- layer 2: ReLU ----
    d2 = jnp.maximum(f1a, 0.0) - jnp.maximum(f1b, 0.0)            # (M, C1)
    loss = loss + jnp.sum(d2 * d2) * inv_f1

    # ---- layer 3: Conv3x3 (pad=1) on the ReLU difference (bias cancels) ----
    pad_ref[...] = jnp.zeros((N, H + 2, W + 2, C1), jnp.float32)
    pad_ref[:, 1:H + 1, 1:W + 1, :] = d2.reshape(N, H, W, C1)
    xp = pad_ref[...]
    cols = [xp[:, kh:kh + H, kw:kw + W, :]
            for kh in range(KH) for kw in range(KW)]
    col = jnp.concatenate(cols, axis=-1).reshape(M, K2)           # (M, 72)
    f2d = jnp.dot(col, w2, preferred_element_type=jnp.float32)    # (M, C2)
    loss = loss + jnp.sum(f2d * f2d) * inv_f2

    out_ref[...] = jnp.zeros((1, 1), jnp.float32) + loss


def _im2col_nhwc(x):
    """(N,H,W,C) -> (N*H*W, 9*C) patches for a 3x3 SAME conv, (kh,kw,c) order."""
    n, h, w, c = x.shape
    xp = jnp.pad(x, ((0, 0), (1, 1), (1, 1), (0, 0)))
    cols = [xp[:, kh:kh + h, kw:kw + w, :]
            for kh in range(KH) for kw in range(KW)]
    return jnp.concatenate(cols, axis=-1).reshape(n * h * w, KH * KW * c)


@jax.jit
def self_loss(i1_nhwc, i2_nhwc, w1, b1, w2, b2):
    del b2  # cancels in the feature difference (conv is affine)
    p = jnp.concatenate([_im2col_nhwc(i1_nhwc), _im2col_nhwc(i2_nhwc)], axis=0)
    w1r = w1.reshape(K1, C1)
    b1r = b1.reshape(1, C1)
    w2r = w2.reshape(K2, C2)

    flops = 2 * (2 * M * K1 * C1 + M * K2 * C2)
    bytes_accessed = 4 * (p.size + w1r.size + b1r.size + w2r.size + 1)

    out = pl.pallas_call(
        self_loss_kernel,
        out_shape=jax.ShapeDtypeStruct((1, 1), jnp.float32),
        grid_spec=pltpu.PrefetchScalarGridSpec(
            num_scalar_prefetch=0,
            grid=(1,),
            in_specs=[
                pl.BlockSpec((2 * M, K1), lambda i: (0, 0)),
                pl.BlockSpec((K1, C1), lambda i: (0, 0)),
                pl.BlockSpec((1, C1), lambda i: (0, 0)),
                pl.BlockSpec((K2, C2), lambda i: (0, 0)),
            ],
            out_specs=pl.BlockSpec((1, 1), lambda i: (0, 0)),
            scratch_shapes=[
                pltpu.VMEM((N, H + 2, W + 2, C1), jnp.float32),
            ],
        ),
        compiler_params=pltpu.CompilerParams(
            dimension_semantics=("arbitrary",)),
        cost_estimate=pl.CostEstimate(
            flops=flops, transcendentals=0, bytes_accessed=bytes_accessed),
    )(p, w1r, b1r, w2r)
    return out[0, 0]


def reference_loss(i1, i2, w1, b1, w2, b2):
    def conv(x, w, b):
        y = lax.conv_general_dilated(
            x, w, window_strides=(1, 1), padding="SAME",
            dimension_numbers=("NHWC", "HWIO", "NHWC"))
        return y + b.reshape(1, 1, 1, -1)

    loss = jnp.mean(jnp.square(i1 - i2))
    f1a, f1b = conv(i1, w1, b1), conv(i2, w1, b1)
    loss += jnp.mean(jnp.square(f1a - f1b))
    r1a, r1b = jnp.maximum(f1a, 0.0), jnp.maximum(f1b, 0.0)
    loss += jnp.mean(jnp.square(r1a - r1b))
    f2a, f2b = conv(r1a, w2, b2), conv(r1b, w2, b2)
    loss += jnp.mean(jnp.square(f2a - f2b))
    return loss


if __name__ == "__main__":
    key = jax.random.PRNGKey(0)
    k1, k2, k3, k4, k5, k6 = jax.random.split(key, 6)
    i1 = jax.random.normal(k1, (N, H, W, CIN), jnp.float32)
    i2 = i1 + 0.1 * jax.random.normal(k2, (N, H, W, CIN), jnp.float32)
    w1 = 0.1 * jax.random.normal(k3, (KH, KW, CIN, C1), jnp.float32)
    b1 = 0.05 * jax.random.normal(k4, (C1,), jnp.float32)
    w2 = 0.1 * jax.random.normal(k5, (KH, KW, C1, C2), jnp.float32)
    b2 = 0.05 * jax.random.normal(k6, (C2,), jnp.float32)

    loss = jax.block_until_ready(self_loss(i1, i2, w1, b1, w2, b2))
    ref = reference_loss(i1, i2, w1, b1, w2, b2)
    np.testing.assert_allclose(np.asarray(loss), np.asarray(ref),
                               rtol=1e-4, atol=1e-5)
    print("KERNEL_OK")
</pallas_src>

<mosaic_0001>
module attributes {stable_mosaic.version = 11 : i64} {
  func.func @self_loss_kernel(%arg0: i32, %arg1: memref<1024x36xf32, #tpu.memory_space<vmem>>, %arg2: memref<36x8xf32, #tpu.memory_space<vmem>>, %arg3: memref<1x8xf32, #tpu.memory_space<vmem>>, %arg4: memref<72x16xf32, #tpu.memory_space<vmem>>, %arg5: memref<1x1xf32, #tpu.memory_space<vmem>>, %arg6: memref<2x18x18x8xf32, #tpu.memory_space<vmem>>) attributes {dimension_semantics = [#tpu.dimension_semantics<arbitrary>], iteration_bounds = array<i64: 1>, scalar_prefetch = 0 : i64, scratch_operands = 1 : i64, tpu.core_type = #tpu.core_type<tc>, window_params = [{pipeline_mode = #tpu.pipeline_mode<synchronous>, transform_indices = @transform_0, window_bounds = array<i64: 1024, 36>}, {pipeline_mode = #tpu.pipeline_mode<synchronous>, transform_indices = @transform_1, window_bounds = array<i64: 36, 8>}, {pipeline_mode = #tpu.pipeline_mode<synchronous>, transform_indices = @transform_2, window_bounds = array<i64: 1, 8>}, {pipeline_mode = #tpu.pipeline_mode<synchronous>, transform_indices = @transform_3, window_bounds = array<i64: 72, 16>}, {pipeline_mode = #tpu.pipeline_mode<synchronous>, transform_indices = @transform_4, window_bounds = array<i64: 1, 1>}]} {
    %c0 = arith.constant 0 : index
    %c0_0 = arith.constant 0 : index
    %0 = vector.load %arg1[%c0, %c0_0] : memref<1024x36xf32, #tpu.memory_space<vmem>>, vector<1024x36xf32>
    %c0_1 = arith.constant 0 : index
    %c0_2 = arith.constant 0 : index
    %1 = vector.load %arg2[%c0_1, %c0_2] : memref<36x8xf32, #tpu.memory_space<vmem>>, vector<36x8xf32>
    %c0_3 = arith.constant 0 : index
    %c0_4 = arith.constant 0 : index
    %2 = vector.load %arg3[%c0_3, %c0_4] : memref<1x8xf32, #tpu.memory_space<vmem>>, vector<1x8xf32>
    %c0_5 = arith.constant 0 : index
    %c0_6 = arith.constant 0 : index
    %3 = vector.load %arg4[%c0_5, %c0_6] : memref<72x16xf32, #tpu.memory_space<vmem>>, vector<72x16xf32>
    %4 = vector.extract_strided_slice %0 {offsets = [0, 0], sizes = [512, 36], strides = [1, 1]} : vector<1024x36xf32> to vector<512x36xf32>
    %5 = vector.extract_strided_slice %0 {offsets = [512, 0], sizes = [512, 36], strides = [1, 1]} : vector<1024x36xf32> to vector<512x36xf32>
    %6 = arith.subf %4, %5 : vector<512x36xf32>
    %7 = tpu.iota {dimensions = array<i32: 1>} : vector<512x36xi32>
    %c16_i32 = arith.constant 16 : i32
    %8 = vector.broadcast %c16_i32 : i32 to vector<512x36xi32>
    %9 = arith.cmpi sge, %7, %8 : vector<512x36xi32>
    %c20_i32 = arith.constant 20 : i32
    %10 = vector.broadcast %c20_i32 : i32 to vector<512x36xi32>
    %11 = arith.cmpi slt, %7, %10 : vector<512x36xi32>
    %12 = arith.andi %9, %11 : vector<512x36xi1>
    %cst = arith.constant 0.000000e+00 : f32
    %13 = vector.broadcast %cst : f32 to vector<512x36xf32>
    %14 = arith.select %12, %6, %13 : vector<512x36xi1>, vector<512x36xf32>
    %15 = arith.mulf %14, %14 : vector<512x36xf32>
    %16 = vector.shape_cast %15 : vector<512x36xf32> to vector<1x512x36xf32>
    %cst_7 = arith.constant dense<0.000000e+00> : vector<1xf32>
    %17 = vector.multi_reduction <add>, %16, %cst_7 [1, 2] : vector<1x512x36xf32> to vector<1xf32>
    %18 = vector.shape_cast %17 : vector<1xf32> to vector<1x1x1xf32>
    %19 = vector.extract %18[0, 0, 0] : f32 from vector<1x1x1xf32>
    %cst_8 = arith.constant 4.8828125E-4 : f32
    %20 = arith.mulf %19, %cst_8 : f32
    %cst_9 = arith.constant dense<0.000000e+00> : vector<1024x8xf32>
    %21 = tpu.matmul %0, %1, %cst_9 {dimension_numbers = #tpu.dot_dimension_numbers<[1], [0], [0], [1], [0, 0, 1, 1], [], []>} : vector<1024x36xf32>, vector<36x8xf32>, vector<1024x8xf32> -> vector<1024x8xf32>
    %22 = vector.broadcast %2 : vector<1x8xf32> to vector<1024x8xf32>
    %23 = arith.addf %21, %22 : vector<1024x8xf32>
    %24 = vector.extract_strided_slice %23 {offsets = [0, 0], sizes = [512, 8], strides = [1, 1]} : vector<1024x8xf32> to vector<512x8xf32>
    %25 = vector.extract_strided_slice %23 {offsets = [512, 0], sizes = [512, 8], strides = [1, 1]} : vector<1024x8xf32> to vector<512x8xf32>
    %26 = arith.subf %24, %25 : vector<512x8xf32>
    %27 = arith.mulf %26, %26 : vector<512x8xf32>
    %28 = vector.shape_cast %27 : vector<512x8xf32> to vector<1x512x8xf32>
    %cst_10 = arith.constant dense<0.000000e+00> : vector<1xf32>
    %29 = vector.multi_reduction <add>, %28, %cst_10 [1, 2] : vector<1x512x8xf32> to vector<1xf32>
    %30 = vector.shape_cast %29 : vector<1xf32> to vector<1x1x1xf32>
    %31 = vector.extract %30[0, 0, 0] : f32 from vector<1x1x1xf32>
    %cst_11 = arith.constant 2.44140625E-4 : f32
    %32 = arith.mulf %31, %cst_11 : f32
    %33 = arith.addf %20, %32 : f32
    %cst_12 = arith.constant 0.000000e+00 : f32
    %34 = vector.broadcast %cst_12 : f32 to vector<512x8xf32>
    %35 = arith.maximumf %24, %34 : vector<512x8xf32>
    %cst_13 = arith.constant 0.000000e+00 : f32
    %36 = vector.broadcast %cst_13 : f32 to vector<512x8xf32>
    %37 = arith.maximumf %25, %36 : vector<512x8xf32>
    %38 = arith.subf %35, %37 : vector<512x8xf32>
    %39 = arith.mulf %38, %38 : vector<512x8xf32>
    %40 = vector.shape_cast %39 : vector<512x8xf32> to vector<1x512x8xf32>
    %cst_14 = arith.constant dense<0.000000e+00> : vector<1xf32>
    %41 = vector.multi_reduction <add>, %40, %cst_14 [1, 2] : vector<1x512x8xf32> to vector<1xf32>
    %42 = vector.shape_cast %41 : vector<1xf32> to vector<1x1x1xf32>
    %43 = vector.extract %42[0, 0, 0] : f32 from vector<1x1x1xf32>
    %cst_15 = arith.constant 2.44140625E-4 : f32
    %44 = arith.mulf %43, %cst_15 : f32
    %45 = arith.addf %33, %44 : f32
    %cst_16 = arith.constant 0.000000e+00 : f32
    %46 = vector.broadcast %cst_16 : f32 to vector<2x18x18x8xf32>
    %c0_17 = arith.constant 0 : index
    %c0_18 = arith.constant 0 : index
    %c0_19 = arith.constant 0 : index
    %c0_20 = arith.constant 0 : index
    %47 = vector.load %arg6[%c0_17, %c0_18, %c0_19, %c0_20] : memref<2x18x18x8xf32, #tpu.memory_space<vmem>>, vector<2x18x18x8xf32>
    tpu.vector_store %arg6[%c0_17, %c0_18, %c0_19, %c0_20], %46 {strides = array<i32>} : memref<2x18x18x8xf32, #tpu.memory_space<vmem>>, vector<2x18x18x8xf32>,
    %48 = vector.shape_cast %38 : vector<512x8xf32> to vector<2x16x16x8xf32>
    %c0_21 = arith.constant 0 : index
    %c1 = arith.constant 1 : index
    %c1_22 = arith.constant 1 : index
    %c0_23 = arith.constant 0 : index
    %49 = vector.load %arg6[%c0_21, %c1, %c1_22, %c0_23] : memref<2x18x18x8xf32, #tpu.memory_space<vmem>>, vector<2x16x16x8xf32>
    tpu.vector_store %arg6[%c0_21, %c1, %c1_22, %c0_23], %48 {strides = array<i32>} : memref<2x18x18x8xf32, #tpu.memory_space<vmem>>, vector<2x16x16x8xf32>,
    %c0_24 = arith.constant 0 : index
    %c0_25 = arith.constant 0 : index
    %c0_26 = arith.constant 0 : index
    %c0_27 = arith.constant 0 : index
    %50 = vector.load %arg6[%c0_24, %c0_25, %c0_26, %c0_27] : memref<2x18x18x8xf32, #tpu.memory_space<vmem>>, vector<2x18x18x8xf32>
    %51 = vector.extract_strided_slice %50 {offsets = [0, 0, 0, 0], sizes = [2, 16, 16, 8], strides = [1, 1, 1, 1]} : vector<2x18x18x8xf32> to vector<2x16x16x8xf32>
    %52 = vector.extract_strided_slice %50 {offsets = [0, 0, 1, 0], sizes = [2, 16, 16, 8], strides = [1, 1, 1, 1]} : vector<2x18x18x8xf32> to vector<2x16x16x8xf32>
    %53 = vector.extract_strided_slice %50 {offsets = [0, 0, 2, 0], sizes = [2, 16, 16, 8], strides = [1, 1, 1, 1]} : vector<2x18x18x8xf32> to vector<2x16x16x8xf32>
    %54 = vector.extract_strided_slice %50 {offsets = [0, 1, 0, 0], sizes = [2, 16, 16, 8], strides = [1, 1, 1, 1]} : vector<2x18x18x8xf32> to vector<2x16x16x8xf32>
    %55 = vector.extract_strided_slice %50 {offsets = [0, 1, 1, 0], sizes = [2, 16, 16, 8], strides = [1, 1, 1, 1]} : vector<2x18x18x8xf32> to vector<2x16x16x8xf32>
    %56 = vector.extract_strided_slice %50 {offsets = [0, 1, 2, 0], sizes = [2, 16, 16, 8], strides = [1, 1, 1, 1]} : vector<2x18x18x8xf32> to vector<2x16x16x8xf32>
    %57 = vector.extract_strided_slice %50 {offsets = [0, 2, 0, 0], sizes = [2, 16, 16, 8], strides = [1, 1, 1, 1]} : vector<2x18x18x8xf32> to vector<2x16x16x8xf32>
    %58 = vector.extract_strided_slice %50 {offsets = [0, 2, 1, 0], sizes = [2, 16, 16, 8], strides = [1, 1, 1, 1]} : vector<2x18x18x8xf32> to vector<2x16x16x8xf32>
    %59 = vector.extract_strided_slice %50 {offsets = [0, 2, 2, 0], sizes = [2, 16, 16, 8], strides = [1, 1, 1, 1]} : vector<2x18x18x8xf32> to vector<2x16x16x8xf32>
    %60 = tpu.concatenate %51, %52, %53, %54, %55, %56, %57, %58, %59 in 3 : vector<2x16x16x8xf32>, vector<2x16x16x8xf32>, vector<2x16x16x8xf32>, vector<2x16x16x8xf32>, vector<2x16x16x8xf32>, vector<2x16x16x8xf32>, vector<2x16x16x8xf32>, vector<2x16x16x8xf32>, vector<2x16x16x8xf32> -> vector<2x16x16x72xf32>
    %61 = vector.shape_cast %60 : vector<2x16x16x72xf32> to vector<512x72xf32>
    %cst_28 = arith.constant dense<0.000000e+00> : vector<512x16xf32>
    %62 = tpu.matmul %61, %3, %cst_28 {dimension_numbers = #tpu.dot_dimension_numbers<[1], [0], [0], [1], [0, 0, 1, 1], [], []>} : vector<512x72xf32>, vector<72x16xf32>, vector<512x16xf32> -> vector<512x16xf32>
    %63 = arith.mulf %62, %62 : vector<512x16xf32>
    %64 = vector.shape_cast %63 : vector<512x16xf32> to vector<1x512x16xf32>
    %cst_29 = arith.constant dense<0.000000e+00> : vector<1xf32>
    %65 = vector.multi_reduction <add>, %64, %cst_29 [1, 2] : vector<1x512x16xf32> to vector<1xf32>
    %66 = vector.shape_cast %65 : vector<1xf32> to vector<1x1x1xf32>
    %67 = vector.extract %66[0, 0, 0] : f32 from vector<1x1x1xf32>
    %cst_30 = arith.constant 1.22070313E-4 : f32
    %68 = arith.mulf %67, %cst_30 : f32
    %69 = arith.addf %45, %68 : f32
    %cst_31 = arith.constant 0.000000e+00 : f32
    %70 = vector.broadcast %cst_31 : f32 to vector<1x1xf32>
    %71 = vector.broadcast %69 : f32 to vector<1x1xf32>
    %72 = arith.addf %70, %71 : vector<1x1xf32>
    %c0_32 = arith.constant 0 : index
    %c0_33 = arith.constant 0 : index
    %73 = vector.load %arg5[%c0_32, %c0_33] : memref<1x1xf32, #tpu.memory_space<vmem>>, vector<1x1xf32>
    tpu.vector_store %arg5[%c0_32, %c0_33], %72 {strides = array<i32>} : memref<1x1xf32, #tpu.memory_space<vmem>>, vector<1x1xf32>,
    return
  }
  func.func @transform_0(%arg0: i32) -> (i32, i32) {
    %c0_i32 = arith.constant 0 : i32
    %c0_i32_0 = arith.constant 0 : i32
    %c0_i32_1 = arith.constant 0 : i32
    return %c0_i32, %c0_i32_0 : i32, i32
  }
  func.func @transform_1(%arg0: i32) -> (i32, i32) {
    %c0_i32 = arith.constant 0 : i32
    %c0_i32_0 = arith.constant 0 : i32
    %c0_i32_1 = arith.constant 0 : i32
    return %c0_i32, %c0_i32_0 : i32, i32
  }
  func.func @transform_2(%arg0: i32) -> (i32, i32) {
    %c0_i32 = arith.constant 0 : i32
    %c0_i32_0 = arith.constant 0 : i32
    %c0_i32_1 = arith.constant 0 : i32
    return %c0_i32, %c0_i32_0 : i32, i32
  }
  func.func @transform_3(%arg0: i32) -> (i32, i32) {
    %c0_i32 = arith.constant 0 : i32
    %c0_i32_0 = arith.constant 0 : i32
    %c0_i32_1 = arith.constant 0 : i32
    return %c0_i32, %c0_i32_0 : i32, i32
  }
  func.func @transform_4(%arg0: i32) -> (i32, i32) {
    %c0_i32 = arith.constant 0 : i32
    %c0_i32_0 = arith.constant 0 : i32
    %c0_i32_1 = arith.constant 0 : i32
    return %c0_i32, %c0_i32_0 : i32, i32
  }
}

</mosaic_0001>

<llo_original>
// kernel: self_loss.1
$region0: #{self_loss.1}
  #allocation0 [shape = 'u32[]', space=smem, size = 0x4, offset = 0x4, fixed_abs, tag = 'smem constant byte address 0x4 - core index']
  #allocation1 [shape = 'u32[72,128]{1,0:T(1,128)}', space=vmem, size = 0x9000, scoped, tag = 'internal scratch']
  #allocation2 [shape = 'f32[2,18,18,8]{3,2,1,0:T(8,128)}', space=vmem, size = 0x6c000, scoped, tag = 'scratch operand']
  %s0 = inlined_call_operand.vmem [shape: f32[1024,36], index: 0, kind: input, shape index: {}]
  %s1 = inlined_call_operand.vmem [shape: f32[36,8], index: 1, kind: input, shape index: {}]
  %s2 = inlined_call_operand.vmem [shape: f32[1,8], index: 2, kind: input, shape index: {}]
  %s3 = inlined_call_operand.vmem [shape: f32[72,16], index: 3, kind: input, shape index: {}]
  %s4 = inlined_call_operand.hbm [shape: f32[1,1], index: 4, kind: output, shape index: {}]
  %s5 = sld [smem:[#allocation0]]
  $region26: #{self_loss.1} parent=0
    _
  %s7 = ssub.s32 1, %s5
  %s8 = scalar_select 0, %s7, %s5
  $region1: #{self_loss.1} parent=0
    #allocation3 [shape = 'u8[512]{0}', space=vmem, size = 0x400, scoped, tag = 'output window, operand 0, single buffered']
    #allocation4 [shape = 's32[1]{0}', space=sflag, size = 0x4, scoped, tag = 'scoped memory for self_loss.1']
    %9 = vsyncpa [#allocation4], 0
    // Predicated region
    $region2: #{self_loss.1} parent=1 // pred_check
      _
    $region3: #{self_loss.1} parent=1 // pred_check_branch
      %11 = sbr.rel (0) target = $region5
    $region4: #{self_loss.1} parent=1 // pred_region
      _
    $region5: #{self_loss.1} parent=1 // pred_fallthru
      _
    // Predicated region
    $region6: #{self_loss.1} parent=1 // pred_check
      _
    $region7: #{self_loss.1} parent=1 // pred_check_branch
      %13 = sbr.rel (0) target = $region9
    $region8: #{self_loss.1} parent=1 // pred_region
      _
    $region9: #{self_loss.1} parent=1 // pred_fallthru
      _
    // Predicated region
    $region10: #{self_loss.1} parent=1 // pred_check
      _
    $region11: #{self_loss.1} parent=1 // pred_check_branch
      %15 = sbr.rel (0) target = $region13
    $region12: #{self_loss.1} parent=1 // pred_region
      _
    $region13: #{self_loss.1} parent=1 // pred_fallthru
      _
    // Predicated region
    $region14: #{self_loss.1} parent=1 // pred_check
      _
    $region15: #{self_loss.1} parent=1 // pred_check_branch
      %17 = sbr.rel (0) target = $region17
    $region16: #{self_loss.1} parent=1 // pred_region
      _
    $region17: #{self_loss.1} parent=1 // pred_fallthru
      _
    %v18 = vld [vmem:[%s0] sm:$0xff]
    %v19 = vld [vmem:[%s0 + $0x8] sm:$0xff]
    %v20 = vld [vmem:[%s0 + $0x10] sm:$0xff]
    %v21 = vld [vmem:[%s0 + $0x18] sm:$0xff]
    %v22 = vld [vmem:[%s0 + $0x20] sm:$0xff]
    %v23 = vld [vmem:[%s0 + $0x28] sm:$0xff]
    %v24 = vld [vmem:[%s0 + $0x30] sm:$0xff]
    %v25 = vld [vmem:[%s0 + $0x38] sm:$0xff]
    %v26 = vld [vmem:[%s0 + $0x40] sm:$0xff]
    %v27 = vld [vmem:[%s0 + $0x48] sm:$0xff]
    %v28 = vld [vmem:[%s0 + $0x50] sm:$0xff]
    %v29 = vld [vmem:[%s0 + $0x58] sm:$0xff]
    %v30 = vld [vmem:[%s0 + $0x60] sm:$0xff]
    %v31 = vld [vmem:[%s0 + $0x68] sm:$0xff]
    %v32 = vld [vmem:[%s0 + $0x70] sm:$0xff]
    %v33 = vld [vmem:[%s0 + $0x78] sm:$0xff]
    %v34 = vld [vmem:[%s0 + $0x80] sm:$0xff]
    %v35 = vld [vmem:[%s0 + $0x88] sm:$0xff]
    %v36 = vld [vmem:[%s0 + $0x90] sm:$0xff]
    %v37 = vld [vmem:[%s0 + $0x98] sm:$0xff]
    %v38 = vld [vmem:[%s0 + $0xa0] sm:$0xff]
    %v39 = vld [vmem:[%s0 + $0xa8] sm:$0xff]
    %v40 = vld [vmem:[%s0 + $0xb0] sm:$0xff]
    %v41 = vld [vmem:[%s0 + $0xb8] sm:$0xff]
    %v42 = vld [vmem:[%s0 + $0xc0] sm:$0xff]
    %v43 = vld [vmem:[%s0 + $0xc8] sm:$0xff]
    %v44 = vld [vmem:[%s0 + $0xd0] sm:$0xff]
    %v45 = vld [vmem:[%s0 + $0xd8] sm:$0xff]
    %v46 = vld [vmem:[%s0 + $0xe0] sm:$0xff]
    %v47 = vld [vmem:[%s0 + $0xe8] sm:$0xff]
    %v48 = vld [vmem:[%s0 + $0xf0] sm:$0xff]
    %v49 = vld [vmem:[%s0 + $0xf8] sm:$0xff]
    %v50 = vld [vmem:[%s0 + $0x100] sm:$0xff]
    %v51 = vld [vmem:[%s0 + $0x108] sm:$0xff]
    %v52 = vld [vmem:[%s0 + $0x110] sm:$0xff]
    %v53 = vld [vmem:[%s0 + $0x118] sm:$0xff]
    %v54 = vld [vmem:[%s0 + $0x120] sm:$0xff]
    %v55 = vld [vmem:[%s0 + $0x128] sm:$0xff]
    %v56 = vld [vmem:[%s0 + $0x130] sm:$0xff]
    %v57 = vld [vmem:[%s0 + $0x138] sm:$0xff]
    %v58 = vld [vmem:[%s0 + $0x140] sm:$0xff]
    %v59 = vld [vmem:[%s0 + $0x148] sm:$0xff]
    %v60 = vld [vmem:[%s0 + $0x150] sm:$0xff]
    %v61 = vld [vmem:[%s0 + $0x158] sm:$0xff]
    %v62 = vld [vmem:[%s0 + $0x160] sm:$0xff]
    %v63 = vld [vmem:[%s0 + $0x168] sm:$0xff]
    %v64 = vld [vmem:[%s0 + $0x170] sm:$0xff]
    %v65 = vld [vmem:[%s0 + $0x178] sm:$0xff]
    %v66 = vld [vmem:[%s0 + $0x180] sm:$0xff]
    %v67 = vld [vmem:[%s0 + $0x188] sm:$0xff]
    %v68 = vld [vmem:[%s0 + $0x190] sm:$0xff]
    %v69 = vld [vmem:[%s0 + $0x198] sm:$0xff]
    %v70 = vld [vmem:[%s0 + $0x1a0] sm:$0xff]
    %v71 = vld [vmem:[%s0 + $0x1a8] sm:$0xff]
    %v72 = vld [vmem:[%s0 + $0x1b0] sm:$0xff]
    %v73 = vld [vmem:[%s0 + $0x1b8] sm:$0xff]
    %v74 = vld [vmem:[%s0 + $0x1c0] sm:$0xff]
    %v75 = vld [vmem:[%s0 + $0x1c8] sm:$0xff]
    %v76 = vld [vmem:[%s0 + $0x1d0] sm:$0xff]
    %v77 = vld [vmem:[%s0 + $0x1d8] sm:$0xff]
    %v78 = vld [vmem:[%s0 + $0x1e0] sm:$0xff]
    %v79 = vld [vmem:[%s0 + $0x1e8] sm:$0xff]
    %v80 = vld [vmem:[%s0 + $0x1f0] sm:$0xff]
    %v81 = vld [vmem:[%s0 + $0x1f8] sm:$0xff]
    %v82 = vld [vmem:[%s0 + $0x200] sm:$0xff]
    %v83 = vld [vmem:[%s0 + $0x208] sm:$0xff]
    %v84 = vld [vmem:[%s0 + $0x210] sm:$0xff]
    %v85 = vld [vmem:[%s0 + $0x218] sm:$0xff]
    %v86 = vld [vmem:[%s0 + $0x220] sm:$0xff]
    %v87 = vld [vmem:[%s0 + $0x228] sm:$0xff]
    %v88 = vld [vmem:[%s0 + $0x230] sm:$0xff]
    %v89 = vld [vmem:[%s0 + $0x238] sm:$0xff]
    %v90 = vld [vmem:[%s0 + $0x240] sm:$0xff]
    %v91 = vld [vmem:[%s0 + $0x248] sm:$0xff]
    %v92 = vld [vmem:[%s0 + $0x250] sm:$0xff]
    %v93 = vld [vmem:[%s0 + $0x258] sm:$0xff]
    %v94 = vld [vmem:[%s0 + $0x260] sm:$0xff]
    %v95 = vld [vmem:[%s0 + $0x268] sm:$0xff]
    %v96 = vld [vmem:[%s0 + $0x270] sm:$0xff]
    %v97 = vld [vmem:[%s0 + $0x278] sm:$0xff]
    %v98 = vld [vmem:[%s0 + $0x280] sm:$0xff]
    %v99 = vld [vmem:[%s0 + $0x288] sm:$0xff]
    %v100 = vld [vmem:[%s0 + $0x290] sm:$0xff]
    %v101 = vld [vmem:[%s0 + $0x298] sm:$0xff]
    %v102 = vld [vmem:[%s0 + $0x2a0] sm:$0xff]
    %v103 = vld [vmem:[%s0 + $0x2a8] sm:$0xff]
    %v104 = vld [vmem:[%s0 + $0x2b0] sm:$0xff]
    %v105 = vld [vmem:[%s0 + $0x2b8] sm:$0xff]
    %v106 = vld [vmem:[%s0 + $0x2c0] sm:$0xff]
    %v107 = vld [vmem:[%s0 + $0x2c8] sm:$0xff]
    %v108 = vld [vmem:[%s0 + $0x2d0] sm:$0xff]
    %v109 = vld [vmem:[%s0 + $0x2d8] sm:$0xff]
    %v110 = vld [vmem:[%s0 + $0x2e0] sm:$0xff]
    %v111 = vld [vmem:[%s0 + $0x2e8] sm:$0xff]
    %v112 = vld [vmem:[%s0 + $0x2f0] sm:$0xff]
    %v113 = vld [vmem:[%s0 + $0x2f8] sm:$0xff]
    %v114 = vld [vmem:[%s0 + $0x300] sm:$0xff]
    %v115 = vld [vmem:[%s0 + $0x308] sm:$0xff]
    %v116 = vld [vmem:[%s0 + $0x310] sm:$0xff]
    %v117 = vld [vmem:[%s0 + $0x318] sm:$0xff]
    %v118 = vld [vmem:[%s0 + $0x320] sm:$0xff]
    %v119 = vld [vmem:[%s0 + $0x328] sm:$0xff]
    %v120 = vld [vmem:[%s0 + $0x330] sm:$0xff]
    %v121 = vld [vmem:[%s0 + $0x338] sm:$0xff]
    %v122 = vld [vmem:[%s0 + $0x340] sm:$0xff]
    %v123 = vld [vmem:[%s0 + $0x348] sm:$0xff]
    %v124 = vld [vmem:[%s0 + $0x350] sm:$0xff]
    %v125 = vld [vmem:[%s0 + $0x358] sm:$0xff]
    %v126 = vld [vmem:[%s0 + $0x360] sm:$0xff]
    %v127 = vld [vmem:[%s0 + $0x368] sm:$0xff]
    %v128 = vld [vmem:[%s0 + $0x370] sm:$0xff]
    %v129 = vld [vmem:[%s0 + $0x378] sm:$0xff]
    %v130 = vld [vmem:[%s0 + $0x380] sm:$0xff]
    %v131 = vld [vmem:[%s0 + $0x388] sm:$0xff]
    %v132 = vld [vmem:[%s0 + $0x390] sm:$0xff]
    %v133 = vld [vmem:[%s0 + $0x398] sm:$0xff]
    %v134 = vld [vmem:[%s0 + $0x3a0] sm:$0xff]
    %v135 = vld [vmem:[%s0 + $0x3a8] sm:$0xff]
    %v136 = vld [vmem:[%s0 + $0x3b0] sm:$0xff]
    %v137 = vld [vmem:[%s0 + $0x3b8] sm:$0xff]
    %v138 = vld [vmem:[%s0 + $0x3c0] sm:$0xff]
    %v139 = vld [vmem:[%s0 + $0x3c8] sm:$0xff]
    %v140 = vld [vmem:[%s0 + $0x3d0] sm:$0xff]
    %v141 = vld [vmem:[%s0 + $0x3d8] sm:$0xff]
    %v142 = vld [vmem:[%s0 + $0x3e0] sm:$0xff]
    %v143 = vld [vmem:[%s0 + $0x3e8] sm:$0xff]
    %v144 = vld [vmem:[%s0 + $0x3f0] sm:$0xff]
    %v145 = vld [vmem:[%s0 + $0x3f8] sm:$0xff]
    %v146 = vld [vmem:[%s1] sm:$0xff]
    %v147 = vld [vmem:[%s1 + $0x8] sm:$0xff]
    %v148 = vld [vmem:[%s1 + $0x10] sm:$0xff]
    %v149 = vld [vmem:[%s1 + $0x18] sm:$0xff]
    %v150 = vld [vmem:[%s1 + $0x20] sm:$0xf]
    %v151 = vld [vmem:[%s2] sm:$0x1]
    %v152 = vld [vmem:[%s3] sm:$0xff]
    %v153 = vld [vmem:[%s3 + $0x8] sm:$0xff]
    %v154 = vld [vmem:[%s3 + $0x10] sm:$0xff]
    %v155 = vld [vmem:[%s3 + $0x18] sm:$0xff]
    %v156 = vld [vmem:[%s3 + $0x20] sm:$0xff]
    %v157 = vld [vmem:[%s3 + $0x28] sm:$0xff]
    %v158 = vld [vmem:[%s3 + $0x30] sm:$0xff]
    %v159 = vld [vmem:[%s3 + $0x38] sm:$0xff]
    %v160 = vld [vmem:[%s3 + $0x40] sm:$0xff]
    %v161 = vsub.f32 %v18, %v82
    %v162 = vsub.f32 %v19, %v83
    %v163 = vsub.f32 %v20, %v84
    %v164 = vsub.f32 %v21, %v85
    %v165 = vsub.f32 %v22, %v86
    %v166 = vsub.f32 %v23, %v87
    %v167 = vsub.f32 %v24, %v88
    %v168 = vsub.f32 %v25, %v89
    %v169 = vsub.f32 %v26, %v90
    %v170 = vsub.f32 %v27, %v91
    %v171 = vsub.f32 %v28, %v92
    %v172 = vsub.f32 %v29, %v93
    %v173 = vsub.f32 %v30, %v94
    %v174 = vsub.f32 %v31, %v95
    %v175 = vsub.f32 %v32, %v96
    %v176 = vsub.f32 %v33, %v97
    %v177 = vsub.f32 %v34, %v98
    %v178 = vsub.f32 %v35, %v99
    %v179 = vsub.f32 %v36, %v100
    %v180 = vsub.f32 %v37, %v101
    %v181 = vsub.f32 %v38, %v102
    %v182 = vsub.f32 %v39, %v103
    %v183 = vsub.f32 %v40, %v104
    %v184 = vsub.f32 %v41, %v105
    %v185 = vsub.f32 %v42, %v106
    %v186 = vsub.f32 %v43, %v107
    %v187 = vsub.f32 %v44, %v108
    %v188 = vsub.f32 %v45, %v109
    %v189 = vsub.f32 %v46, %v110
    %v190 = vsub.f32 %v47, %v111
    %v191 = vsub.f32 %v48, %v112
    %v192 = vsub.f32 %v49, %v113
    %v193 = vsub.f32 %v50, %v114
    %v194 = vsub.f32 %v51, %v115
    %v195 = vsub.f32 %v52, %v116
    %v196 = vsub.f32 %v53, %v117
    %v197 = vsub.f32 %v54, %v118
    %v198 = vsub.f32 %v55, %v119
    %v199 = vsub.f32 %v56, %v120
    %v200 = vsub.f32 %v57, %v121
    %v201 = vsub.f32 %v58, %v122
    %v202 = vsub.f32 %v59, %v123
    %v203 = vsub.f32 %v60, %v124
    %v204 = vsub.f32 %v61, %v125
    %v205 = vsub.f32 %v62, %v126
    %v206 = vsub.f32 %v63, %v127
    %v207 = vsub.f32 %v64, %v128
    %v208 = vsub.f32 %v65, %v129
    %v209 = vsub.f32 %v66, %v130
    %v210 = vsub.f32 %v67, %v131
    %v211 = vsub.f32 %v68, %v132
    %v212 = vsub.f32 %v69, %v133
    %v213 = vsub.f32 %v70, %v134
    %v214 = vsub.f32 %v71, %v135
    %v215 = vsub.f32 %v72, %v136
    %v216 = vsub.f32 %v73, %v137
    %v217 = vsub.f32 %v74, %v138
    %v218 = vsub.f32 %v75, %v139
    %v219 = vsub.f32 %v76, %v140
    %v220 = vsub.f32 %v77, %v141
    %v221 = vsub.f32 %v78, %v142
    %v222 = vsub.f32 %v79, %v143
    %v223 = vsub.f32 %v80, %v144
    %v224 = vsub.f32 %v81, %v145
    %v225 = vlaneseq
    %v226 = vand.u32 %v225, 127
    %vm227 = vcmp.ge.s32.totalorder %v226, 16
    %vm228 = vcmp.lt.s32.totalorder %v226, 20
    %vm229 = vmand %vm227, %vm228
    %v230 = vsel %vm229, %v161, 0.0
    %v231 = vsel %vm229, %v162, 0.0
    %v232 = vsel %vm229, %v163, 0.0
    %v233 = vsel %vm229, %v164, 0.0
    %v234 = vsel %vm229, %v165, 0.0
    %v235 = vsel %vm229, %v166, 0.0
    %v236 = vsel %vm229, %v167, 0.0
    %v237 = vsel %vm229, %v168, 0.0
    %v238 = vsel %vm229, %v169, 0.0
    %v239 = vsel %vm229, %v170, 0.0
    %v240 = vsel %vm229, %v171, 0.0
    %v241 = vsel %vm229, %v172, 0.0
    %v242 = vsel %vm229, %v173, 0.0
    %v243 = vsel %vm229, %v174, 0.0
    %v244 = vsel %vm229, %v175, 0.0
    %v245 = vsel %vm229, %v176, 0.0
    %v246 = vsel %vm229, %v177, 0.0
    %v247 = vsel %vm229, %v178, 0.0
    %v248 = vsel %vm229, %v179, 0.0
    %v249 = vsel %vm229, %v180, 0.0
    %v250 = vsel %vm229, %v181, 0.0
    %v251 = vsel %vm229, %v182, 0.0
    %v252 = vsel %vm229, %v183, 0.0
    %v253 = vsel %vm229, %v184, 0.0
    %v254 = vsel %vm229, %v185, 0.0
    %v255 = vsel %vm229, %v186, 0.0
    %v256 = vsel %vm229, %v187, 0.0
    %v257 = vsel %vm229, %v188, 0.0
    %v258 = vsel %vm229, %v189, 0.0
    %v259 = vsel %vm229, %v190, 0.0
    %v260 = vsel %vm229, %v191, 0.0
    %v261 = vsel %vm229, %v192, 0.0
    %v262 = vsel %vm229, %v193, 0.0
    %v263 = vsel %vm229, %v194, 0.0
    %v264 = vsel %vm229, %v195, 0.0
    %v265 = vsel %vm229, %v196, 0.0
    %v266 = vsel %vm229, %v197, 0.0
    %v267 = vsel %vm229, %v198, 0.0
    %v268 = vsel %vm229, %v199, 0.0
    %v269 = vsel %vm229, %v200, 0.0
    %v270 = vsel %vm229, %v201, 0.0
    %v271 = vsel %vm229, %v202, 0.0
    %v272 = vsel %vm229, %v203, 0.0
    %v273 = vsel %vm229, %v204, 0.0
    %v274 = vsel %vm229, %v205, 0.0
    %v275 = vsel %vm229, %v206, 0.0
    %v276 = vsel %vm229, %v207, 0.0
    %v277 = vsel %vm229, %v208, 0.0
    %v278 = vsel %vm229, %v209, 0.0
    %v279 = vsel %vm229, %v210, 0.0
    %v280 = vsel %vm229, %v211, 0.0
    %v281 = vsel %vm229, %v212, 0.0
    %v282 = vsel %vm229, %v213, 0.0
    %v283 = vsel %vm229, %v214, 0.0
    %v284 = vsel %vm229, %v215, 0.0
    %v285 = vsel %vm229, %v216, 0.0
    %v286 = vsel %vm229, %v217, 0.0
    %v287 = vsel %vm229, %v218, 0.0
    %v288 = vsel %vm229, %v219, 0.0
    %v289 = vsel %vm229, %v220, 0.0
    %v290 = vsel %vm229, %v221, 0.0
    %v291 = vsel %vm229, %v222, 0.0
    %v292 = vsel %vm229, %v223, 0.0
    %v293 = vsel %vm229, %v224, 0.0
    %v294 = vmul.f32 %v230, %v230
    %v295 = vmul.f32 %v231, %v231
    %v296 = vmul.f32 %v232, %v232
    %v297 = vmul.f32 %v233, %v233
    %v298 = vmul.f32 %v234, %v234
    %v299 = vmul.f32 %v235, %v235
    %v300 = vmul.f32 %v236, %v236
    %v301 = vmul.f32 %v237, %v237
    %v302 = vmul.f32 %v238, %v238
    %v303 = vmul.f32 %v239, %v239
    %v304 = vmul.f32 %v240, %v240
    %v305 = vmul.f32 %v241, %v241
    %v306 = vmul.f32 %v242, %v242
    %v307 = vmul.f32 %v243, %v243
    %v308 = vmul.f32 %v244, %v244
    %v309 = vmul.f32 %v245, %v245
    %v310 = vmul.f32 %v246, %v246
    %v311 = vmul.f32 %v247, %v247
    %v312 = vmul.f32 %v248, %v248
    %v313 = vmul.f32 %v249, %v249
    %v314 = vmul.f32 %v250, %v250
    %v315 = vmul.f32 %v251, %v251
    %v316 = vmul.f32 %v252, %v252
    %v317 = vmul.f32 %v253, %v253
    %v318 = vmul.f32 %v254, %v254
    %v319 = vmul.f32 %v255, %v255
    %v320 = vmul.f32 %v256, %v256
    %v321 = vmul.f32 %v257, %v257
    %v322 = vmul.f32 %v258, %v258
    %v323 = vmul.f32 %v259, %v259
    %v324 = vmul.f32 %v260, %v260
    %v325 = vmul.f32 %v261, %v261
    %v326 = vmul.f32 %v262, %v262
    %v327 = vmul.f32 %v263, %v263
    %v328 = vmul.f32 %v264, %v264
    %v329 = vmul.f32 %v265, %v265
    %v330 = vmul.f32 %v266, %v266
    %v331 = vmul.f32 %v267, %v267
    %v332 = vmul.f32 %v268, %v268
    %v333 = vmul.f32 %v269, %v269
    %v334 = vmul.f32 %v270, %v270
    %v335 = vmul.f32 %v271, %v271
    %v336 = vmul.f32 %v272, %v272
    %v337 = vmul.f32 %v273, %v273
    %v338 = vmul.f32 %v274, %v274
    %v339 = vmul.f32 %v275, %v275
    %v340 = vmul.f32 %v276, %v276
    %v341 = vmul.f32 %v277, %v277
    %v342 = vmul.f32 %v278, %v278
    %v343 = vmul.f32 %v279, %v279
    %v344 = vmul.f32 %v280, %v280
    %v345 = vmul.f32 %v281, %v281
    %v346 = vmul.f32 %v282, %v282
    %v347 = vmul.f32 %v283, %v283
    %v348 = vmul.f32 %v284, %v284
    %v349 = vmul.f32 %v285, %v285
    %v350 = vmul.f32 %v286, %v286
    %v351 = vmul.f32 %v287, %v287
    %v352 = vmul.f32 %v288, %v288
    %v353 = vmul.f32 %v289, %v289
    %v354 = vmul.f32 %v290, %v290
    %v355 = vmul.f32 %v291, %v291
    %v356 = vmul.f32 %v292, %v292
    %v357 = vmul.f32 %v293, %v293
    %vm358 = vcmask 293888
    %v359 = vsel %vm358, %v294, 0.0
    %v360 = vsel %vm358, %v295, 0.0
    %v361 = vadd.f32 %v359, %v360
    %v362 = vsel %vm358, %v296, 0.0
    %v363 = vadd.f32 %v361, %v362
    %v364 = vsel %vm358, %v297, 0.0
    %v365 = vadd.f32 %v363, %v364
    %v366 = vsel %vm358, %v298, 0.0
    %v367 = vadd.f32 %v365, %v366
    %v368 = vsel %vm358, %v299, 0.0
    %v369 = vadd.f32 %v367, %v368
    %v370 = vsel %vm358, %v300, 0.0
    %v371 = vadd.f32 %v369, %v370
    %v372 = vsel %vm358, %v301, 0.0
    %v373 = vadd.f32 %v371, %v372
    %v374 = vsel %vm358, %v302, 0.0
    %v375 = vadd.f32 %v373, %v374
    %v376 = vsel %vm358, %v303, 0.0
    %v377 = vadd.f32 %v375, %v376
    %v378 = vsel %vm358, %v304, 0.0
    %v379 = vadd.f32 %v377, %v378
    %v380 = vsel %vm358, %v305, 0.0
    %v381 = vadd.f32 %v379, %v380
    %v382 = vsel %vm358, %v306, 0.0
    %v383 = vadd.f32 %v381, %v382
    %v384 = vsel %vm358, %v307, 0.0
    %v385 = vadd.f32 %v383, %v384
    %v386 = vsel %vm358, %v308, 0.0
    %v387 = vadd.f32 %v385, %v386
    %v388 = vsel %vm358, %v309, 0.0
    %v389 = vadd.f32 %v387, %v388
    %v390 = vsel %vm358, %v310, 0.0
    %v391 = vadd.f32 %v389, %v390
    %v392 = vsel %vm358, %v311, 0.0
    %v393 = vadd.f32 %v391, %v392
    %v394 = vsel %vm358, %v312, 0.0
    %v395 = vadd.f32 %v393, %v394
    %v396 = vsel %vm358, %v313, 0.0
    %v397 = vadd.f32 %v395, %v396
    %v398 = vsel %vm358, %v314, 0.0
    %v399 = vadd.f32 %v397, %v398
    %v400 = vsel %vm358, %v315, 0.0
    %v401 = vadd.f32 %v399, %v400
    %v402 = vsel %vm358, %v316, 0.0
    %v403 = vadd.f32 %v401, %v402
    %v404 = vsel %vm358, %v317, 0.0
    %v405 = vadd.f32 %v403, %v404
    %v406 = vsel %vm358, %v318, 0.0
    %v407 = vadd.f32 %v405, %v406
    %v408 = vsel %vm358, %v319, 0.0
    %v409 = vadd.f32 %v407, %v408
    %v410 = vsel %vm358, %v320, 0.0
    %v411 = vadd.f32 %v409, %v410
    %v412 = vsel %vm358, %v321, 0.0
    %v413 = vadd.f32 %v411, %v412
    %v414 = vsel %vm358, %v322, 0.0
    %v415 = vadd.f32 %v413, %v414
    %v416 = vsel %vm358, %v323, 0.0
    %v417 = vadd.f32 %v415, %v416
    %v418 = vsel %vm358, %v324, 0.0
    %v419 = vadd.f32 %v417, %v418
    %v420 = vsel %vm358, %v325, 0.0
    %v421 = vadd.f32 %v419, %v420
    %v422 = vsel %vm358, %v326, 0.0
    %v423 = vadd.f32 %v421, %v422
    %v424 = vsel %vm358, %v327, 0.0
    %v425 = vadd.f32 %v423, %v424
    %v426 = vsel %vm358, %v328, 0.0
    %v427 = vadd.f32 %v425, %v426
    %v428 = vsel %vm358, %v329, 0.0
    %v429 = vadd.f32 %v427, %v428
    %v430 = vsel %vm358, %v330, 0.0
    %v431 = vadd.f32 %v429, %v430
    %v432 = vsel %vm358, %v331, 0.0
    %v433 = vadd.f32 %v431, %v432
    %v434 = vsel %vm358, %v332, 0.0
    %v435 = vadd.f32 %v433, %v434
    %v436 = vsel %vm358, %v333, 0.0
    %v437 = vadd.f32 %v435, %v436
    %v438 = vsel %vm358, %v334, 0.0
    %v439 = vadd.f32 %v437, %v438
    %v440 = vsel %vm358, %v335, 0.0
    %v441 = vadd.f32 %v439, %v440
    %v442 = vsel %vm358, %v336, 0.0
    %v443 = vadd.f32 %v441, %v442
    %v444 = vsel %vm358, %v337, 0.0
    %v445 = vadd.f32 %v443, %v444
    %v446 = vsel %vm358, %v338, 0.0
    %v447 = vadd.f32 %v445, %v446
    %v448 = vsel %vm358, %v339, 0.0
    %v449 = vadd.f32 %v447, %v448
    %v450 = vsel %vm358, %v340, 0.0
    %v451 = vadd.f32 %v449, %v450
    %v452 = vsel %vm358, %v341, 0.0
    %v453 = vadd.f32 %v451, %v452
    %v454 = vsel %vm358, %v342, 0.0
    %v455 = vadd.f32 %v453, %v454
    %v456 = vsel %vm358, %v343, 0.0
    %v457 = vadd.f32 %v455, %v456
    %v458 = vsel %vm358, %v344, 0.0
    %v459 = vadd.f32 %v457, %v458
    %v460 = vsel %vm358, %v345, 0.0
    %v461 = vadd.f32 %v459, %v460
    %v462 = vsel %vm358, %v346, 0.0
    %v463 = vadd.f32 %v461, %v462
    %v464 = vsel %vm358, %v347, 0.0
    %v465 = vadd.f32 %v463, %v464
    %v466 = vsel %vm358, %v348, 0.0
    %v467 = vadd.f32 %v465, %v466
    %v468 = vsel %vm358, %v349, 0.0
    %v469 = vadd.f32 %v467, %v468
    %v470 = vsel %vm358, %v350, 0.0
    %v471 = vadd.f32 %v469, %v470
    %v472 = vsel %vm358, %v351, 0.0
    %v473 = vadd.f32 %v471, %v472
    %v474 = vsel %vm358, %v352, 0.0
    %v475 = vadd.f32 %v473, %v474
    %v476 = vsel %vm358, %v353, 0.0
    %v477 = vadd.f32 %v475, %v476
    %v478 = vsel %vm358, %v354, 0.0
    %v479 = vadd.f32 %v477, %v478
    %v480 = vsel %vm358, %v355, 0.0
    %v481 = vadd.f32 %v479, %v480
    %v482 = vsel %vm358, %v356, 0.0
    %v483 = vadd.f32 %v481, %v482
    %v484 = vsel %vm358, %v357, 0.0
    %v485 = vadd.f32 %v483, %v484
    %486 = vadd.xlane.f32.xlu0 %v485
    %v487 = vpop.xlane.xlu0 %486
    %v488 = vrot.slane %v487, 4
    %v489 = vadd.f32 %v487, %v488
    %v490 = vrot.slane %v489, 2
    %v491 = vadd.f32 %v489, %v490
    %v492 = vrot.slane %v491, 1
    %v493 = vadd.f32 %v491, %v492
    %s494 = vtos %v493
    %s495 = smul.f32 %s494, 0.00048828125
    %v497 = vperm.slane %v151, 0
    %v500 = vsel %vm358, %v18, 0
    %v503 = vsel %vm358, %v19, 0
    %v506 = vsel %vm358, %v20, 0
    %v509 = vsel %vm358, %v21, 0
    %v512 = vsel %vm358, %v22, 0
    %v515 = vsel %vm358, %v23, 0
    %v518 = vsel %vm358, %v24, 0
    %v521 = vsel %vm358, %v25, 0
    %v524 = vsel %vm358, %v26, 0
    %v527 = vsel %vm358, %v27, 0
    %v530 = vsel %vm358, %v28, 0
    %v533 = vsel %vm358, %v29, 0
    %v536 = vsel %vm358, %v30, 0
    %v539 = vsel %vm358, %v31, 0
    %v542 = vsel %vm358, %v32, 0
    %v545 = vsel %vm358, %v33, 0
    %v548 = vsel %vm358, %v34, 0
    %v551 = vsel %vm358, %v35, 0
    %v554 = vsel %vm358, %v36, 0
    %v557 = vsel %vm358, %v37, 0
    %v560 = vsel %vm358, %v38, 0
    %v563 = vsel %vm358, %v39, 0
    %v566 = vsel %vm358, %v40, 0
    %v569 = vsel %vm358, %v41, 0
    %v572 = vsel %vm358, %v42, 0
    %v575 = vsel %vm358, %v43, 0
    %v578 = vsel %vm358, %v44, 0
    %v581 = vsel %vm358, %v45, 0
    %v584 = vsel %vm358, %v46, 0
    %v587 = vsel %vm358, %v47, 0
    %v590 = vsel %vm358, %v48, 0
    %v593 = vsel %vm358, %v49, 0
    %v596 = vsel %vm358, %v50, 0
    %v599 = vsel %vm358, %v51, 0
    %v602 = vsel %vm358, %v52, 0
    %v605 = vsel %vm358, %v53, 0
    %v608 = vsel %vm358, %v54, 0
    %v611 = vsel %vm358, %v55, 0
    %v614 = vsel %vm358, %v56, 0
    %v617 = vsel %vm358, %v57, 0
    %v620 = vsel %vm358, %v58, 0
    %v623 = vsel %vm358, %v59, 0
    %v626 = vsel %vm358, %v60, 0
    %v629 = vsel %vm358, %v61, 0
    %v632 = vsel %vm358, %v62, 0
    %v635 = vsel %vm358, %v63, 0
    %v638 = vsel %vm358, %v64, 0
    %v641 = vsel %vm358, %v65, 0
    %v644 = vsel %vm358, %v66, 0
    %v647 = vsel %vm358, %v67, 0
    %v650 = vsel %vm358, %v68, 0
    %v653 = vsel %vm358, %v69, 0
    %v656 = vsel %vm358, %v70, 0
    %v659 = vsel %vm358, %v71, 0
    %v662 = vsel %vm358, %v72, 0
    %v665 = vsel %vm358, %v73, 0
    %v668 = vsel %vm358, %v74, 0
    %v671 = vsel %vm358, %v75, 0
    %v674 = vsel %vm358, %v76, 0
    %v677 = vsel %vm358, %v77, 0
    %v680 = vsel %vm358, %v78, 0
    %v683 = vsel %vm358, %v79, 0
    %v686 = vsel %vm358, %v80, 0
    %v689 = vsel %vm358, %v81, 0
    %v692 = vsel %vm358, %v82, 0
    %v695 = vsel %vm358, %v83, 0
    %v698 = vsel %vm358, %v84, 0
    %v701 = vsel %vm358, %v85, 0
    %v704 = vsel %vm358, %v86, 0
    %v707 = vsel %vm358, %v87, 0
    %v710 = vsel %vm358, %v88, 0
    %v713 = vsel %vm358, %v89, 0
    %v716 = vsel %vm358, %v90, 0
    %v719 = vsel %vm358, %v91, 0
    %v722 = vsel %vm358, %v92, 0
    %v725 = vsel %vm358, %v93, 0
    %v728 = vsel %vm358, %v94, 0
    %v731 = vsel %vm358, %v95, 0
    %v734 = vsel %vm358, %v96, 0
    %v737 = vsel %vm358, %v97, 0
    %v740 = vsel %vm358, %v98, 0
    %v743 = vsel %vm358, %v99, 0
    %v746 = vsel %vm358, %v100, 0
    %v749 = vsel %vm358, %v101, 0
    %v752 = vsel %vm358, %v102, 0
    %v755 = vsel %vm358, %v103, 0
    %v758 = vsel %vm358, %v104, 0
    %v761 = vsel %vm358, %v105, 0
    %v764 = vsel %vm358, %v106, 0
    %v767 = vsel %vm358, %v107, 0
    %v770 = vsel %vm358, %v108, 0
    %v773 = vsel %vm358, %v109, 0
    %v776 = vsel %vm358, %v110, 0
    %v779 = vsel %vm358, %v111, 0
    %v782 = vsel %vm358, %v112, 0
    %v785 = vsel %vm358, %v113, 0
    %v788 = vsel %vm358, %v114, 0
    %v791 = vsel %vm358, %v115, 0
    %v794 = vsel %vm358, %v116, 0
    %v797 = vsel %vm358, %v117, 0
    %v800 = vsel %vm358, %v118, 0
    %v803 = vsel %vm358, %v119, 0
    %v806 = vsel %vm358, %v120, 0
    %v809 = vsel %vm358, %v121, 0
    %v812 = vsel %vm358, %v122, 0
    %v815 = vsel %vm358, %v123, 0
    %v818 = vsel %vm358, %v124, 0
    %v821 = vsel %vm358, %v125, 0
    %v824 = vsel %vm358, %v126, 0
    %v827 = vsel %vm358, %v127, 0
    %v830 = vsel %vm358, %v128, 0
    %v833 = vsel %vm358, %v129, 0
    %v836 = vsel %vm358, %v130, 0
    %v839 = vsel %vm358, %v131, 0
    %v842 = vsel %vm358, %v132, 0
    %v845 = vsel %vm358, %v133, 0
    %v848 = vsel %vm358, %v134, 0
    %v851 = vsel %vm358, %v135, 0
    %v854 = vsel %vm358, %v136, 0
    %v857 = vsel %vm358, %v137, 0
    %v860 = vsel %vm358, %v138, 0
    %v863 = vsel %vm358, %v139, 0
    %v866 = vsel %vm358, %v140, 0
    %v869 = vsel %vm358, %v141, 0
    %v872 = vsel %vm358, %v142, 0
    %v875 = vsel %vm358, %v143, 0
    %v878 = vsel %vm358, %v144, 0
    %v881 = vsel %vm358, %v145, 0
    %vm883 = vcmask 1043456
    %v885 = vsel %vm883, %v150, 0
    %887 = vmatpush.msra.mxu0 0.0
    %888 = vmatpush.msra.mxu0 0.0
    %889 = vmatpush.msra.mxu0 0.0
    %890 = vmatpush.msra.mxu0 0.0
    %891 = vmatpush.msra.mxu0 0.0
    %892 = vmatpush.msra.mxu0 0.0
    %893 = vmatpush.msra.mxu0 0.0
    %894 = vmatpush.msra.mxu0 0.0
    %895 = vmatpush.msra.mxu0 0.0
    %896 = vmatpush.msra.mxu0 0.0
    %897 = vmatpush.msra.mxu0 0.0
    %898 = vmatpush.msra.mxu0 %v885
    %899 = vmatpush.msra.mxu0 %v149
    %900 = vmatpush.msra.mxu0 %v148
    %901 = vmatpush.msra.mxu0 %v147
    %902 = vmatpush.msra.mxu0 %v146
    %903 = vmatmul.f32.gmra.mxu0 %v500
    %v904 = vpop.f32.mrf.mxu0
    %v905 = vadd.f32 %v497, %v904
    %906 = vmatmul.f32.gmra.mxu0 %v503
    %v907 = vpop.f32.mrf.mxu0
    %v908 = vadd.f32 %v497, %v907
    %909 = vmatmul.f32.gmra.mxu0 %v506
    %v910 = vpop.f32.mrf.mxu0
    %v911 = vadd.f32 %v497, %v910
    %912 = vmatmul.f32.gmra.mxu0 %v509
    %v913 = vpop.f32.mrf.mxu0
    %v914 = vadd.f32 %v497, %v913
    %915 = vmatmul.f32.gmra.mxu0 %v512
    %v916 = vpop.f32.mrf.mxu0
    %v917 = vadd.f32 %v497, %v916
    %918 = vmatmul.f32.gmra.mxu0 %v515
    %v919 = vpop.f32.mrf.mxu0
    %v920 = vadd.f32 %v497, %v919
    %921 = vmatmul.f32.gmra.mxu0 %v518
    %v922 = vpop.f32.mrf.mxu0
    %v923 = vadd.f32 %v497, %v922
    %924 = vmatmul.f32.gmra.mxu0 %v521
    %v925 = vpop.f32.mrf.mxu0
    %v926 = vadd.f32 %v497, %v925
    %927 = vmatmul.f32.gmra.mxu0 %v524
    %v928 = vpop.f32.mrf.mxu0
    %v929 = vadd.f32 %v497, %v928
    %930 = vmatmul.f32.gmra.mxu0 %v527
    %v931 = vpop.f32.mrf.mxu0
    %v932 = vadd.f32 %v497, %v931
    %933 = vmatmul.f32.gmra.mxu0 %v530
    %v934 = vpop.f32.mrf.mxu0
    %v935 = vadd.f32 %v497, %v934
    %936 = vmatmul.f32.gmra.mxu0 %v533
    %v937 = vpop.f32.mrf.mxu0
    %v938 = vadd.f32 %v497, %v937
    %939 = vmatmul.f32.gmra.mxu0 %v536
    %v940 = vpop.f32.mrf.mxu0
    %v941 = vadd.f32 %v497, %v940
    %942 = vmatmul.f32.gmra.mxu0 %v539
    %v943 = vpop.f32.mrf.mxu0
    %v944 = vadd.f32 %v497, %v943
    %945 = vmatmul.f32.gmra.mxu0 %v542
    %v946 = vpop.f32.mrf.mxu0
    %v947 = vadd.f32 %v497, %v946
    %948 = vmatmul.f32.gmra.mxu0 %v545
    %v949 = vpop.f32.mrf.mxu0
    %v950 = vadd.f32 %v497, %v949
    %951 = vmatmul.f32.gmra.mxu0 %v548
    %v952 = vpop.f32.mrf.mxu0
    %v953 = vadd.f32 %v497, %v952
    %954 = vmatmul.f32.gmra.mxu0 %v551
    %v955 = vpop.f32.mrf.mxu0
    %v956 = vadd.f32 %v497, %v955
    %957 = vmatmul.f32.gmra.mxu0 %v554
    %v958 = vpop.f32.mrf.mxu0
    %v959 = vadd.f32 %v497, %v958
    %960 = vmatmul.f32.gmra.mxu0 %v557
    %v961 = vpop.f32.mrf.mxu0
    %v962 = vadd.f32 %v497, %v961
    %963 = vmatmul.f32.gmra.mxu0 %v560
    %v964 = vpop.f32.mrf.mxu0
    %v965 = vadd.f32 %v497, %v964
    %966 = vmatmul.f32.gmra.mxu0 %v563
    %v967 = vpop.f32.mrf.mxu0
    %v968 = vadd.f32 %v497, %v967
    %969 = vmatmul.f32.gmra.mxu0 %v566
    %v970 = vpop.f32.mrf.mxu0
    %v971 = vadd.f32 %v497, %v970
    %972 = vmatmul.f32.gmra.mxu0 %v569
    %v973 = vpop.f32.mrf.mxu0
    %v974 = vadd.f32 %v497, %v973
    %975 = vmatmul.f32.gmra.mxu0 %v572
    %v976 = vpop.f32.mrf.mxu0
    %v977 = vadd.f32 %v497, %v976
    %978 = vmatmul.f32.gmra.mxu0 %v575
    %v979 = vpop.f32.mrf.mxu0
    %v980 = vadd.f32 %v497, %v979
    %981 = vmatmul.f32.gmra.mxu0 %v578
    %v982 = vpop.f32.mrf.mxu0
    %v983 = vadd.f32 %v497, %v982
    %984 = vmatmul.f32.gmra.mxu0 %v581
    %v985 = vpop.f32.mrf.mxu0
    %v986 = vadd.f32 %v497, %v985
    %987 = vmatmul.f32.gmra.mxu0 %v584
    %v988 = vpop.f32.mrf.mxu0
    %v989 = vadd.f32 %v497, %v988
    %990 = vmatmul.f32.gmra.mxu0 %v587
    %v991 = vpop.f32.mrf.mxu0
    %v992 = vadd.f32 %v497, %v991
    %993 = vmatmul.f32.gmra.mxu0 %v590
    %v994 = vpop.f32.mrf.mxu0
    %v995 = vadd.f32 %v497, %v994
    %996 = vmatmul.f32.gmra.mxu0 %v593
    %v997 = vpop.f32.mrf.mxu0
    %v998 = vadd.f32 %v497, %v997
    %999 = vmatmul.f32.gmra.mxu0 %v596
    %v1000 = vpop.f32.mrf.mxu0
    %v1001 = vadd.f32 %v497, %v1000
    %1002 = vmatmul.f32.gmra.mxu0 %v599
    %v1003 = vpop.f32.mrf.mxu0
    %v1004 = vadd.f32 %v497, %v1003
    %1005 = vmatmul.f32.gmra.mxu0 %v602
    %v1006 = vpop.f32.mrf.mxu0
    %v1007 = vadd.f32 %v497, %v1006
    %1008 = vmatmul.f32.gmra.mxu0 %v605
    %v1009 = vpop.f32.mrf.mxu0
    %v1010 = vadd.f32 %v497, %v1009
    %1011 = vmatmul.f32.gmra.mxu0 %v608
    %v1012 = vpop.f32.mrf.mxu0
    %v1013 = vadd.f32 %v497, %v1012
    %1014 = vmatmul.f32.gmra.mxu0 %v611
    %v1015 = vpop.f32.mrf.mxu0
    %v1016 = vadd.f32 %v497, %v1015
    %1017 = vmatmul.f32.gmra.mxu0 %v614
    %v1018 = vpop.f32.mrf.mxu0
    %v1019 = vadd.f32 %v497, %v1018
    %1020 = vmatmul.f32.gmra.mxu0 %v617
    %v1021 = vpop.f32.mrf.mxu0
    %v1022 = vadd.f32 %v497, %v1021
    %1023 = vmatmul.f32.gmra.mxu0 %v620
    %v1024 = vpop.f32.mrf.mxu0
    %v1025 = vadd.f32 %v497, %v1024
    %1026 = vmatmul.f32.gmra.mxu0 %v623
    %v1027 = vpop.f32.mrf.mxu0
    %v1028 = vadd.f32 %v497, %v1027
    %1029 = vmatmul.f32.gmra.mxu0 %v626
    %v1030 = vpop.f32.mrf.mxu0
    %v1031 = vadd.f32 %v497, %v1030
    %1032 = vmatmul.f32.gmra.mxu0 %v629
    %v1033 = vpop.f32.mrf.mxu0
    %v1034 = vadd.f32 %v497, %v1033
    %1035 = vmatmul.f32.gmra.mxu0 %v632
    %v1036 = vpop.f32.mrf.mxu0
    %v1037 = vadd.f32 %v497, %v1036
    %1038 = vmatmul.f32.gmra.mxu0 %v635
    %v1039 = vpop.f32.mrf.mxu0
    %v1040 = vadd.f32 %v497, %v1039
    %1041 = vmatmul.f32.gmra.mxu0 %v638
    %v1042 = vpop.f32.mrf.mxu0
    %v1043 = vadd.f32 %v497, %v1042
    %1044 = vmatmul.f32.gmra.mxu0 %v641
    %v1045 = vpop.f32.mrf.mxu0
    %v1046 = vadd.f32 %v497, %v1045
    %1047 = vmatmul.f32.gmra.mxu0 %v644
    %v1048 = vpop.f32.mrf.mxu0
    %v1049 = vadd.f32 %v497, %v1048
    %1050 = vmatmul.f32.gmra.mxu0 %v647
    %v1051 = vpop.f32.mrf.mxu0
    %v1052 = vadd.f32 %v497, %v1051
    %1053 = vmatmul.f32.gmra.mxu0 %v650
    %v1054 = vpop.f32.mrf.mxu0
    %v1055 = vadd.f32 %v497, %v1054
    %1056 = vmatmul.f32.gmra.mxu0 %v653
    %v1057 = vpop.f32.mrf.mxu0
    %v1058 = vadd.f32 %v497, %v1057
    %1059 = vmatmul.f32.gmra.mxu0 %v656
    %v1060 = vpop.f32.mrf.mxu0
    %v1061 = vadd.f32 %v497, %v1060
    %1062 = vmatmul.f32.gmra.mxu0 %v659
    %v1063 = vpop.f32.mrf.mxu0
    %v1064 = vadd.f32 %v497, %v1063
    %1065 = vmatmul.f32.gmra.mxu0 %v662
    %v1066 = vpop.f32.mrf.mxu0
    %v1067 = vadd.f32 %v497, %v1066
    %1068 = vmatmul.f32.gmra.mxu0 %v665
    %v1069 = vpop.f32.mrf.mxu0
    %v1070 = vadd.f32 %v497, %v1069
    %1071 = vmatmul.f32.gmra.mxu0 %v668
    %v1072 = vpop.f32.mrf.mxu0
    %v1073 = vadd.f32 %v497, %v1072
    %1074 = vmatmul.f32.gmra.mxu0 %v671
    %v1075 = vpop.f32.mrf.mxu0
    %v1076 = vadd.f32 %v497, %v1075
    %1077 = vmatmul.f32.gmra.mxu0 %v674
    %v1078 = vpop.f32.mrf.mxu0
    %v1079 = vadd.f32 %v497, %v1078
    %1080 = vmatmul.f32.gmra.mxu0 %v677
    %v1081 = vpop.f32.mrf.mxu0
    %v1082 = vadd.f32 %v497, %v1081
    %1083 = vmatmul.f32.gmra.mxu0 %v680
    %v1084 = vpop.f32.mrf.mxu0
    %v1085 = vadd.f32 %v497, %v1084
    %1086 = vmatmul.f32.gmra.mxu0 %v683
    %v1087 = vpop.f32.mrf.mxu0
    %v1088 = vadd.f32 %v497, %v1087
    %1089 = vmatmul.f32.gmra.mxu0 %v686
    %v1090 = vpop.f32.mrf.mxu0
    %v1091 = vadd.f32 %v497, %v1090
    %1092 = vmatmul.f32.gmra.mxu0 %v689
    %v1093 = vpop.f32.mrf.mxu0
    %v1094 = vadd.f32 %v497, %v1093
    %1095 = vmatmul.f32.gmra.mxu0 %v692
    %v1096 = vpop.f32.mrf.mxu0
    %v1097 = vadd.f32 %v497, %v1096
    %1098 = vmatmul.f32.gmra.mxu0 %v695
    %v1099 = vpop.f32.mrf.mxu0
    %v1100 = vadd.f32 %v497, %v1099
    %1101 = vmatmul.f32.gmra.mxu0 %v698
    %v1102 = vpop.f32.mrf.mxu0
    %v1103 = vadd.f32 %v497, %v1102
    %1104 = vmatmul.f32.gmra.mxu0 %v701
    %v1105 = vpop.f32.mrf.mxu0
    %v1106 = vadd.f32 %v497, %v1105
    %1107 = vmatmul.f32.gmra.mxu0 %v704
    %v1108 = vpop.f32.mrf.mxu0
    %v1109 = vadd.f32 %v497, %v1108
    %1110 = vmatmul.f32.gmra.mxu0 %v707
    %v1111 = vpop.f32.mrf.mxu0
    %v1112 = vadd.f32 %v497, %v1111
    %1113 = vmatmul.f32.gmra.mxu0 %v710
    %v1114 = vpop.f32.mrf.mxu0
    %v1115 = vadd.f32 %v497, %v1114
    %1116 = vmatmul.f32.gmra.mxu0 %v713
    %v1117 = vpop.f32.mrf.mxu0
    %v1118 = vadd.f32 %v497, %v1117
    %1119 = vmatmul.f32.gmra.mxu0 %v716
    %v1120 = vpop.f32.mrf.mxu0
    %v1121 = vadd.f32 %v497, %v1120
    %1122 = vmatmul.f32.gmra.mxu0 %v719
    %v1123 = vpop.f32.mrf.mxu0
    %v1124 = vadd.f32 %v497, %v1123
    %1125 = vmatmul.f32.gmra.mxu0 %v722
    %v1126 = vpop.f32.mrf.mxu0
    %v1127 = vadd.f32 %v497, %v1126
    %1128 = vmatmul.f32.gmra.mxu0 %v725
    %v1129 = vpop.f32.mrf.mxu0
    %v1130 = vadd.f32 %v497, %v1129
    %1131 = vmatmul.f32.gmra.mxu0 %v728
    %v1132 = vpop.f32.mrf.mxu0
    %v1133 = vadd.f32 %v497, %v1132
    %1134 = vmatmul.f32.gmra.mxu0 %v731
    %v1135 = vpop.f32.mrf.mxu0
    %v1136 = vadd.f32 %v497, %v1135
    %1137 = vmatmul.f32.gmra.mxu0 %v734
    %v1138 = vpop.f32.mrf.mxu0
    %v1139 = vadd.f32 %v497, %v1138
    %1140 = vmatmul.f32.gmra.mxu0 %v737
    %v1141 = vpop.f32.mrf.mxu0
    %v1142 = vadd.f32 %v497, %v1141
    %1143 = vmatmul.f32.gmra.mxu0 %v740
    %v1144 = vpop.f32.mrf.mxu0
    %v1145 = vadd.f32 %v497, %v1144
    %1146 = vmatmul.f32.gmra.mxu0 %v743
    %v1147 = vpop.f32.mrf.mxu0
    %v1148 = vadd.f32 %v497, %v1147
    %1149 = vmatmul.f32.gmra.mxu0 %v746
    %v1150 = vpop.f32.mrf.mxu0
    %v1151 = vadd.f32 %v497, %v1150
    %1152 = vmatmul.f32.gmra.mxu0 %v749
    %v1153 = vpop.f32.mrf.mxu0
    %v1154 = vadd.f32 %v497, %v1153
    %1155 = vmatmul.f32.gmra.mxu0 %v752
    %v1156 = vpop.f32.mrf.mxu0
    %v1157 = vadd.f32 %v497, %v1156
    %1158 = vmatmul.f32.gmra.mxu0 %v755
    %v1159 = vpop.f32.mrf.mxu0
    %v1160 = vadd.f32 %v497, %v1159
    %1161 = vmatmul.f32.gmra.mxu0 %v758
    %v1162 = vpop.f32.mrf.mxu0
    %v1163 = vadd.f32 %v497, %v1162
    %1164 = vmatmul.f32.gmra.mxu0 %v761
    %v1165 = vpop.f32.mrf.mxu0
    %v1166 = vadd.f32 %v497, %v1165
    %1167 = vmatmul.f32.gmra.mxu0 %v764
    %v1168 = vpop.f32.mrf.mxu0
    %v1169 = vadd.f32 %v497, %v1168
    %1170 = vmatmul.f32.gmra.mxu0 %v767
    %v1171 = vpop.f32.mrf.mxu0
    %v1172 = vadd.f32 %v497, %v1171
    %1173 = vmatmul.f32.gmra.mxu0 %v770
    %v1174 = vpop.f32.mrf.mxu0
    %v1175 = vadd.f32 %v497, %v1174
    %1176 = vmatmul.f32.gmra.mxu0 %v773
    %v1177 = vpop.f32.mrf.mxu0
    %v1178 = vadd.f32 %v497, %v1177
    %1179 = vmatmul.f32.gmra.mxu0 %v776
    %v1180 = vpop.f32.mrf.mxu0
    %v1181 = vadd.f32 %v497, %v1180
    %1182 = vmatmul.f32.gmra.mxu0 %v779
    %v1183 = vpop.f32.mrf.mxu0
    %v1184 = vadd.f32 %v497, %v1183
    %1185 = vmatmul.f32.gmra.mxu0 %v782
    %v1186 = vpop.f32.mrf.mxu0
    %v1187 = vadd.f32 %v497, %v1186
    %1188 = vmatmul.f32.gmra.mxu0 %v785
    %v1189 = vpop.f32.mrf.mxu0
    %v1190 = vadd.f32 %v497, %v1189
    %1191 = vmatmul.f32.gmra.mxu0 %v788
    %v1192 = vpop.f32.mrf.mxu0
    %v1193 = vadd.f32 %v497, %v1192
    %1194 = vmatmul.f32.gmra.mxu0 %v791
    %v1195 = vpop.f32.mrf.mxu0
    %v1196 = vadd.f32 %v497, %v1195
    %1197 = vmatmul.f32.gmra.mxu0 %v794
    %v1198 = vpop.f32.mrf.mxu0
    %v1199 = vadd.f32 %v497, %v1198
    %1200 = vmatmul.f32.gmra.mxu0 %v797
    %v1201 = vpop.f32.mrf.mxu0
    %v1202 = vadd.f32 %v497, %v1201
    %1203 = vmatmul.f32.gmra.mxu0 %v800
    %v1204 = vpop.f32.mrf.mxu0
    %v1205 = vadd.f32 %v497, %v1204
    %1206 = vmatmul.f32.gmra.mxu0 %v803
    %v1207 = vpop.f32.mrf.mxu0
    %v1208 = vadd.f32 %v497, %v1207
    %1209 = vmatmul.f32.gmra.mxu0 %v806
    %v1210 = vpop.f32.mrf.mxu0
    %v1211 = vadd.f32 %v497, %v1210
    %1212 = vmatmul.f32.gmra.mxu0 %v809
    %v1213 = vpop.f32.mrf.mxu0
    %v1214 = vadd.f32 %v497, %v1213
    %1215 = vmatmul.f32.gmra.mxu0 %v812
    %v1216 = vpop.f32.mrf.mxu0
    %v1217 = vadd.f32 %v497, %v1216
    %1218 = vmatmul.f32.gmra.mxu0 %v815
    %v1219 = vpop.f32.mrf.mxu0
    %v1220 = vadd.f32 %v497, %v1219
    %1221 = vmatmul.f32.gmra.mxu0 %v818
    %v1222 = vpop.f32.mrf.mxu0
    %v1223 = vadd.f32 %v497, %v1222
    %1224 = vmatmul.f32.gmra.mxu0 %v821
    %v1225 = vpop.f32.mrf.mxu0
    %v1226 = vadd.f32 %v497, %v1225
    %1227 = vmatmul.f32.gmra.mxu0 %v824
    %v1228 = vpop.f32.mrf.mxu0
    %v1229 = vadd.f32 %v497, %v1228
    %1230 = vmatmul.f32.gmra.mxu0 %v827
    %v1231 = vpop.f32.mrf.mxu0
    %v1232 = vadd.f32 %v497, %v1231
    %1233 = vmatmul.f32.gmra.mxu0 %v830
    %v1234 = vpop.f32.mrf.mxu0
    %v1235 = vadd.f32 %v497, %v1234
    %1236 = vmatmul.f32.gmra.mxu0 %v833
    %v1237 = vpop.f32.mrf.mxu0
    %v1238 = vadd.f32 %v497, %v1237
    %1239 = vmatmul.f32.gmra.mxu0 %v836
    %v1240 = vpop.f32.mrf.mxu0
    %v1241 = vadd.f32 %v497, %v1240
    %1242 = vmatmul.f32.gmra.mxu0 %v839
    %v1243 = vpop.f32.mrf.mxu0
    %v1244 = vadd.f32 %v497, %v1243
    %1245 = vmatmul.f32.gmra.mxu0 %v842
    %v1246 = vpop.f32.mrf.mxu0
    %v1247 = vadd.f32 %v497, %v1246
    %1248 = vmatmul.f32.gmra.mxu0 %v845
    %v1249 = vpop.f32.mrf.mxu0
    %v1250 = vadd.f32 %v497, %v1249
    %1251 = vmatmul.f32.gmra.mxu0 %v848
    %v1252 = vpop.f32.mrf.mxu0
    %v1253 = vadd.f32 %v497, %v1252
    %1254 = vmatmul.f32.gmra.mxu0 %v851
    %v1255 = vpop.f32.mrf.mxu0
    %v1256 = vadd.f32 %v497, %v1255
    %1257 = vmatmul.f32.gmra.mxu0 %v854
    %v1258 = vpop.f32.mrf.mxu0
    %v1259 = vadd.f32 %v497, %v1258
    %1260 = vmatmul.f32.gmra.mxu0 %v857
    %v1261 = vpop.f32.mrf.mxu0
    %v1262 = vadd.f32 %v497, %v1261
    %1263 = vmatmul.f32.gmra.mxu0 %v860
    %v1264 = vpop.f32.mrf.mxu0
    %v1265 = vadd.f32 %v497, %v1264
    %1266 = vmatmul.f32.gmra.mxu0 %v863
    %v1267 = vpop.f32.mrf.mxu0
    %v1268 = vadd.f32 %v497, %v1267
    %1269 = vmatmul.f32.gmra.mxu0 %v866
    %v1270 = vpop.f32.mrf.mxu0
    %v1271 = vadd.f32 %v497, %v1270
    %1272 = vmatmul.f32.gmra.mxu0 %v869
    %v1273 = vpop.f32.mrf.mxu0
    %v1274 = vadd.f32 %v497, %v1273
    %1275 = vmatmul.f32.gmra.mxu0 %v872
    %v1276 = vpop.f32.mrf.mxu0
    %v1277 = vadd.f32 %v497, %v1276
    %1278 = vmatmul.f32.gmra.mxu0 %v875
    %v1279 = vpop.f32.mrf.mxu0
    %v1280 = vadd.f32 %v497, %v1279
    %1281 = vmatmul.f32.gmra.mxu0 %v878
    %v1282 = vpop.f32.mrf.mxu0
    %v1283 = vadd.f32 %v497, %v1282
    %1284 = vmatmul.f32.gmra.mxu0 %v881
    %v1285 = vpop.f32.mrf.mxu0
    %v1286 = vadd.f32 %v497, %v1285
    %1287 = vdwg.mxu0
    %v1288 = vsub.f32 %v905, %v1097
    %v1289 = vsub.f32 %v908, %v1100
    %v1290 = vsub.f32 %v911, %v1103
    %v1291 = vsub.f32 %v914, %v1106
    %v1292 = vsub.f32 %v917, %v1109
    %v1293 = vsub.f32 %v920, %v1112
    %v1294 = vsub.f32 %v923, %v1115
    %v1295 = vsub.f32 %v926, %v1118
    %v1296 = vsub.f32 %v929, %v1121
    %v1297 = vsub.f32 %v932, %v1124
    %v1298 = vsub.f32 %v935, %v1127
    %v1299 = vsub.f32 %v938, %v1130
    %v1300 = vsub.f32 %v941, %v1133
    %v1301 = vsub.f32 %v944, %v1136
    %v1302 = vsub.f32 %v947, %v1139
    %v1303 = vsub.f32 %v950, %v1142
    %v1304 = vsub.f32 %v953, %v1145
    %v1305 = vsub.f32 %v956, %v1148
    %v1306 = vsub.f32 %v959, %v1151
    %v1307 = vsub.f32 %v962, %v1154
    %v1308 = vsub.f32 %v965, %v1157
    %v1309 = vsub.f32 %v968, %v1160
    %v1310 = vsub.f32 %v971, %v1163
    %v1311 = vsub.f32 %v974, %v1166
    %v1312 = vsub.f32 %v977, %v1169
    %v1313 = vsub.f32 %v980, %v1172
    %v1314 = vsub.f32 %v983, %v1175
    %v1315 = vsub.f32 %v986, %v1178
    %v1316 = vsub.f32 %v989, %v1181
    %v1317 = vsub.f32 %v992, %v1184
    %v1318 = vsub.f32 %v995, %v1187
    %v1319 = vsub.f32 %v998, %v1190
    %v1320 = vsub.f32 %v1001, %v1193
    %v1321 = vsub.f32 %v1004, %v1196
    %v1322 = vsub.f32 %v1007, %v1199
    %v1323 = vsub.f32 %v1010, %v1202
    %v1324 = vsub.f32 %v1013, %v1205
    %v1325 = vsub.f32 %v1016, %v1208
    %v1326 = vsub.f32 %v1019, %v1211
    %v1327 = vsub.f32 %v1022, %v1214
    %v1328 = vsub.f32 %v1025, %v1217
    %v1329 = vsub.f32 %v1028, %v1220
    %v1330 = vsub.f32 %v1031, %v1223
    %v1331 = vsub.f32 %v1034, %v1226
    %v1332 = vsub.f32 %v1037, %v1229
    %v1333 = vsub.f32 %v1040, %v1232
    %v1334 = vsub.f32 %v1043, %v1235
    %v1335 = vsub.f32 %v1046, %v1238
    %v1336 = vsub.f32 %v1049, %v1241
    %v1337 = vsub.f32 %v1052, %v1244
    %v1338 = vsub.f32 %v1055, %v1247
    %v1339 = vsub.f32 %v1058, %v1250
    %v1340 = vsub.f32 %v1061, %v1253
    %v1341 = vsub.f32 %v1064, %v1256
    %v1342 = vsub.f32 %v1067, %v1259
    %v1343 = vsub.f32 %v1070, %v1262
    %v1344 = vsub.f32 %v1073, %v1265
    %v1345 = vsub.f32 %v1076, %v1268
    %v1346 = vsub.f32 %v1079, %v1271
    %v1347 = vsub.f32 %v1082, %v1274
    %v1348 = vsub.f32 %v1085, %v1277
    %v1349 = vsub.f32 %v1088, %v1280
    %v1350 = vsub.f32 %v1091, %v1283
    %v1351 = vsub.f32 %v1094, %v1286
    %v1352 = vmul.f32 %v1288, %v1288
    %v1353 = vmul.f32 %v1289, %v1289
    %v1354 = vmul.f32 %v1290, %v1290
    %v1355 = vmul.f32 %v1291, %v1291
    %v1356 = vmul.f32 %v1292, %v1292
    %v1357 = vmul.f32 %v1293, %v1293
    %v1358 = vmul.f32 %v1294, %v1294
    %v1359 = vmul.f32 %v1295, %v1295
    %v1360 = vmul.f32 %v1296, %v1296
    %v1361 = vmul.f32 %v1297, %v1297
    %v1362 = vmul.f32 %v1298, %v1298
    %v1363 = vmul.f32 %v1299, %v1299
    %v1364 = vmul.f32 %v1300, %v1300
    %v1365 = vmul.f32 %v1301, %v1301
    %v1366 = vmul.f32 %v1302, %v1302
    %v1367 = vmul.f32 %v1303, %v1303
    %v1368 = vmul.f32 %v1304, %v1304
    %v1369 = vmul.f32 %v1305, %v1305
    %v1370 = vmul.f32 %v1306, %v1306
    %v1371 = vmul.f32 %v1307, %v1307
    %v1372 = vmul.f32 %v1308, %v1308
    %v1373 = vmul.f32 %v1309, %v1309
    %v1374 = vmul.f32 %v1310, %v1310
    %v1375 = vmul.f32 %v1311, %v1311
    %v1376 = vmul.f32 %v1312, %v1312
    %v1377 = vmul.f32 %v1313, %v1313
    %v1378 = vmul.f32 %v1314, %v1314
    %v1379 = vmul.f32 %v1315, %v1315
    %v1380 = vmul.f32 %v1316, %v1316
    %v1381 = vmul.f32 %v1317, %v1317
    %v1382 = vmul.f32 %v1318, %v1318
    %v1383 = vmul.f32 %v1319, %v1319
    %v1384 = vmul.f32 %v1320, %v1320
    %v1385 = vmul.f32 %v1321, %v1321
    %v1386 = vmul.f32 %v1322, %v1322
    %v1387 = vmul.f32 %v1323, %v1323
    %v1388 = vmul.f32 %v1324, %v1324
    %v1389 = vmul.f32 %v1325, %v1325
    %v1390 = vmul.f32 %v1326, %v1326
    %v1391 = vmul.f32 %v1327, %v1327
    %v1392 = vmul.f32 %v1328, %v1328
    %v1393 = vmul.f32 %v1329, %v1329
    %v1394 = vmul.f32 %v1330, %v1330
    %v1395 = vmul.f32 %v1331, %v1331
    %v1396 = vmul.f32 %v1332, %v1332
    %v1397 = vmul.f32 %v1333, %v1333
    %v1398 = vmul.f32 %v1334, %v1334
    %v1399 = vmul.f32 %v1335, %v1335
    %v1400 = vmul.f32 %v1336, %v1336
    %v1401 = vmul.f32 %v1337, %v1337
    %v1402 = vmul.f32 %v1338, %v1338
    %v1403 = vmul.f32 %v1339, %v1339
    %v1404 = vmul.f32 %v1340, %v1340
    %v1405 = vmul.f32 %v1341, %v1341
    %v1406 = vmul.f32 %v1342, %v1342
    %v1407 = vmul.f32 %v1343, %v1343
    %v1408 = vmul.f32 %v1344, %v1344
    %v1409 = vmul.f32 %v1345, %v1345
    %v1410 = vmul.f32 %v1346, %v1346
    %v1411 = vmul.f32 %v1347, %v1347
    %v1412 = vmul.f32 %v1348, %v1348
    %v1413 = vmul.f32 %v1349, %v1349
    %v1414 = vmul.f32 %v1350, %v1350
    %v1415 = vmul.f32 %v1351, %v1351
    %vm1416 = vcmask 64512
    %v1417 = vsel %vm1416, %v1352, 0.0
    %v1418 = vsel %vm1416, %v1353, 0.0
    %v1419 = vadd.f32 %v1417, %v1418
    %v1420 = vsel %vm1416, %v1354, 0.0
    %v1421 = vadd.f32 %v1419, %v1420
    %v1422 = vsel %vm1416, %v1355, 0.0
    %v1423 = vadd.f32 %v1421, %v1422
    %v1424 = vsel %vm1416, %v1356, 0.0
    %v1425 = vadd.f32 %v1423, %v1424
    %v1426 = vsel %vm1416, %v1357, 0.0
    %v1427 = vadd.f32 %v1425, %v1426
    %v1428 = vsel %vm1416, %v1358, 0.0
    %v1429 = vadd.f32 %v1427, %v1428
    %v1430 = vsel %vm1416, %v1359, 0.0
    %v1431 = vadd.f32 %v1429, %v1430
    %v1432 = vsel %vm1416, %v1360, 0.0
    %v1433 = vadd.f32 %v1431, %v1432
    %v1434 = vsel %vm1416, %v1361, 0.0
    %v1435 = vadd.f32 %v1433, %v1434
    %v1436 = vsel %vm1416, %v1362, 0.0
    %v1437 = vadd.f32 %v1435, %v1436
    %v1438 = vsel %vm1416, %v1363, 0.0
    %v1439 = vadd.f32 %v1437, %v1438
    %v1440 = vsel %vm1416, %v1364, 0.0
    %v1441 = vadd.f32 %v1439, %v1440
    %v1442 = vsel %vm1416, %v1365, 0.0
    %v1443 = vadd.f32 %v1441, %v1442
    %v1444 = vsel %vm1416, %v1366, 0.0
    %v1445 = vadd.f32 %v1443, %v1444
    %v1446 = vsel %vm1416, %v1367, 0.0
    %v1447 = vadd.f32 %v1445, %v1446
    %v1448 = vsel %vm1416, %v1368, 0.0
    %v1449 = vadd.f32 %v1447, %v1448
    %v1450 = vsel %vm1416, %v1369, 0.0
    %v1451 = vadd.f32 %v1449, %v1450
    %v1452 = vsel %vm1416, %v1370, 0.0
    %v1453 = vadd.f32 %v1451, %v1452
    %v1454 = vsel %vm1416, %v1371, 0.0
    %v1455 = vadd.f32 %v1453, %v1454
    %v1456 = vsel %vm1416, %v1372, 0.0
    %v1457 = vadd.f32 %v1455, %v1456
    %v1458 = vsel %vm1416, %v1373, 0.0
    %v1459 = vadd.f32 %v1457, %v1458
    %v1460 = vsel %vm1416, %v1374, 0.0
    %v1461 = vadd.f32 %v1459, %v1460
    %v1462 = vsel %vm1416, %v1375, 0.0
    %v1463 = vadd.f32 %v1461, %v1462
    %v1464 = vsel %vm1416, %v1376, 0.0
    %v1465 = vadd.f32 %v1463, %v1464
    %v1466 = vsel %vm1416, %v1377, 0.0
    %v1467 = vadd.f32 %v1465, %v1466
    %v1468 = vsel %vm1416, %v1378, 0.0
    %v1469 = vadd.f32 %v1467, %v1468
    %v1470 = vsel %vm1416, %v1379, 0.0
    %v1471 = vadd.f32 %v1469, %v1470
    %v1472 = vsel %vm1416, %v1380, 0.0
    %v1473 = vadd.f32 %v1471, %v1472
    %v1474 = vsel %vm1416, %v1381, 0.0
    %v1475 = vadd.f32 %v1473, %v1474
    %v1476 = vsel %vm1416, %v1382, 0.0
    %v1477 = vadd.f32 %v1475, %v1476
    %v1478 = vsel %vm1416, %v1383, 0.0
    %v1479 = vadd.f32 %v1477, %v1478
    %v1480 = vsel %vm1416, %v1384, 0.0
    %v1481 = vadd.f32 %v1479, %v1480
    %v1482 = vsel %vm1416, %v1385, 0.0
    %v1483 = vadd.f32 %v1481, %v1482
    %v1484 = vsel %vm1416, %v1386, 0.0
    %v1485 = vadd.f32 %v1483, %v1484
    %v1486 = vsel %vm1416, %v1387, 0.0
    %v1487 = vadd.f32 %v1485, %v1486
    %v1488 = vsel %vm1416, %v1388, 0.0
    %v1489 = vadd.f32 %v1487, %v1488
    %v1490 = vsel %vm1416, %v1389, 0.0
    %v1491 = vadd.f32 %v1489, %v1490
    %v1492 = vsel %vm1416, %v1390, 0.0
    %v1493 = vadd.f32 %v1491, %v1492
    %v1494 = vsel %vm1416, %v1391, 0.0
    %v1495 = vadd.f32 %v1493, %v1494
    %v1496 = vsel %vm1416, %v1392, 0.0
    %v1497 = vadd.f32 %v1495, %v1496
    %v1498 = vsel %vm1416, %v1393, 0.0
    %v1499 = vadd.f32 %v1497, %v1498
    %v1500 = vsel %vm1416, %v1394, 0.0
    %v1501 = vadd.f32 %v1499, %v1500
    %v1502 = vsel %vm1416, %v1395, 0.0
    %v1503 = vadd.f32 %v1501, %v1502
    %v1504 = vsel %vm1416, %v1396, 0.0
    %v1505 = vadd.f32 %v1503, %v1504
    %v1506 = vsel %vm1416, %v1397, 0.0
    %v1507 = vadd.f32 %v1505, %v1506
    %v1508 = vsel %vm1416, %v1398, 0.0
    %v1509 = vadd.f32 %v1507, %v1508
    %v1510 = vsel %vm1416, %v1399, 0.0
    %v1511 = vadd.f32 %v1509, %v1510
    %v1512 = vsel %vm1416, %v1400, 0.0
    %v1513 = vadd.f32 %v1511, %v1512
    %v1514 = vsel %vm1416, %v1401, 0.0
    %v1515 = vadd.f32 %v1513, %v1514
    %v1516 = vsel %vm1416, %v1402, 0.0
    %v1517 = vadd.f32 %v1515, %v1516
    %v1518 = vsel %vm1416, %v1403, 0.0
    %v1519 = vadd.f32 %v1517, %v1518
    %v1520 = vsel %vm1416, %v1404, 0.0
    %v1521 = vadd.f32 %v1519, %v1520
    %v1522 = vsel %vm1416, %v1405, 0.0
    %v1523 = vadd.f32 %v1521, %v1522
    %v1524 = vsel %vm1416, %v1406, 0.0
    %v1525 = vadd.f32 %v1523, %v1524
    %v1526 = vsel %vm1416, %v1407, 0.0
    %v1527 = vadd.f32 %v1525, %v1526
    %v1528 = vsel %vm1416, %v1408, 0.0
    %v1529 = vadd.f32 %v1527, %v1528
    %v1530 = vsel %vm1416, %v1409, 0.0
    %v1531 = vadd.f32 %v1529, %v1530
    %v1532 = vsel %vm1416, %v1410, 0.0
    %v1533 = vadd.f32 %v1531, %v1532
    %v1534 = vsel %vm1416, %v1411, 0.0
    %v1535 = vadd.f32 %v1533, %v1534
    %v1536 = vsel %vm1416, %v1412, 0.0
    %v1537 = vadd.f32 %v1535, %v1536
    %v1538 = vsel %vm1416, %v1413, 0.0
    %v1539 = vadd.f32 %v1537, %v1538
    %v1540 = vsel %vm1416, %v1414, 0.0
    %v1541 = vadd.f32 %v1539, %v1540
    %v1542 = vsel %vm1416, %v1415, 0.0
    %v1543 = vadd.f32 %v1541, %v1542
    %1544 = vadd.xlane.f32.xlu0 %v1543
    %v1545 = vpop.xlane.xlu0 %1544
    %v1546 = vrot.slane %v1545, 4
    %v1547 = vadd.f32 %v1545, %v1546
    %v1548 = vrot.slane %v1547, 2
    %v1549 = vadd.f32 %v1547, %v1548
    %v1550 = vrot.slane %v1549, 1
    %v1551 = vadd.f32 %v1549, %v1550
    %s1552 = vtos %v1551
    %s1553 = smul.f32 %s1552, 0.00024414063
    %s1554 = sadd.f32 %s495, %s1553
    %v1555 = vmax.f32 %v905, 0.0
    %v1556 = vmax.f32 %v908, 0.0
    %v1557 = vmax.f32 %v911, 0.0
    %v1558 = vmax.f32 %v914, 0.0
    %v1559 = vmax.f32 %v917, 0.0
    %v1560 = vmax.f32 %v920, 0.0
    %v1561 = vmax.f32 %v923, 0.0
    %v1562 = vmax.f32 %v926, 0.0
    %v1563 = vmax.f32 %v929, 0.0
    %v1564 = vmax.f32 %v932, 0.0
    %v1565 = vmax.f32 %v935, 0.0
    %v1566 = vmax.f32 %v938, 0.0
    %v1567 = vmax.f32 %v941, 0.0
    %v1568 = vmax.f32 %v944, 0.0
    %v1569 = vmax.f32 %v947, 0.0
    %v1570 = vmax.f32 %v950, 0.0
    %v1571 = vmax.f32 %v953, 0.0
    %v1572 = vmax.f32 %v956, 0.0
    %v1573 = vmax.f32 %v959, 0.0
    %v1574 = vmax.f32 %v962, 0.0
    %v1575 = vmax.f32 %v965, 0.0
    %v1576 = vmax.f32 %v968, 0.0
    %v1577 = vmax.f32 %v971, 0.0
    %v1578 = vmax.f32 %v974, 0.0
    %v1579 = vmax.f32 %v977, 0.0
    %v1580 = vmax.f32 %v980, 0.0
    %v1581 = vmax.f32 %v983, 0.0
    %v1582 = vmax.f32 %v986, 0.0
    %v1583 = vmax.f32 %v989, 0.0
    %v1584 = vmax.f32 %v992, 0.0
    %v1585 = vmax.f32 %v995, 0.0
    %v1586 = vmax.f32 %v998, 0.0
    %v1587 = vmax.f32 %v1001, 0.0
    %v1588 = vmax.f32 %v1004, 0.0
    %v1589 = vmax.f32 %v1007, 0.0
    %v1590 = vmax.f32 %v1010, 0.0
    %v1591 = vmax.f32 %v1013, 0.0
    %v1592 = vmax.f32 %v1016, 0.0
    %v1593 = vmax.f32 %v1019, 0.0
    %v1594 = vmax.f32 %v1022, 0.0
    %v1595 = vmax.f32 %v1025, 0.0
    %v1596 = vmax.f32 %v1028, 0.0
    %v1597 = vmax.f32 %v1031, 0.0
    %v1598 = vmax.f32 %v1034, 0.0
    %v1599 = vmax.f32 %v1037, 0.0
    %v1600 = vmax.f32 %v1040, 0.0
    %v1601 = vmax.f32 %v1043, 0.0
    %v1602 = vmax.f32 %v1046, 0.0
    %v1603 = vmax.f32 %v1049, 0.0
    %v1604 = vmax.f32 %v1052, 0.0
    %v1605 = vmax.f32 %v1055, 0.0
    %v1606 = vmax.f32 %v1058, 0.0
    %v1607 = vmax.f32 %v1061, 0.0
    %v1608 = vmax.f32 %v1064, 0.0
    %v1609 = vmax.f32 %v1067, 0.0
    %v1610 = vmax.f32 %v1070, 0.0
    %v1611 = vmax.f32 %v1073, 0.0
    %v1612 = vmax.f32 %v1076, 0.0
    %v1613 = vmax.f32 %v1079, 0.0
    %v1614 = vmax.f32 %v1082, 0.0
    %v1615 = vmax.f32 %v1085, 0.0
    %v1616 = vmax.f32 %v1088, 0.0
    %v1617 = vmax.f32 %v1091, 0.0
    %v1618 = vmax.f32 %v1094, 0.0
    %v1619 = vmax.f32 %v1097, 0.0
    %v1620 = vmax.f32 %v1100, 0.0
    %v1621 = vmax.f32 %v1103, 0.0
    %v1622 = vmax.f32 %v1106, 0.0
    %v1623 = vmax.f32 %v1109, 0.0
    %v1624 = vmax.f32 %v1112, 0.0
    %v1625 = vmax.f32 %v1115, 0.0
    %v1626 = vmax.f32 %v1118, 0.0
    %v1627 = vmax.f32 %v1121, 0.0
    %v1628 = vmax.f32 %v1124, 0.0
    %v1629 = vmax.f32 %v1127, 0.0
    %v1630 = vmax.f32 %v1130, 0.0
    %v1631 = vmax.f32 %v1133, 0.0
    %v1632 = vmax.f32 %v1136, 0.0
    %v1633 = vmax.f32 %v1139, 0.0
    %v1634 = vmax.f32 %v1142, 0.0
    %v1635 = vmax.f32 %v1145, 0.0
    %v1636 = vmax.f32 %v1148, 0.0
    %v1637 = vmax.f32 %v1151, 0.0
    %v1638 = vmax.f32 %v1154, 0.0
    %v1639 = vmax.f32 %v1157, 0.0
    %v1640 = vmax.f32 %v1160, 0.0
    %v1641 = vmax.f32 %v1163, 0.0
    %v1642 = vmax.f32 %v1166, 0.0
    %v1643 = vmax.f32 %v1169, 0.0
    %v1644 = vmax.f32 %v1172, 0.0
    %v1645 = vmax.f32 %v1175, 0.0
    %v1646 = vmax.f32 %v1178, 0.0
    %v1647 = vmax.f32 %v1181, 0.0
    %v1648 = vmax.f32 %v1184, 0.0
    %v1649 = vmax.f32 %v1187, 0.0
    %v1650 = vmax.f32 %v1190, 0.0
    %v1651 = vmax.f32 %v1193, 0.0
    %v1652 = vmax.f32 %v1196, 0.0
    %v1653 = vmax.f32 %v1199, 0.0
    %v1654 = vmax.f32 %v1202, 0.0
    %v1655 = vmax.f32 %v1205, 0.0
    %v1656 = vmax.f32 %v1208, 0.0
    %v1657 = vmax.f32 %v1211, 0.0
    %v1658 = vmax.f32 %v1214, 0.0
    %v1659 = vmax.f32 %v1217, 0.0
    %v1660 = vmax.f32 %v1220, 0.0
    %v1661 = vmax.f32 %v1223, 0.0
    %v1662 = vmax.f32 %v1226, 0.0
    %v1663 = vmax.f32 %v1229, 0.0
    %v1664 = vmax.f32 %v1232, 0.0
    %v1665 = vmax.f32 %v1235, 0.0
    %v1666 = vmax.f32 %v1238, 0.0
    %v1667 = vmax.f32 %v1241, 0.0
    %v1668 = vmax.f32 %v1244, 0.0
    %v1669 = vmax.f32 %v1247, 0.0
    %v1670 = vmax.f32 %v1250, 0.0
    %v1671 = vmax.f32 %v1253, 0.0
    %v1672 = vmax.f32 %v1256, 0.0
    %v1673 = vmax.f32 %v1259, 0.0
    %v1674 = vmax.f32 %v1262, 0.0
    %v1675 = vmax.f32 %v1265, 0.0
    %v1676 = vmax.f32 %v1268, 0.0
    %v1677 = vmax.f32 %v1271, 0.0
    %v1678 = vmax.f32 %v1274, 0.0
    %v1679 = vmax.f32 %v1277, 0.0
    %v1680 = vmax.f32 %v1280, 0.0
    %v1681 = vmax.f32 %v1283, 0.0
    %v1682 = vmax.f32 %v1286, 0.0
    %v1683 = vsub.f32 %v1555, %v1619
    %v1684 = vsub.f32 %v1556, %v1620
    %v1685 = vsub.f32 %v1557, %v1621
    %v1686 = vsub.f32 %v1558, %v1622
    %v1687 = vsub.f32 %v1559, %v1623
    %v1688 = vsub.f32 %v1560, %v1624
    %v1689 = vsub.f32 %v1561, %v1625
    %v1690 = vsub.f32 %v1562, %v1626
    %v1691 = vsub.f32 %v1563, %v1627
    %v1692 = vsub.f32 %v1564, %v1628
    %v1693 = vsub.f32 %v1565, %v1629
    %v1694 = vsub.f32 %v1566, %v1630
    %v1695 = vsub.f32 %v1567, %v1631
    %v1696 = vsub.f32 %v1568, %v1632
    %v1697 = vsub.f32 %v1569, %v1633
    %v1698 = vsub.f32 %v1570, %v1634
    %v1699 = vsub.f32 %v1571, %v1635
    %v1700 = vsub.f32 %v1572, %v1636
    %v1701 = vsub.f32 %v1573, %v1637
    %v1702 = vsub.f32 %v1574, %v1638
    %v1703 = vsub.f32 %v1575, %v1639
    %v1704 = vsub.f32 %v1576, %v1640
    %v1705 = vsub.f32 %v1577, %v1641
    %v1706 = vsub.f32 %v1578, %v1642
    %v1707 = vsub.f32 %v1579, %v1643
    %v1708 = vsub.f32 %v1580, %v1644
    %v1709 = vsub.f32 %v1581, %v1645
    %v1710 = vsub.f32 %v1582, %v1646
    %v1711 = vsub.f32 %v1583, %v1647
    %v1712 = vsub.f32 %v1584, %v1648
    %v1713 = vsub.f32 %v1585, %v1649
    %v1714 = vsub.f32 %v1586, %v1650
    %v1715 = vsub.f32 %v1587, %v1651
    %v1716 = vsub.f32 %v1588, %v1652
    %v1717 = vsub.f32 %v1589, %v1653
    %v1718 = vsub.f32 %v1590, %v1654
    %v1719 = vsub.f32 %v1591, %v1655
    %v1720 = vsub.f32 %v1592, %v1656
    %v1721 = vsub.f32 %v1593, %v1657
    %v1722 = vsub.f32 %v1594, %v1658
    %v1723 = vsub.f32 %v1595, %v1659
    %v1724 = vsub.f32 %v1596, %v1660
    %v1725 = vsub.f32 %v1597, %v1661
    %v1726 = vsub.f32 %v1598, %v1662
    %v1727 = vsub.f32 %v1599, %v1663
    %v1728 = vsub.f32 %v1600, %v1664
    %v1729 = vsub.f32 %v1601, %v1665
    %v1730 = vsub.f32 %v1602, %v1666
    %v1731 = vsub.f32 %v1603, %v1667
    %v1732 = vsub.f32 %v1604, %v1668
    %v1733 = vsub.f32 %v1605, %v1669
    %v1734 = vsub.f32 %v1606, %v1670
    %v1735 = vsub.f32 %v1607, %v1671
    %v1736 = vsub.f32 %v1608, %v1672
    %v1737 = vsub.f32 %v1609, %v1673
    %v1738 = vsub.f32 %v1610, %v1674
    %v1739 = vsub.f32 %v1611, %v1675
    %v1740 = vsub.f32 %v1612, %v1676
    %v1741 = vsub.f32 %v1613, %v1677
    %v1742 = vsub.f32 %v1614, %v1678
    %v1743 = vsub.f32 %v1615, %v1679
    %v1744 = vsub.f32 %v1616, %v1680
    %v1745 = vsub.f32 %v1617, %v1681
    %v1746 = vsub.f32 %v1618, %v1682
    %v1747 = vmul.f32 %v1683, %v1683
    %v1748 = vmul.f32 %v1684, %v1684
    %v1749 = vmul.f32 %v1685, %v1685
    %v1750 = vmul.f32 %v1686, %v1686
    %v1751 = vmul.f32 %v1687, %v1687
    %v1752 = vmul.f32 %v1688, %v1688
    %v1753 = vmul.f32 %v1689, %v1689
    %v1754 = vmul.f32 %v1690, %v1690
    %v1755 = vmul.f32 %v1691, %v1691
    %v1756 = vmul.f32 %v1692, %v1692
    %v1757 = vmul.f32 %v1693, %v1693
    %v1758 = vmul.f32 %v1694, %v1694
    %v1759 = vmul.f32 %v1695, %v1695
    %v1760 = vmul.f32 %v1696, %v1696
    %v1761 = vmul.f32 %v1697, %v1697
    %v1762 = vmul.f32 %v1698, %v1698
    %v1763 = vmul.f32 %v1699, %v1699
    %v1764 = vmul.f32 %v1700, %v1700
    %v1765 = vmul.f32 %v1701, %v1701
    %v1766 = vmul.f32 %v1702, %v1702
    %v1767 = vmul.f32 %v1703, %v1703
    %v1768 = vmul.f32 %v1704, %v1704
    %v1769 = vmul.f32 %v1705, %v1705
    %v1770 = vmul.f32 %v1706, %v1706
    %v1771 = vmul.f32 %v1707, %v1707
    %v1772 = vmul.f32 %v1708, %v1708
    %v1773 = vmul.f32 %v1709, %v1709
    %v1774 = vmul.f32 %v1710, %v1710
    %v1775 = vmul.f32 %v1711, %v1711
    %v1776 = vmul.f32 %v1712, %v1712
    %v1777 = vmul.f32 %v1713, %v1713
    %v1778 = vmul.f32 %v1714, %v1714
    %v1779 = vmul.f32 %v1715, %v1715
    %v1780 = vmul.f32 %v1716, %v1716
    %v1781 = vmul.f32 %v1717, %v1717
    %v1782 = vmul.f32 %v1718, %v1718
    %v1783 = vmul.f32 %v1719, %v1719
    %v1784 = vmul.f32 %v1720, %v1720
    %v1785 = vmul.f32 %v1721, %v1721
    %v1786 = vmul.f32 %v1722, %v1722
    %v1787 = vmul.f32 %v1723, %v1723
    %v1788 = vmul.f32 %v1724, %v1724
    %v1789 = vmul.f32 %v1725, %v1725
    %v1790 = vmul.f32 %v1726, %v1726
    %v1791 = vmul.f32 %v1727, %v1727
    %v1792 = vmul.f32 %v1728, %v1728
    %v1793 = vmul.f32 %v1729, %v1729
    %v1794 = vmul.f32 %v1730, %v1730
    %v1795 = vmul.f32 %v1731, %v1731
    %v1796 = vmul.f32 %v1732, %v1732
    %v1797 = vmul.f32 %v1733, %v1733
    %v1798 = vmul.f32 %v1734, %v1734
    %v1799 = vmul.f32 %v1735, %v1735
    %v1800 = vmul.f32 %v1736, %v1736
    %v1801 = vmul.f32 %v1737, %v1737
    %v1802 = vmul.f32 %v1738, %v1738
    %v1803 = vmul.f32 %v1739, %v1739
    %v1804 = vmul.f32 %v1740, %v1740
    %v1805 = vmul.f32 %v1741, %v1741
    %v1806 = vmul.f32 %v1742, %v1742
    %v1807 = vmul.f32 %v1743, %v1743
    %v1808 = vmul.f32 %v1744, %v1744
    %v1809 = vmul.f32 %v1745, %v1745
    %v1810 = vmul.f32 %v1746, %v1746
    %v1811 = vsel %vm1416, %v1747, 0.0
    %v1812 = vsel %vm1416, %v1748, 0.0
    %v1813 = vadd.f32 %v1811, %v1812
    %v1814 = vsel %vm1416, %v1749, 0.0
    %v1815 = vadd.f32 %v1813, %v1814
    %v1816 = vsel %vm1416, %v1750, 0.0
    %v1817 = vadd.f32 %v1815, %v1816
    %v1818 = vsel %vm1416, %v1751, 0.0
    %v1819 = vadd.f32 %v1817, %v1818
    %v1820 = vsel %vm1416, %v1752, 0.0
    %v1821 = vadd.f32 %v1819, %v1820
    %v1822 = vsel %vm1416, %v1753, 0.0
    %v1823 = vadd.f32 %v1821, %v1822
    %v1824 = vsel %vm1416, %v1754, 0.0
    %v1825 = vadd.f32 %v1823, %v1824
    %v1826 = vsel %vm1416, %v1755, 0.0
    %v1827 = vadd.f32 %v1825, %v1826
    %v1828 = vsel %vm1416, %v1756, 0.0
    %v1829 = vadd.f32 %v1827, %v1828
    %v1830 = vsel %vm1416, %v1757, 0.0
    %v1831 = vadd.f32 %v1829, %v1830
    %v1832 = vsel %vm1416, %v1758, 0.0
    %v1833 = vadd.f32 %v1831, %v1832
    %v1834 = vsel %vm1416, %v1759, 0.0
    %v1835 = vadd.f32 %v1833, %v1834
    %v1836 = vsel %vm1416, %v1760, 0.0
    %v1837 = vadd.f32 %v1835, %v1836
    %v1838 = vsel %vm1416, %v1761, 0.0
    %v1839 = vadd.f32 %v1837, %v1838
    %v1840 = vsel %vm1416, %v1762, 0.0
    %v1841 = vadd.f32 %v1839, %v1840
    %v1842 = vsel %vm1416, %v1763, 0.0
    %v1843 = vadd.f32 %v1841, %v1842
    %v1844 = vsel %vm1416, %v1764, 0.0
    %v1845 = vadd.f32 %v1843, %v1844
    %v1846 = vsel %vm1416, %v1765, 0.0
    %v1847 = vadd.f32 %v1845, %v1846
    %v1848 = vsel %vm1416, %v1766, 0.0
    %v1849 = vadd.f32 %v1847, %v1848
    %v1850 = vsel %vm1416, %v1767, 0.0
    %v1851 = vadd.f32 %v1849, %v1850
    %v1852 = vsel %vm1416, %v1768, 0.0
    %v1853 = vadd.f32 %v1851, %v1852
    %v1854 = vsel %vm1416, %v1769, 0.0
    %v1855 = vadd.f32 %v1853, %v1854
    %v1856 = vsel %vm1416, %v1770, 0.0
    %v1857 = vadd.f32 %v1855, %v1856
    %v1858 = vsel %vm1416, %v1771, 0.0
    %v1859 = vadd.f32 %v1857, %v1858
    %v1860 = vsel %vm1416, %v1772, 0.0
    %v1861 = vadd.f32 %v1859, %v1860
    %v1862 = vsel %vm1416, %v1773, 0.0
    %v1863 = vadd.f32 %v1861, %v1862
    %v1864 = vsel %vm1416, %v1774, 0.0
    %v1865 = vadd.f32 %v1863, %v1864
    %v1866 = vsel %vm1416, %v1775, 0.0
    %v1867 = vadd.f32 %v1865, %v1866
    %v1868 = vsel %vm1416, %v1776, 0.0
    %v1869 = vadd.f32 %v1867, %v1868
    %v1870 = vsel %vm1416, %v1777, 0.0
    %v1871 = vadd.f32 %v1869, %v1870
    %v1872 = vsel %vm1416, %v1778, 0.0
    %v1873 = vadd.f32 %v1871, %v1872
    %v1874 = vsel %vm1416, %v1779, 0.0
    %v1875 = vadd.f32 %v1873, %v1874
    %v1876 = vsel %vm1416, %v1780, 0.0
    %v1877 = vadd.f32 %v1875, %v1876
    %v1878 = vsel %vm1416, %v1781, 0.0
    %v1879 = vadd.f32 %v1877, %v1878
    %v1880 = vsel %vm1416, %v1782, 0.0
    %v1881 = vadd.f32 %v1879, %v1880
    %v1882 = vsel %vm1416, %v1783, 0.0
    %v1883 = vadd.f32 %v1881, %v1882
    %v1884 = vsel %vm1416, %v1784, 0.0
    %v1885 = vadd.f32 %v1883, %v1884
    %v1886 = vsel %vm1416, %v1785, 0.0
    %v1887 = vadd.f32 %v1885, %v1886
    %v1888 = vsel %vm1416, %v1786, 0.0
    %v1889 = vadd.f32 %v1887, %v1888
    %v1890 = vsel %vm1416, %v1787, 0.0
    %v1891 = vadd.f32 %v1889, %v1890
    %v1892 = vsel %vm1416, %v1788, 0.0
    %v1893 = vadd.f32 %v1891, %v1892
    %v1894 = vsel %vm1416, %v1789, 0.0
    %v1895 = vadd.f32 %v1893, %v1894
    %v1896 = vsel %vm1416, %v1790, 0.0
    %v1897 = vadd.f32 %v1895, %v1896
    %v1898 = vsel %vm1416, %v1791, 0.0
    %v1899 = vadd.f32 %v1897, %v1898
    %v1900 = vsel %vm1416, %v1792, 0.0
    %v1901 = vadd.f32 %v1899, %v1900
    %v1902 = vsel %vm1416, %v1793, 0.0
    %v1903 = vadd.f32 %v1901, %v1902
    %v1904 = vsel %vm1416, %v1794, 0.0
    %v1905 = vadd.f32 %v1903, %v1904
    %v1906 = vsel %vm1416, %v1795, 0.0
    %v1907 = vadd.f32 %v1905, %v1906
    %v1908 = vsel %vm1416, %v1796, 0.0
    %v1909 = vadd.f32 %v1907, %v1908
    %v1910 = vsel %vm1416, %v1797, 0.0
    %v1911 = vadd.f32 %v1909, %v1910
    %v1912 = vsel %vm1416, %v1798, 0.0
    %v1913 = vadd.f32 %v1911, %v1912
    %v1914 = vsel %vm1416, %v1799, 0.0
    %v1915 = vadd.f32 %v1913, %v1914
    %v1916 = vsel %vm1416, %v1800, 0.0
    %v1917 = vadd.f32 %v1915, %v1916
    %v1918 = vsel %vm1416, %v1801, 0.0
    %v1919 = vadd.f32 %v1917, %v1918
    %v1920 = vsel %vm1416, %v1802, 0.0
    %v1921 = vadd.f32 %v1919, %v1920
    %v1922 = vsel %vm1416, %v1803, 0.0
    %v1923 = vadd.f32 %v1921, %v1922
    %v1924 = vsel %vm1416, %v1804, 0.0
    %v1925 = vadd.f32 %v1923, %v1924
    %v1926 = vsel %vm1416, %v1805, 0.0
    %v1927 = vadd.f32 %v1925, %v1926
    %v1928 = vsel %vm1416, %v1806, 0.0
    %v1929 = vadd.f32 %v1927, %v1928
    %v1930 = vsel %vm1416, %v1807, 0.0
    %v1931 = vadd.f32 %v1929, %v1930
    %v1932 = vsel %vm1416, %v1808, 0.0
    %v1933 = vadd.f32 %v1931, %v1932
    %v1934 = vsel %vm1416, %v1809, 0.0
    %v1935 = vadd.f32 %v1933, %v1934
    %v1936 = vsel %vm1416, %v1810, 0.0
    %v1937 = vadd.f32 %v1935, %v1936
    %1938 = vadd.xlane.f32.xlu0 %v1937
    %v1939 = vpop.xlane.xlu0 %1938
    %v1940 = vrot.slane %v1939, 4
    %v1941 = vadd.f32 %v1939, %v1940
    %v1942 = vrot.slane %v1941, 2
    %v1943 = vadd.f32 %v1941, %v1942
    %v1944 = vrot.slane %v1943, 1
    %v1945 = vadd.f32 %v1943, %v1944
    %s1946 = vtos %v1945
    %s1947 = smul.f32 %s1946, 0.00024414063
    %s1948 = sadd.f32 %s1554, %s1947
    %1949 = vst.msk [vmem:[#allocation2] sm:$0xff] %vm1416, 0.0
    %1950 = vst.msk [vmem:[#allocation2 + $0x8] sm:$0xff] %vm1416, 0.0
    %vm1951 = vcmask 58368
    %1952 = vst.msk [vmem:[#allocation2 + $0x10] sm:$0x3] %vm1951, 0.0
    %1953 = vst.msk [vmem:[#allocation2 + $0x18] sm:$0xff] %vm1416, 0.0
    %1954 = vst.msk [vmem:[#allocation2 + $0x20] sm:$0xff] %vm1416, 0.0
    %1955 = vst.msk [vmem:[#allocation2 + $0x28] sm:$0x3] %vm1951, 0.0
    %1956 = vst.msk [vmem:[#allocation2 + $0x30] sm:$0xff] %vm1416, 0.0
    %1957 = vst.msk [vmem:[#allocation2 + $0x38] sm:$0xff] %vm1416, 0.0
    %1958 = vst.msk [vmem:[#allocation2 + $0x40] sm:$0x3] %vm1951, 0.0
    %1959 = vst.msk [vmem:[#allocation2 + $0x48] sm:$0xff] %vm1416, 0.0
    %1960 = vst.msk [vmem:[#allocation2 + $0x50] sm:$0xff] %vm1416, 0.0
    %1961 = vst.msk [vmem:[#allocation2 + $0x58] sm:$0x3] %vm1951, 0.0
    %1962 = vst.msk [vmem:[#allocation2 + $0x60] sm:$0xff] %vm1416, 0.0
    %1963 = vst.msk [vmem:[#allocation2 + $0x68] sm:$0xff] %vm1416, 0.0
    %1964 = vst.msk [vmem:[#allocation2 + $0x70] sm:$0x3] %vm1951, 0.0
    %1965 = vst.msk [vmem:[#allocation2 + $0x78] sm:$0xff] %vm1416, 0.0
    %1966 = vst.msk [vmem:[#allocation2 + $0x80] sm:$0xff] %vm1416, 0.0
    %1967 = vst.msk [vmem:[#allocation2 + $0x88] sm:$0x3] %vm1951, 0.0
    %1968 = vst.msk [vmem:[#allocation2 + $0x90] sm:$0xff] %vm1416, 0.0
    %1969 = vst.msk [vmem:[#allocation2 + $0x98] sm:$0xff] %vm1416, 0.0
    %1970 = vst.msk [vmem:[#allocation2 + $0xa0] sm:$0x3] %vm1951, 0.0
    %1971 = vst.msk [vmem:[#allocation2 + $0xa8] sm:$0xff] %vm1416, 0.0
    %1972 = vst.msk [vmem:[#allocation2 + $0xb0] sm:$0xff] %vm1416, 0.0
    %1973 = vst.msk [vmem:[#allocation2 + $0xb8] sm:$0x3] %vm1951, 0.0
    %1974 = vst.msk [vmem:[#allocation2 + $0xc0] sm:$0xff] %vm1416, 0.0
    %1975 = vst.msk [vmem:[#allocation2 + $0xc8] sm:$0xff] %vm1416, 0.0
    %1976 = vst.msk [vmem:[#allocation2 + $0xd0] sm:$0x3] %vm1951, 0.0
    %1977 = vst.msk [vmem:[#allocation2 + $0xd8] sm:$0xff] %vm1416, 0.0
    %1978 = vst.msk [vmem:[#allocation2 + $0xe0] sm:$0xff] %vm1416, 0.0
    %1979 = vst.msk [vmem:[#allocation2 + $0xe8] sm:$0x3] %vm1951, 0.0
    %1980 = vst.msk [vmem:[#allocation2 + $0xf0] sm:$0xff] %vm1416, 0.0
    %1981 = vst.msk [vmem:[#allocation2 + $0xf8] sm:$0xff] %vm1416, 0.0
    %1982 = vst.msk [vmem:[#allocation2 + $0x100] sm:$0x3] %vm1951, 0.0
    %1983 = vst.msk [vmem:[#allocation2 + $0x108] sm:$0xff] %vm1416, 0.0
    %1984 = vst.msk [vmem:[#allocation2 + $0x110] sm:$0xff] %vm1416, 0.0
    %1985 = vst.msk [vmem:[#allocation2 + $0x118] sm:$0x3] %vm1951, 0.0
    %1986 = vst.msk [vmem:[#allocation2 + $0x120] sm:$0xff] %vm1416, 0.0
    %1987 = vst.msk [vmem:[#allocation2 + $0x128] sm:$0xff] %vm1416, 0.0
    %1988 = vst.msk [vmem:[#allocation2 + $0x130] sm:$0x3] %vm1951, 0.0
    %1989 = vst.msk [vmem:[#allocation2 + $0x138] sm:$0xff] %vm1416, 0.0
    %1990 = vst.msk [vmem:[#allocation2 + $0x140] sm:$0xff] %vm1416, 0.0
    %1991 = vst.msk [vmem:[#allocation2 + $0x148] sm:$0x3] %vm1951, 0.0
    %1992 = vst.msk [vmem:[#allocation2 + $0x150] sm:$0xff] %vm1416, 0.0
    %1993 = vst.msk [vmem:[#allocation2 + $0x158] sm:$0xff] %vm1416, 0.0
    %1994 = vst.msk [vmem:[#allocation2 + $0x160] sm:$0x3] %vm1951, 0.0
    %1995 = vst.msk [vmem:[#allocation2 + $0x168] sm:$0xff] %vm1416, 0.0
    %1996 = vst.msk [vmem:[#allocation2 + $0x170] sm:$0xff] %vm1416, 0.0
    %1997 = vst.msk [vmem:[#allocation2 + $0x178] sm:$0x3] %vm1951, 0.0
    %1998 = vst.msk [vmem:[#allocation2 + $0x180] sm:$0xff] %vm1416, 0.0
    %1999 = vst.msk [vmem:[#allocation2 + $0x188] sm:$0xff] %vm1416, 0.0
    %2000 = vst.msk [vmem:[#allocation2 + $0x190] sm:$0x3] %vm1951, 0.0
    %2001 = vst.msk [vmem:[#allocation2 + $0x198] sm:$0xff] %vm1416, 0.0
    %2002 = vst.msk [vmem:[#allocation2 + $0x1a0] sm:$0xff] %vm1416, 0.0
    %2003 = vst.msk [vmem:[#allocation2 + $0x1a8] sm:$0x3] %vm1951, 0.0
    %2004 = vst.msk [vmem:[#allocation2 + $0x1b0] sm:$0xff] %vm1416, 0.0
    %2005 = vst.msk [vmem:[#allocation2 + $0x1b8] sm:$0xff] %vm1416, 0.0
    %2006 = vst.msk [vmem:[#allocation2 + $0x1c0] sm:$0x3] %vm1951, 0.0
    %2007 = vst.msk [vmem:[#allocation2 + $0x1c8] sm:$0xff] %vm1416, 0.0
    %2008 = vst.msk [vmem:[#allocation2 + $0x1d0] sm:$0xff] %vm1416, 0.0
    %2009 = vst.msk [vmem:[#allocation2 + $0x1d8] sm:$0x3] %vm1951, 0.0
    %2010 = vst.msk [vmem:[#allocation2 + $0x1e0] sm:$0xff] %vm1416, 0.0
    %2011 = vst.msk [vmem:[#allocation2 + $0x1e8] sm:$0xff] %vm1416, 0.0
    %2012 = vst.msk [vmem:[#allocation2 + $0x1f0] sm:$0x3] %vm1951, 0.0
    %2013 = vst.msk [vmem:[#allocation2 + $0x1f8] sm:$0xff] %vm1416, 0.0
    %2014 = vst.msk [vmem:[#allocation2 + $0x200] sm:$0xff] %vm1416, 0.0
    %2015 = vst.msk [vmem:[#allocation2 + $0x208] sm:$0x3] %vm1951, 0.0
    %2016 = vst.msk [vmem:[#allocation2 + $0x210] sm:$0xff] %vm1416, 0.0
    %2017 = vst.msk [vmem:[#allocation2 + $0x218] sm:$0xff] %vm1416, 0.0
    %2018 = vst.msk [vmem:[#allocation2 + $0x220] sm:$0x3] %vm1951, 0.0
    %2019 = vst.msk [vmem:[#allocation2 + $0x228] sm:$0xff] %vm1416, 0.0
    %2020 = vst.msk [vmem:[#allocation2 + $0x230] sm:$0xff] %vm1416, 0.0
    %2021 = vst.msk [vmem:[#allocation2 + $0x238] sm:$0x3] %vm1951, 0.0
    %2022 = vst.msk [vmem:[#allocation2 + $0x240] sm:$0xff] %vm1416, 0.0
    %2023 = vst.msk [vmem:[#allocation2 + $0x248] sm:$0xff] %vm1416, 0.0
    %2024 = vst.msk [vmem:[#allocation2 + $0x250] sm:$0x3] %vm1951, 0.0
    %2025 = vst.msk [vmem:[#allocation2 + $0x258] sm:$0xff] %vm1416, 0.0
    %2026 = vst.msk [vmem:[#allocation2 + $0x260] sm:$0xff] %vm1416, 0.0
    %2027 = vst.msk [vmem:[#allocation2 + $0x268] sm:$0x3] %vm1951, 0.0
    %2028 = vst.msk [vmem:[#allocation2 + $0x270] sm:$0xff] %vm1416, 0.0
    %2029 = vst.msk [vmem:[#allocation2 + $0x278] sm:$0xff] %vm1416, 0.0
    %2030 = vst.msk [vmem:[#allocation2 + $0x280] sm:$0x3] %vm1951, 0.0
    %2031 = vst.msk [vmem:[#allocation2 + $0x288] sm:$0xff] %vm1416, 0.0
    %2032 = vst.msk [vmem:[#allocation2 + $0x290] sm:$0xff] %vm1416, 0.0
    %2033 = vst.msk [vmem:[#allocation2 + $0x298] sm:$0x3] %vm1951, 0.0
    %2034 = vst.msk [vmem:[#allocation2 + $0x2a0] sm:$0xff] %vm1416, 0.0
    %2035 = vst.msk [vmem:[#allocation2 + $0x2a8] sm:$0xff] %vm1416, 0.0
    %2036 = vst.msk [vmem:[#allocation2 + $0x2b0] sm:$0x3] %vm1951, 0.0
    %2037 = vst.msk [vmem:[#allocation2 + $0x2b8] sm:$0xff] %vm1416, 0.0
    %2038 = vst.msk [vmem:[#allocation2 + $0x2c0] sm:$0xff] %vm1416, 0.0
    %2039 = vst.msk [vmem:[#allocation2 + $0x2c8] sm:$0x3] %vm1951, 0.0
    %2040 = vst.msk [vmem:[#allocation2 + $0x2d0] sm:$0xff] %vm1416, 0.0
    %2041 = vst.msk [vmem:[#allocation2 + $0x2d8] sm:$0xff] %vm1416, 0.0
    %2042 = vst.msk [vmem:[#allocation2 + $0x2e0] sm:$0x3] %vm1951, 0.0
    %2043 = vst.msk [vmem:[#allocation2 + $0x2e8] sm:$0xff] %vm1416, 0.0
    %2044 = vst.msk [vmem:[#allocation2 + $0x2f0] sm:$0xff] %vm1416, 0.0
    %2045 = vst.msk [vmem:[#allocation2 + $0x2f8] sm:$0x3] %vm1951, 0.0
    %2046 = vst.msk [vmem:[#allocation2 + $0x300] sm:$0xff] %vm1416, 0.0
    %2047 = vst.msk [vmem:[#allocation2 + $0x308] sm:$0xff] %vm1416, 0.0
    %2048 = vst.msk [vmem:[#allocation2 + $0x310] sm:$0x3] %vm1951, 0.0
    %2049 = vst.msk [vmem:[#allocation2 + $0x318] sm:$0xff] %vm1416, 0.0
    %2050 = vst.msk [vmem:[#allocation2 + $0x320] sm:$0xff] %vm1416, 0.0
    %2051 = vst.msk [vmem:[#allocation2 + $0x328] sm:$0x3] %vm1951, 0.0
    %2052 = vst.msk [vmem:[#allocation2 + $0x330] sm:$0xff] %vm1416, 0.0
    %2053 = vst.msk [vmem:[#allocation2 + $0x338] sm:$0xff] %vm1416, 0.0
    %2054 = vst.msk [vmem:[#allocation2 + $0x340] sm:$0x3] %vm1951, 0.0
    %2055 = vst.msk [vmem:[#allocation2 + $0x348] sm:$0xff] %vm1416, 0.0
    %2056 = vst.msk [vmem:[#allocation2 + $0x350] sm:$0xff] %vm1416, 0.0
    %2057 = vst.msk [vmem:[#allocation2 + $0x358] sm:$0x3] %vm1951, 0.0
    %s2058 = scalar_lea.vmem [#allocation2], 24
    %2059 = vst.msk [vmem:[%s2058 + $0x1] sm:$0xff] %vm1416, %v1683
    %2060 = vst.msk [vmem:[%s2058 + $0x9] sm:$0xff] %vm1416, %v1684
    %2061 = vst.msk [vmem:[%s2058 + $0x19] sm:$0xff] %vm1416, %v1685
    %2062 = vst.msk [vmem:[%s2058 + $0x21] sm:$0xff] %vm1416, %v1686
    %2063 = vst.msk [vmem:[%s2058 + $0x31] sm:$0xff] %vm1416, %v1687
    %2064 = vst.msk [vmem:[%s2058 + $0x39] sm:$0xff] %vm1416, %v1688
    %2065 = vst.msk [vmem:[%s2058 + $0x49] sm:$0xff] %vm1416, %v1689
    %2066 = vst.msk [vmem:[%s2058 + $0x51] sm:$0xff] %vm1416, %v1690
    %2067 = vst.msk [vmem:[%s2058 + $0x61] sm:$0xff] %vm1416, %v1691
    %2068 = vst.msk [vmem:[%s2058 + $0x69] sm:$0xff] %vm1416, %v1692
    %2069 = vst.msk [vmem:[%s2058 + $0x79] sm:$0xff] %vm1416, %v1693
    %2070 = vst.msk [vmem:[%s2058 + $0x81] sm:$0xff] %vm1416, %v1694
    %2071 = vst.msk [vmem:[%s2058 + $0x91] sm:$0xff] %vm1416, %v1695
    %2072 = vst.msk [vmem:[%s2058 + $0x99] sm:$0xff] %vm1416, %v1696
    %2073 = vst.msk [vmem:[%s2058 + $0xa9] sm:$0xff] %vm1416, %v1697
    %2074 = vst.msk [vmem:[%s2058 + $0xb1] sm:$0xff] %vm1416, %v1698
    %2075 = vst.msk [vmem:[%s2058 + $0xc1] sm:$0xff] %vm1416, %v1699
    %2076 = vst.msk [vmem:[%s2058 + $0xc9] sm:$0xff] %vm1416, %v1700
    %2077 = vst.msk [vmem:[%s2058 + $0xd9] sm:$0xff] %vm1416, %v1701
    %2078 = vst.msk [vmem:[%s2058 + $0xe1] sm:$0xff] %vm1416, %v1702
    %2079 = vst.msk [vmem:[%s2058 + $0xf1] sm:$0xff] %vm1416, %v1703
    %2080 = vst.msk [vmem:[%s2058 + $0xf9] sm:$0xff] %vm1416, %v1704
    %2081 = vst.msk [vmem:[%s2058 + $0x109] sm:$0xff] %vm1416, %v1705
    %2082 = vst.msk [vmem:[%s2058 + $0x111] sm:$0xff] %vm1416, %v1706
    %2083 = vst.msk [vmem:[%s2058 + $0x121] sm:$0xff] %vm1416, %v1707
    %2084 = vst.msk [vmem:[%s2058 + $0x129] sm:$0xff] %vm1416, %v1708
    %2085 = vst.msk [vmem:[%s2058 + $0x139] sm:$0xff] %vm1416, %v1709
    %2086 = vst.msk [vmem:[%s2058 + $0x141] sm:$0xff] %vm1416, %v1710
    %2087 = vst.msk [vmem:[%s2058 + $0x151] sm:$0xff] %vm1416, %v1711
    %2088 = vst.msk [vmem:[%s2058 + $0x159] sm:$0xff] %vm1416, %v1712
    %2089 = vst.msk [vmem:[%s2058 + $0x169] sm:$0xff] %vm1416, %v1713
    %2090 = vst.msk [vmem:[%s2058 + $0x171] sm:$0xff] %vm1416, %v1714
    %2091 = vst.msk [vmem:[%s2058 + $0x1b1] sm:$0xff] %vm1416, %v1715
    %2092 = vst.msk [vmem:[%s2058 + $0x1b9] sm:$0xff] %vm1416, %v1716
    %2093 = vst.msk [vmem:[%s2058 + $0x1c9] sm:$0xff] %vm1416, %v1717
    %2094 = vst.msk [vmem:[%s2058 + $0x1d1] sm:$0xff] %vm1416, %v1718
    %2095 = vst.msk [vmem:[%s2058 + $0x1e1] sm:$0xff] %vm1416, %v1719
    %2096 = vst.msk [vmem:[%s2058 + $0x1e9] sm:$0xff] %vm1416, %v1720
    %2097 = vst.msk [vmem:[%s2058 + $0x1f9] sm:$0xff] %vm1416, %v1721
    %2098 = vst.msk [vmem:[%s2058 + $0x201] sm:$0xff] %vm1416, %v1722
    %2099 = vst.msk [vmem:[%s2058 + $0x211] sm:$0xff] %vm1416, %v1723
    %2100 = vst.msk [vmem:[%s2058 + $0x219] sm:$0xff] %vm1416, %v1724
    %2101 = vst.msk [vmem:[%s2058 + $0x229] sm:$0xff] %vm1416, %v1725
    %2102 = vst.msk [vmem:[%s2058 + $0x231] sm:$0xff] %vm1416, %v1726
    %2103 = vst.msk [vmem:[%s2058 + $0x241] sm:$0xff] %vm1416, %v1727
    %2104 = vst.msk [vmem:[%s2058 + $0x249] sm:$0xff] %vm1416, %v1728
    %2105 = vst.msk [vmem:[%s2058 + $0x259] sm:$0xff] %vm1416, %v1729
    %2106 = vst.msk [vmem:[%s2058 + $0x261] sm:$0xff] %vm1416, %v1730
    %2107 = vst.msk [vmem:[%s2058 + $0x271] sm:$0xff] %vm1416, %v1731
    %2108 = vst.msk [vmem:[%s2058 + $0x279] sm:$0xff] %vm1416, %v1732
    %2109 = vst.msk [vmem:[%s2058 + $0x289] sm:$0xff] %vm1416, %v1733
    %2110 = vst.msk [vmem:[%s2058 + $0x291] sm:$0xff] %vm1416, %v1734
    %2111 = vst.msk [vmem:[%s2058 + $0x2a1] sm:$0xff] %vm1416, %v1735
    %2112 = vst.msk [vmem:[%s2058 + $0x2a9] sm:$0xff] %vm1416, %v1736
    %2113 = vst.msk [vmem:[%s2058 + $0x2b9] sm:$0xff] %vm1416, %v1737
    %2114 = vst.msk [vmem:[%s2058 + $0x2c1] sm:$0xff] %vm1416, %v1738
    %2115 = vst.msk [vmem:[%s2058 + $0x2d1] sm:$0xff] %vm1416, %v1739
    %2116 = vst.msk [vmem:[%s2058 + $0x2d9] sm:$0xff] %vm1416, %v1740
    %2117 = vst.msk [vmem:[%s2058 + $0x2e9] sm:$0xff] %vm1416, %v1741
    %2118 = vst.msk [vmem:[%s2058 + $0x2f1] sm:$0xff] %vm1416, %v1742
    %2119 = vst.msk [vmem:[%s2058 + $0x301] sm:$0xff] %vm1416, %v1743
    %2120 = vst.msk [vmem:[%s2058 + $0x309] sm:$0xff] %vm1416, %v1744
    %2121 = vst.msk [vmem:[%s2058 + $0x319] sm:$0xff] %vm1416, %v1745
    %2122 = vst.msk [vmem:[%s2058 + $0x321] sm:$0xff] %vm1416, %v1746
    %v2123 = vld [vmem:[#allocation2] sm:$0xff]
    %v2124 = vld [vmem:[#allocation2 + $0x8] sm:$0xff]
    %v2125 = vld [vmem:[#allocation2 + $0x10] sm:$0x3]
    %v2126 = vld [vmem:[#allocation2 + $0x18] sm:$0xff]
    %v2127 = vld [vmem:[#allocation2 + $0x20] sm:$0xff]
    %v2128 = vld [vmem:[#allocation2 + $0x28] sm:$0x3]
    %v2129 = vld [vmem:[#allocation2 + $0x30] sm:$0xff]
    %v2130 = vld [vmem:[#allocation2 + $0x38] sm:$0xff]
    %v2131 = vld [vmem:[#allocation2 + $0x40] sm:$0x3]
    %v2132 = vld [vmem:[#allocation2 + $0x48] sm:$0xff]
    %v2133 = vld [vmem:[#allocation2 + $0x50] sm:$0xff]
    %v2134 = vld [vmem:[#allocation2 + $0x58] sm:$0x3]
    %v2135 = vld [vmem:[#allocation2 + $0x60] sm:$0xff]
    %v2136 = vld [vmem:[#allocation2 + $0x68] sm:$0xff]
    %v2137 = vld [vmem:[#allocation2 + $0x70] sm:$0x3]
    %v2138 = vld [vmem:[#allocation2 + $0x78] sm:$0xff]
    %v2139 = vld [vmem:[#allocation2 + $0x80] sm:$0xff]
    %v2140 = vld [vmem:[#allocation2 + $0x88] sm:$0x3]
    %v2141 = vld [vmem:[#allocation2 + $0x90] sm:$0xff]
    %v2142 = vld [vmem:[#allocation2 + $0x98] sm:$0xff]
    %v2143 = vld [vmem:[#allocation2 + $0xa0] sm:$0x3]
    %v2144 = vld [vmem:[#allocation2 + $0xa8] sm:$0xff]
    %v2145 = vld [vmem:[#allocation2 + $0xb0] sm:$0xff]
    %v2146 = vld [vmem:[#allocation2 + $0xb8] sm:$0x3]
    %v2147 = vld [vmem:[#allocation2 + $0xc0] sm:$0xff]
    %v2148 = vld [vmem:[#allocation2 + $0xc8] sm:$0xff]
    %v2149 = vld [vmem:[#allocation2 + $0xd0] sm:$0x3]
    %v2150 = vld [vmem:[#allocation2 + $0xd8] sm:$0xff]
    %v2151 = vld [vmem:[#allocation2 + $0xe0] sm:$0xff]
    %v2152 = vld [vmem:[#allocation2 + $0xe8] sm:$0x3]
    %v2153 = vld [vmem:[#allocation2 + $0xf0] sm:$0xff]
    %v2154 = vld [vmem:[#allocation2 + $0xf8] sm:$0xff]
    %v2155 = vld [vmem:[#allocation2 + $0x100] sm:$0x3]
    %v2156 = vld [vmem:[#allocation2 + $0x108] sm:$0xff]
    %v2157 = vld [vmem:[#allocation2 + $0x110] sm:$0xff]
    %v2158 = vld [vmem:[#allocation2 + $0x118] sm:$0x3]
    %v2159 = vld [vmem:[#allocation2 + $0x120] sm:$0xff]
    %v2160 = vld [vmem:[#allocation2 + $0x128] sm:$0xff]
    %v2161 = vld [vmem:[#allocation2 + $0x130] sm:$0x3]
    %v2162 = vld [vmem:[#allocation2 + $0x138] sm:$0xff]
    %v2163 = vld [vmem:[#allocation2 + $0x140] sm:$0xff]
    %v2164 = vld [vmem:[#allocation2 + $0x148] sm:$0x3]
    %v2165 = vld [vmem:[#allocation2 + $0x150] sm:$0xff]
    %v2166 = vld [vmem:[#allocation2 + $0x158] sm:$0xff]
    %v2167 = vld [vmem:[#allocation2 + $0x160] sm:$0x3]
    %v2168 = vld [vmem:[#allocation2 + $0x168] sm:$0xff]
    %v2169 = vld [vmem:[#allocation2 + $0x170] sm:$0xff]
    %v2170 = vld [vmem:[#allocation2 + $0x178] sm:$0x3]
    %v2171 = vld [vmem:[#allocation2 + $0x180] sm:$0xff]
    %v2172 = vld [vmem:[#allocation2 + $0x188] sm:$0xff]
    %v2173 = vld [vmem:[#allocation2 + $0x190] sm:$0x3]
    %v2174 = vld [vmem:[#allocation2 + $0x198] sm:$0xff]
    %v2175 = vld [vmem:[#allocation2 + $0x1a0] sm:$0xff]
    %v2176 = vld [vmem:[#allocation2 + $0x1a8] sm:$0x3]
    %v2177 = vld [vmem:[#allocation2 + $0x1b0] sm:$0xff]
    %v2178 = vld [vmem:[#allocation2 + $0x1b8] sm:$0xff]
    %v2179 = vld [vmem:[#allocation2 + $0x1c0] sm:$0x3]
    %v2180 = vld [vmem:[#allocation2 + $0x1c8] sm:$0xff]
    %v2181 = vld [vmem:[#allocation2 + $0x1d0] sm:$0xff]
    %v2182 = vld [vmem:[#allocation2 + $0x1d8] sm:$0x3]
    %v2183 = vld [vmem:[#allocation2 + $0x1e0] sm:$0xff]
    %v2184 = vld [vmem:[#allocation2 + $0x1e8] sm:$0xff]
    %v2185 = vld [vmem:[#allocation2 + $0x1f0] sm:$0x3]
    %v2186 = vld [vmem:[#allocation2 + $0x1f8] sm:$0xff]
    %v2187 = vld [vmem:[#allocation2 + $0x200] sm:$0xff]
    %v2188 = vld [vmem:[#allocation2 + $0x208] sm:$0x3]
    %v2189 = vld [vmem:[#allocation2 + $0x210] sm:$0xff]
    %v2190 = vld [vmem:[#allocation2 + $0x218] sm:$0xff]
    %v2191 = vld [vmem:[#allocation2 + $0x220] sm:$0x3]
    %v2192 = vld [vmem:[#allocation2 + $0x228] sm:$0xff]
    %v2193 = vld [vmem:[#allocation2 + $0x230] sm:$0xff]
    %v2194 = vld [vmem:[#allocation2 + $0x238] sm:$0x3]
    %v2195 = vld [vmem:[#allocation2 + $0x240] sm:$0xff]
    %v2196 = vld [vmem:[#allocation2 + $0x248] sm:$0xff]
    %v2197 = vld [vmem:[#allocation2 + $0x250] sm:$0x3]
    %v2198 = vld [vmem:[#allocation2 + $0x258] sm:$0xff]
    %v2199 = vld [vmem:[#allocation2 + $0x260] sm:$0xff]
    %v2200 = vld [vmem:[#allocation2 + $0x268] sm:$0x3]
    %v2201 = vld [vmem:[#allocation2 + $0x270] sm:$0xff]
    %v2202 = vld [vmem:[#allocation2 + $0x278] sm:$0xff]
    %v2203 = vld [vmem:[#allocation2 + $0x280] sm:$0x3]
    %v2204 = vld [vmem:[#allocation2 + $0x288] sm:$0xff]
    %v2205 = vld [vmem:[#allocation2 + $0x290] sm:$0xff]
    %v2206 = vld [vmem:[#allocation2 + $0x298] sm:$0x3]
    %v2207 = vld [vmem:[#allocation2 + $0x2a0] sm:$0xff]
    %v2208 = vld [vmem:[#allocation2 + $0x2a8] sm:$0xff]
    %v2209 = vld [vmem:[#allocation2 + $0x2b0] sm:$0x3]
    %v2210 = vld [vmem:[#allocation2 + $0x2b8] sm:$0xff]
    %v2211 = vld [vmem:[#allocation2 + $0x2c0] sm:$0xff]
    %v2212 = vld [vmem:[#allocation2 + $0x2c8] sm:$0x3]
    %v2213 = vld [vmem:[#allocation2 + $0x2d0] sm:$0xff]
    %v2214 = vld [vmem:[#allocation2 + $0x2d8] sm:$0xff]
    %v2215 = vld [vmem:[#allocation2 + $0x2e0] sm:$0x3]
    %v2216 = vld [vmem:[#allocation2 + $0x2e8] sm:$0xff]
    %v2217 = vld [vmem:[#allocation2 + $0x2f0] sm:$0xff]
    %v2218 = vld [vmem:[#allocation2 + $0x2f8] sm:$0x3]
    %v2219 = vld [vmem:[#allocation2 + $0x300] sm:$0xff]
    %v2220 = vld [vmem:[#allocation2 + $0x308] sm:$0xff]
    %v2221 = vld [vmem:[#allocation2 + $0x310] sm:$0x3]
    %v2222 = vld [vmem:[#allocation2 + $0x318] sm:$0xff]
    %v2223 = vld [vmem:[#allocation2 + $0x320] sm:$0xff]
    %v2224 = vld [vmem:[#allocation2 + $0x328] sm:$0x3]
    %v2225 = vld [vmem:[#allocation2 + $0x330] sm:$0xff]
    %v2226 = vld [vmem:[#allocation2 + $0x338] sm:$0xff]
    %v2227 = vld [vmem:[#allocation2 + $0x340] sm:$0x3]
    %v2228 = vld [vmem:[#allocation2 + $0x348] sm:$0xff]
    %v2229 = vld [vmem:[#allocation2 + $0x350] sm:$0xff]
    %v2230 = vld [vmem:[#allocation2 + $0x358] sm:$0x3]
    %vm2327 = vcmask 1046528
    %v2328 = vrot.slane %v2123, 1
    %v2329 = vrot.slane %v2124, 1
    %v2330 = vsel %vm2327, %v2328, %v2329
    %v2331 = vrot.slane %v2125, 1
    %v2332 = vsel %vm2327, %v2329, %v2331
    %v2333 = vrot.slane %v2126, 1
    %v2334 = vrot.slane %v2127, 1
    %v2335 = vsel %vm2327, %v2333, %v2334
    %v2336 = vrot.slane %v2128, 1
    %v2337 = vsel %vm2327, %v2334, %v2336
    %v2338 = vrot.slane %v2129, 1
    %v2339 = vrot.slane %v2130, 1
    %v2340 = vsel %vm2327, %v2338, %v2339
    %v2341 = vrot.slane %v2131, 1
    %v2342 = vsel %vm2327, %v2339, %v2341
    %v2343 = vrot.slane %v2132, 1
    %v2344 = vrot.slane %v2133, 1
    %v2345 = vsel %vm2327, %v2343, %v2344
    %v2346 = vrot.slane %v2134, 1
    %v2347 = vsel %vm2327, %v2344, %v2346
    %v2348 = vrot.slane %v2135, 1
    %v2349 = vrot.slane %v2136, 1
    %v2350 = vsel %vm2327, %v2348, %v2349
    %v2351 = vrot.slane %v2137, 1
    %v2352 = vsel %vm2327, %v2349, %v2351
    %v2353 = vrot.slane %v2138, 1
    %v2354 = vrot.slane %v2139, 1
    %v2355 = vsel %vm2327, %v2353, %v2354
    %v2356 = vrot.slane %v2140, 1
    %v2357 = vsel %vm2327, %v2354, %v2356
    %v2358 = vrot.slane %v2141, 1
    %v2359 = vrot.slane %v2142, 1
    %v2360 = vsel %vm2327, %v2358, %v2359
    %v2361 = vrot.slane %v2143, 1
    %v2362 = vsel %vm2327, %v2359, %v2361
    %v2363 = vrot.slane %v2144, 1
    %v2364 = vrot.slane %v2145, 1
    %v2365 = vsel %vm2327, %v2363, %v2364
    %v2366 = vrot.slane %v2146, 1
    %v2367 = vsel %vm2327, %v2364, %v2366
    %v2368 = vrot.slane %v2147, 1
    %v2369 = vrot.slane %v2148, 1
    %v2370 = vsel %vm2327, %v2368, %v2369
    %v2371 = vrot.slane %v2149, 1
    %v2372 = vsel %vm2327, %v2369, %v2371
    %v2373 = vrot.slane %v2150, 1
    %v2374 = vrot.slane %v2151, 1
    %v2375 = vsel %vm2327, %v2373, %v2374
    %v2376 = vrot.slane %v2152, 1
    %v2377 = vsel %vm2327, %v2374, %v2376
    %v2378 = vrot.slane %v2153, 1
    %v2379 = vrot.slane %v2154, 1
    %v2380 = vsel %vm2327, %v2378, %v2379
    %v2381 = vrot.slane %v2155, 1
    %v2382 = vsel %vm2327, %v2379, %v2381
    %v2383 = vrot.slane %v2156, 1
    %v2384 = vrot.slane %v2157, 1
    %v2385 = vsel %vm2327, %v2383, %v2384
    %v2386 = vrot.slane %v2158, 1
    %v2387 = vsel %vm2327, %v2384, %v2386
    %v2388 = vrot.slane %v2159, 1
    %v2389 = vrot.slane %v2160, 1
    %v2390 = vsel %vm2327, %v2388, %v2389
    %v2391 = vrot.slane %v2161, 1
    %v2392 = vsel %vm2327, %v2389, %v2391
    %v2393 = vrot.slane %v2162, 1
    %v2394 = vrot.slane %v2163, 1
    %v2395 = vsel %vm2327, %v2393, %v2394
    %v2396 = vrot.slane %v2164, 1
    %v2397 = vsel %vm2327, %v2394, %v2396
    %v2398 = vrot.slane %v2165, 1
    %v2399 = vrot.slane %v2166, 1
    %v2400 = vsel %vm2327, %v2398, %v2399
    %v2401 = vrot.slane %v2167, 1
    %v2402 = vsel %vm2327, %v2399, %v2401
    %v2403 = vrot.slane %v2168, 1
    %v2404 = vrot.slane %v2169, 1
    %v2405 = vsel %vm2327, %v2403, %v2404
    %v2406 = vrot.slane %v2170, 1
    %v2407 = vsel %vm2327, %v2404, %v2406
    %v2408 = vrot.slane %v2177, 1
    %v2409 = vrot.slane %v2178, 1
    %v2410 = vsel %vm2327, %v2408, %v2409
    %v2411 = vrot.slane %v2179, 1
    %v2412 = vsel %vm2327, %v2409, %v2411
    %v2413 = vrot.slane %v2180, 1
    %v2414 = vrot.slane %v2181, 1
    %v2415 = vsel %vm2327, %v2413, %v2414
    %v2416 = vrot.slane %v2182, 1
    %v2417 = vsel %vm2327, %v2414, %v2416
    %v2418 = vrot.slane %v2183, 1
    %v2419 = vrot.slane %v2184, 1
    %v2420 = vsel %vm2327, %v2418, %v2419
    %v2421 = vrot.slane %v2185, 1
    %v2422 = vsel %vm2327, %v2419, %v2421
    %v2423 = vrot.slane %v2186, 1
    %v2424 = vrot.slane %v2187, 1
    %v2425 = vsel %vm2327, %v2423, %v2424
    %v2426 = vrot.slane %v2188, 1
    %v2427 = vsel %vm2327, %v2424, %v2426
    %v2428 = vrot.slane %v2189, 1
    %v2429 = vrot.slane %v2190, 1
    %v2430 = vsel %vm2327, %v2428, %v2429
    %v2431 = vrot.slane %v2191, 1
    %v2432 = vsel %vm2327, %v2429, %v2431
    %v2433 = vrot.slane %v2192, 1
    %v2434 = vrot.slane %v2193, 1
    %v2435 = vsel %vm2327, %v2433, %v2434
    %v2436 = vrot.slane %v2194, 1
    %v2437 = vsel %vm2327, %v2434, %v2436
    %v2438 = vrot.slane %v2195, 1
    %v2439 = vrot.slane %v2196, 1
    %v2440 = vsel %vm2327, %v2438, %v2439
    %v2441 = vrot.slane %v2197, 1
    %v2442 = vsel %vm2327, %v2439, %v2441
    %v2443 = vrot.slane %v2198, 1
    %v2444 = vrot.slane %v2199, 1
    %v2445 = vsel %vm2327, %v2443, %v2444
    %v2446 = vrot.slane %v2200, 1
    %v2447 = vsel %vm2327, %v2444, %v2446
    %v2448 = vrot.slane %v2201, 1
    %v2449 = vrot.slane %v2202, 1
    %v2450 = vsel %vm2327, %v2448, %v2449
    %v2451 = vrot.slane %v2203, 1
    %v2452 = vsel %vm2327, %v2449, %v2451
    %v2453 = vrot.slane %v2204, 1
    %v2454 = vrot.slane %v2205, 1
    %v2455 = vsel %vm2327, %v2453, %v2454
    %v2456 = vrot.slane %v2206, 1
    %v2457 = vsel %vm2327, %v2454, %v2456
    %v2458 = vrot.slane %v2207, 1
    %v2459 = vrot.slane %v2208, 1
    %v2460 = vsel %vm2327, %v2458, %v2459
    %v2461 = vrot.slane %v2209, 1
    %v2462 = vsel %vm2327, %v2459, %v2461
    %v2463 = vrot.slane %v2210, 1
    %v2464 = vrot.slane %v2211, 1
    %v2465 = vsel %vm2327, %v2463, %v2464
    %v2466 = vrot.slane %v2212, 1
    %v2467 = vsel %vm2327, %v2464, %v2466
    %v2468 = vrot.slane %v2213, 1
    %v2469 = vrot.slane %v2214, 1
    %v2470 = vsel %vm2327, %v2468, %v2469
    %v2471 = vrot.slane %v2215, 1
    %v2472 = vsel %vm2327, %v2469, %v2471
    %v2473 = vrot.slane %v2216, 1
    %v2474 = vrot.slane %v2217, 1
    %v2475 = vsel %vm2327, %v2473, %v2474
    %v2476 = vrot.slane %v2218, 1
    %v2477 = vsel %vm2327, %v2474, %v2476
    %v2478 = vrot.slane %v2219, 1
    %v2479 = vrot.slane %v2220, 1
    %v2480 = vsel %vm2327, %v2478, %v2479
    %v2481 = vrot.slane %v2221, 1
    %v2482 = vsel %vm2327, %v2479, %v2481
    %v2483 = vrot.slane %v2222, 1
    %v2484 = vrot.slane %v2223, 1
    %v2485 = vsel %vm2327, %v2483, %v2484
    %v2486 = vrot.slane %v2224, 1
    %v2487 = vsel %vm2327, %v2484, %v2486
    %2488 = vrot.lane.b32.xlu0 %v2330, 8
    %v2489 = vpop.permute.xlu0 %2488
    %2490 = vrot.lane.b32.xlu0 %v2332, 8
    %v2491 = vpop.permute.xlu0 %2490
    %2492 = vrot.lane.b32.xlu0 %v2335, 8
    %v2493 = vpop.permute.xlu0 %2492
    %2494 = vrot.lane.b32.xlu0 %v2337, 8
    %v2495 = vpop.permute.xlu0 %2494
    %2496 = vrot.lane.b32.xlu0 %v2340, 8
    %v2497 = vpop.permute.xlu0 %2496
    %2498 = vrot.lane.b32.xlu0 %v2342, 8
    %v2499 = vpop.permute.xlu0 %2498
    %2500 = vrot.lane.b32.xlu0 %v2345, 8
    %v2501 = vpop.permute.xlu0 %2500
    %2502 = vrot.lane.b32.xlu0 %v2347, 8
    %v2503 = vpop.permute.xlu0 %2502
    %2504 = vrot.lane.b32.xlu0 %v2350, 8
    %v2505 = vpop.permute.xlu0 %2504
    %2506 = vrot.lane.b32.xlu0 %v2352, 8
    %v2507 = vpop.permute.xlu0 %2506
    %2508 = vrot.lane.b32.xlu0 %v2355, 8
    %v2509 = vpop.permute.xlu0 %2508
    %2510 = vrot.lane.b32.xlu0 %v2357, 8
    %v2511 = vpop.permute.xlu0 %2510
    %2512 = vrot.lane.b32.xlu0 %v2360, 8
    %v2513 = vpop.permute.xlu0 %2512
    %2514 = vrot.lane.b32.xlu0 %v2362, 8
    %v2515 = vpop.permute.xlu0 %2514
    %2516 = vrot.lane.b32.xlu0 %v2365, 8
    %v2517 = vpop.permute.xlu0 %2516
    %2518 = vrot.lane.b32.xlu0 %v2367, 8
    %v2519 = vpop.permute.xlu0 %2518
    %2520 = vrot.lane.b32.xlu0 %v2370, 8
    %v2521 = vpop.permute.xlu0 %2520
    %2522 = vrot.lane.b32.xlu0 %v2372, 8
    %v2523 = vpop.permute.xlu0 %2522
    %2524 = vrot.lane.b32.xlu0 %v2375, 8
    %v2525 = vpop.permute.xlu0 %2524
    %2526 = vrot.lane.b32.xlu0 %v2377, 8
    %v2527 = vpop.permute.xlu0 %2526
    %2528 = vrot.lane.b32.xlu0 %v2380, 8
    %v2529 = vpop.permute.xlu0 %2528
    %2530 = vrot.lane.b32.xlu0 %v2382, 8
    %v2531 = vpop.permute.xlu0 %2530
    %2532 = vrot.lane.b32.xlu0 %v2385, 8
    %v2533 = vpop.permute.xlu0 %2532
    %2534 = vrot.lane.b32.xlu0 %v2387, 8
    %v2535 = vpop.permute.xlu0 %2534
    %2536 = vrot.lane.b32.xlu0 %v2390, 8
    %v2537 = vpop.permute.xlu0 %2536
    %2538 = vrot.lane.b32.xlu0 %v2392, 8
    %v2539 = vpop.permute.xlu0 %2538
    %2540 = vrot.lane.b32.xlu0 %v2395, 8
    %v2541 = vpop.permute.xlu0 %2540
    %2542 = vrot.lane.b32.xlu0 %v2397, 8
    %v2543 = vpop.permute.xlu0 %2542
    %2544 = vrot.lane.b32.xlu0 %v2400, 8
    %v2545 = vpop.permute.xlu0 %2544
    %2546 = vrot.lane.b32.xlu0 %v2402, 8
    %v2547 = vpop.permute.xlu0 %2546
    %2548 = vrot.lane.b32.xlu0 %v2405, 8
    %v2549 = vpop.permute.xlu0 %2548
    %2550 = vrot.lane.b32.xlu0 %v2407, 8
    %v2551 = vpop.permute.xlu0 %2550
    %2552 = vrot.lane.b32.xlu0 %v2410, 8
    %v2553 = vpop.permute.xlu0 %2552
    %2554 = vrot.lane.b32.xlu0 %v2412, 8
    %v2555 = vpop.permute.xlu0 %2554
    %2556 = vrot.lane.b32.xlu0 %v2415, 8
    %v2557 = vpop.permute.xlu0 %2556
    %2558 = vrot.lane.b32.xlu0 %v2417, 8
    %v2559 = vpop.permute.xlu0 %2558
    %2560 = vrot.lane.b32.xlu0 %v2420, 8
    %v2561 = vpop.permute.xlu0 %2560
    %2562 = vrot.lane.b32.xlu0 %v2422, 8
    %v2563 = vpop.permute.xlu0 %2562
    %2564 = vrot.lane.b32.xlu0 %v2425, 8
    %v2565 = vpop.permute.xlu0 %2564
    %2566 = vrot.lane.b32.xlu0 %v2427, 8
    %v2567 = vpop.permute.xlu0 %2566
    %2568 = vrot.lane.b32.xlu0 %v2430, 8
    %v2569 = vpop.permute.xlu0 %2568
    %2570 = vrot.lane.b32.xlu0 %v2432, 8
    %v2571 = vpop.permute.xlu0 %2570
    %2572 = vrot.lane.b32.xlu0 %v2435, 8
    %v2573 = vpop.permute.xlu0 %2572
    %2574 = vrot.lane.b32.xlu0 %v2437, 8
    %v2575 = vpop.permute.xlu0 %2574
    %2576 = vrot.lane.b32.xlu0 %v2440, 8
    %v2577 = vpop.permute.xlu0 %2576
    %2578 = vrot.lane.b32.xlu0 %v2442, 8
    %v2579 = vpop.permute.xlu0 %2578
    %2580 = vrot.lane.b32.xlu0 %v2445, 8
    %v2581 = vpop.permute.xlu0 %2580
    %2582 = vrot.lane.b32.xlu0 %v2447, 8
    %v2583 = vpop.permute.xlu0 %2582
    %2584 = vrot.lane.b32.xlu0 %v2450, 8
    %v2585 = vpop.permute.xlu0 %2584
    %2586 = vrot.lane.b32.xlu0 %v2452, 8
    %v2587 = vpop.permute.xlu0 %2586
    %2588 = vrot.lane.b32.xlu0 %v2455, 8
    %v2589 = vpop.permute.xlu0 %2588
    %2590 = vrot.lane.b32.xlu0 %v2457, 8
    %v2591 = vpop.permute.xlu0 %2590
    %2592 = vrot.lane.b32.xlu0 %v2460, 8
    %v2593 = vpop.permute.xlu0 %2592
    %2594 = vrot.lane.b32.xlu0 %v2462, 8
    %v2595 = vpop.permute.xlu0 %2594
    %2596 = vrot.lane.b32.xlu0 %v2465, 8
    %v2597 = vpop.permute.xlu0 %2596
    %2598 = vrot.lane.b32.xlu0 %v2467, 8
    %v2599 = vpop.permute.xlu0 %2598
    %2600 = vrot.lane.b32.xlu0 %v2470, 8
    %v2601 = vpop.permute.xlu0 %2600
    %2602 = vrot.lane.b32.xlu0 %v2472, 8
    %v2603 = vpop.permute.xlu0 %2602
    %2604 = vrot.lane.b32.xlu0 %v2475, 8
    %v2605 = vpop.permute.xlu0 %2604
    %2606 = vrot.lane.b32.xlu0 %v2477, 8
    %v2607 = vpop.permute.xlu0 %2606
    %2608 = vrot.lane.b32.xlu0 %v2480, 8
    %v2609 = vpop.permute.xlu0 %2608
    %2610 = vrot.lane.b32.xlu0 %v2482, 8
    %v2611 = vpop.permute.xlu0 %2610
    %2612 = vrot.lane.b32.xlu0 %v2485, 8
    %v2613 = vpop.permute.xlu0 %2612
    %2614 = vrot.lane.b32.xlu0 %v2487, 8
    %v2615 = vpop.permute.xlu0 %2614
    %vm2680 = vcmask 1045504
    %v2681 = vrot.slane %v2123, 2
    %v2682 = vrot.slane %v2124, 2
    %v2683 = vsel %vm2680, %v2681, %v2682
    %v2684 = vrot.slane %v2125, 2
    %v2685 = vsel %vm2680, %v2682, %v2684
    %v2686 = vrot.slane %v2126, 2
    %v2687 = vrot.slane %v2127, 2
    %v2688 = vsel %vm2680, %v2686, %v2687
    %v2689 = vrot.slane %v2128, 2
    %v2690 = vsel %vm2680, %v2687, %v2689
    %v2691 = vrot.slane %v2129, 2
    %v2692 = vrot.slane %v2130, 2
    %v2693 = vsel %vm2680, %v2691, %v2692
    %v2694 = vrot.slane %v2131, 2
    %v2695 = vsel %vm2680, %v2692, %v2694
    %v2696 = vrot.slane %v2132, 2
    %v2697 = vrot.slane %v2133, 2
    %v2698 = vsel %vm2680, %v2696, %v2697
    %v2699 = vrot.slane %v2134, 2
    %v2700 = vsel %vm2680, %v2697, %v2699
    %v2701 = vrot.slane %v2135, 2
    %v2702 = vrot.slane %v2136, 2
    %v2703 = vsel %vm2680, %v2701, %v2702
    %v2704 = vrot.slane %v2137, 2
    %v2705 = vsel %vm2680, %v2702, %v2704
    %v2706 = vrot.slane %v2138, 2
    %v2707 = vrot.slane %v2139, 2
    %v2708 = vsel %vm2680, %v2706, %v2707
    %v2709 = vrot.slane %v2140, 2
    %v2710 = vsel %vm2680, %v2707, %v2709
    %v2711 = vrot.slane %v2141, 2
    %v2712 = vrot.slane %v2142, 2
    %v2713 = vsel %vm2680, %v2711, %v2712
    %v2714 = vrot.slane %v2143, 2
    %v2715 = vsel %vm2680, %v2712, %v2714
    %v2716 = vrot.slane %v2144, 2
    %v2717 = vrot.slane %v2145, 2
    %v2718 = vsel %vm2680, %v2716, %v2717
    %v2719 = vrot.slane %v2146, 2
    %v2720 = vsel %vm2680, %v2717, %v2719
    %v2721 = vrot.slane %v2147, 2
    %v2722 = vrot.slane %v2148, 2
    %v2723 = vsel %vm2680, %v2721, %v2722
    %v2724 = vrot.slane %v2149, 2
    %v2725 = vsel %vm2680, %v2722, %v2724
    %v2726 = vrot.slane %v2150, 2
    %v2727 = vrot.slane %v2151, 2
    %v2728 = vsel %vm2680, %v2726, %v2727
    %v2729 = vrot.slane %v2152, 2
    %v2730 = vsel %vm2680, %v2727, %v2729
    %v2731 = vrot.slane %v2153, 2
    %v2732 = vrot.slane %v2154, 2
    %v2733 = vsel %vm2680, %v2731, %v2732
    %v2734 = vrot.slane %v2155, 2
    %v2735 = vsel %vm2680, %v2732, %v2734
    %v2736 = vrot.slane %v2156, 2
    %v2737 = vrot.slane %v2157, 2
    %v2738 = vsel %vm2680, %v2736, %v2737
    %v2739 = vrot.slane %v2158, 2
    %v2740 = vsel %vm2680, %v2737, %v2739
    %v2741 = vrot.slane %v2159, 2
    %v2742 = vrot.slane %v2160, 2
    %v2743 = vsel %vm2680, %v2741, %v2742
    %v2744 = vrot.slane %v2161, 2
    %v2745 = vsel %vm2680, %v2742, %v2744
    %v2746 = vrot.slane %v2162, 2
    %v2747 = vrot.slane %v2163, 2
    %v2748 = vsel %vm2680, %v2746, %v2747
    %v2749 = vrot.slane %v2164, 2
    %v2750 = vsel %vm2680, %v2747, %v2749
    %v2751 = vrot.slane %v2165, 2
    %v2752 = vrot.slane %v2166, 2
    %v2753 = vsel %vm2680, %v2751, %v2752
    %v2754 = vrot.slane %v2167, 2
    %v2755 = vsel %vm2680, %v2752, %v2754
    %v2756 = vrot.slane %v2168, 2
    %v2757 = vrot.slane %v2169, 2
    %v2758 = vsel %vm2680, %v2756, %v2757
    %v2759 = vrot.slane %v2170, 2
    %v2760 = vsel %vm2680, %v2757, %v2759
    %v2761 = vrot.slane %v2177, 2
    %v2762 = vrot.slane %v2178, 2
    %v2763 = vsel %vm2680, %v2761, %v2762
    %v2764 = vrot.slane %v2179, 2
    %v2765 = vsel %vm2680, %v2762, %v2764
    %v2766 = vrot.slane %v2180, 2
    %v2767 = vrot.slane %v2181, 2
    %v2768 = vsel %vm2680, %v2766, %v2767
    %v2769 = vrot.slane %v2182, 2
    %v2770 = vsel %vm2680, %v2767, %v2769
    %v2771 = vrot.slane %v2183, 2
    %v2772 = vrot.slane %v2184, 2
    %v2773 = vsel %vm2680, %v2771, %v2772
    %v2774 = vrot.slane %v2185, 2
    %v2775 = vsel %vm2680, %v2772, %v2774
    %v2776 = vrot.slane %v2186, 2
    %v2777 = vrot.slane %v2187, 2
    %v2778 = vsel %vm2680, %v2776, %v2777
    %v2779 = vrot.slane %v2188, 2
    %v2780 = vsel %vm2680, %v2777, %v2779
    %v2781 = vrot.slane %v2189, 2
    %v2782 = vrot.slane %v2190, 2
    %v2783 = vsel %vm2680, %v2781, %v2782
    %v2784 = vrot.slane %v2191, 2
    %v2785 = vsel %vm2680, %v2782, %v2784
    %v2786 = vrot.slane %v2192, 2
    %v2787 = vrot.slane %v2193, 2
    %v2788 = vsel %vm2680, %v2786, %v2787
    %v2789 = vrot.slane %v2194, 2
    %v2790 = vsel %vm2680, %v2787, %v2789
    %v2791 = vrot.slane %v2195, 2
    %v2792 = vrot.slane %v2196, 2
    %v2793 = vsel %vm2680, %v2791, %v2792
    %v2794 = vrot.slane %v2197, 2
    %v2795 = vsel %vm2680, %v2792, %v2794
    %v2796 = vrot.slane %v2198, 2
    %v2797 = vrot.slane %v2199, 2
    %v2798 = vsel %vm2680, %v2796, %v2797
    %v2799 = vrot.slane %v2200, 2
    %v2800 = vsel %vm2680, %v2797, %v2799
    %v2801 = vrot.slane %v2201, 2
    %v2802 = vrot.slane %v2202, 2
    %v2803 = vsel %vm2680, %v2801, %v2802
    %v2804 = vrot.slane %v2203, 2
    %v2805 = vsel %vm2680, %v2802, %v2804
    %v2806 = vrot.slane %v2204, 2
    %v2807 = vrot.slane %v2205, 2
    %v2808 = vsel %vm2680, %v2806, %v2807
    %v2809 = vrot.slane %v2206, 2
    %v2810 = vsel %vm2680, %v2807, %v2809
    %v2811 = vrot.slane %v2207, 2
    %v2812 = vrot.slane %v2208, 2
    %v2813 = vsel %vm2680, %v2811, %v2812
    %v2814 = vrot.slane %v2209, 2
    %v2815 = vsel %vm2680, %v2812, %v2814
    %v2816 = vrot.slane %v2210, 2
    %v2817 = vrot.slane %v2211, 2
    %v2818 = vsel %vm2680, %v2816, %v2817
    %v2819 = vrot.slane %v2212, 2
    %v2820 = vsel %vm2680, %v2817, %v2819
    %v2821 = vrot.slane %v2213, 2
    %v2822 = vrot.slane %v2214, 2
    %v2823 = vsel %vm2680, %v2821, %v2822
    %v2824 = vrot.slane %v2215, 2
    %v2825 = vsel %vm2680, %v2822, %v2824
    %v2826 = vrot.slane %v2216, 2
    %v2827 = vrot.slane %v2217, 2
    %v2828 = vsel %vm2680, %v2826, %v2827
    %v2829 = vrot.slane %v2218, 2
    %v2830 = vsel %vm2680, %v2827, %v2829
    %v2831 = vrot.slane %v2219, 2
    %v2832 = vrot.slane %v2220, 2
    %v2833 = vsel %vm2680, %v2831, %v2832
    %v2834 = vrot.slane %v2221, 2
    %v2835 = vsel %vm2680, %v2832, %v2834
    %v2836 = vrot.slane %v2222, 2
    %v2837 = vrot.slane %v2223, 2
    %v2838 = vsel %vm2680, %v2836, %v2837
    %v2839 = vrot.slane %v2224, 2
    %v2840 = vsel %vm2680, %v2837, %v2839
    %2841 = vrot.lane.b32.xlu0 %v2683, 16
    %v2842 = vpop.permute.xlu0 %2841
    %2843 = vrot.lane.b32.xlu0 %v2685, 16
    %v2844 = vpop.permute.xlu0 %2843
    %2845 = vrot.lane.b32.xlu0 %v2688, 16
    %v2846 = vpop.permute.xlu0 %2845
    %2847 = vrot.lane.b32.xlu0 %v2690, 16
    %v2848 = vpop.permute.xlu0 %2847
    %2849 = vrot.lane.b32.xlu0 %v2693, 16
    %v2850 = vpop.permute.xlu0 %2849
    %2851 = vrot.lane.b32.xlu0 %v2695, 16
    %v2852 = vpop.permute.xlu0 %2851
    %2853 = vrot.lane.b32.xlu0 %v2698, 16
    %v2854 = vpop.permute.xlu0 %2853
    %2855 = vrot.lane.b32.xlu0 %v2700, 16
    %v2856 = vpop.permute.xlu0 %2855
    %2857 = vrot.lane.b32.xlu0 %v2703, 16
    %v2858 = vpop.permute.xlu0 %2857
    %2859 = vrot.lane.b32.xlu0 %v2705, 16
    %v2860 = vpop.permute.xlu0 %2859
    %2861 = vrot.lane.b32.xlu0 %v2708, 16
    %v2862 = vpop.permute.xlu0 %2861
    %2863 = vrot.lane.b32.xlu0 %v2710, 16
    %v2864 = vpop.permute.xlu0 %2863
    %2865 = vrot.lane.b32.xlu0 %v2713, 16
    %v2866 = vpop.permute.xlu0 %2865
    %2867 = vrot.lane.b32.xlu0 %v2715, 16
    %v2868 = vpop.permute.xlu0 %2867
    %2869 = vrot.lane.b32.xlu0 %v2718, 16
    %v2870 = vpop.permute.xlu0 %2869
    %2871 = vrot.lane.b32.xlu0 %v2720, 16
    %v2872 = vpop.permute.xlu0 %2871
    %2873 = vrot.lane.b32.xlu0 %v2723, 16
    %v2874 = vpop.permute.xlu0 %2873
    %2875 = vrot.lane.b32.xlu0 %v2725, 16
    %v2876 = vpop.permute.xlu0 %2875
    %2877 = vrot.lane.b32.xlu0 %v2728, 16
    %v2878 = vpop.permute.xlu0 %2877
    %2879 = vrot.lane.b32.xlu0 %v2730, 16
    %v2880 = vpop.permute.xlu0 %2879
    %2881 = vrot.lane.b32.xlu0 %v2733, 16
    %v2882 = vpop.permute.xlu0 %2881
    %2883 = vrot.lane.b32.xlu0 %v2735, 16
    %v2884 = vpop.permute.xlu0 %2883
    %2885 = vrot.lane.b32.xlu0 %v2738, 16
    %v2886 = vpop.permute.xlu0 %2885
    %2887 = vrot.lane.b32.xlu0 %v2740, 16
    %v2888 = vpop.permute.xlu0 %2887
    %2889 = vrot.lane.b32.xlu0 %v2743, 16
    %v2890 = vpop.permute.xlu0 %2889
    %2891 = vrot.lane.b32.xlu0 %v2745, 16
    %v2892 = vpop.permute.xlu0 %2891
    %2893 = vrot.lane.b32.xlu0 %v2748, 16
    %v2894 = vpop.permute.xlu0 %2893
    %2895 = vrot.lane.b32.xlu0 %v2750, 16
    %v2896 = vpop.permute.xlu0 %2895
    %2897 = vrot.lane.b32.xlu0 %v2753, 16
    %v2898 = vpop.permute.xlu0 %2897
    %2899 = vrot.lane.b32.xlu0 %v2755, 16
    %v2900 = vpop.permute.xlu0 %2899
    %2901 = vrot.lane.b32.xlu0 %v2758, 16
    %v2902 = vpop.permute.xlu0 %2901
    %2903 = vrot.lane.b32.xlu0 %v2760, 16
    %v2904 = vpop.permute.xlu0 %2903
    %2905 = vrot.lane.b32.xlu0 %v2763, 16
    %v2906 = vpop.permute.xlu0 %2905
    %2907 = vrot.lane.b32.xlu0 %v2765, 16
    %v2908 = vpop.permute.xlu0 %2907
    %2909 = vrot.lane.b32.xlu0 %v2768, 16
    %v2910 = vpop.permute.xlu0 %2909
    %2911 = vrot.lane.b32.xlu0 %v2770, 16
    %v2912 = vpop.permute.xlu0 %2911
    %2913 = vrot.lane.b32.xlu0 %v2773, 16
    %v2914 = vpop.permute.xlu0 %2913
    %2915 = vrot.lane.b32.xlu0 %v2775, 16
    %v2916 = vpop.permute.xlu0 %2915
    %2917 = vrot.lane.b32.xlu0 %v2778, 16
    %v2918 = vpop.permute.xlu0 %2917
    %2919 = vrot.lane.b32.xlu0 %v2780, 16
    %v2920 = vpop.permute.xlu0 %2919
    %2921 = vrot.lane.b32.xlu0 %v2783, 16
    %v2922 = vpop.permute.xlu0 %2921
    %2923 = vrot.lane.b32.xlu0 %v2785, 16
    %v2924 = vpop.permute.xlu0 %2923
    %2925 = vrot.lane.b32.xlu0 %v2788, 16
    %v2926 = vpop.permute.xlu0 %2925
    %2927 = vrot.lane.b32.xlu0 %v2790, 16
    %v2928 = vpop.permute.xlu0 %2927
    %2929 = vrot.lane.b32.xlu0 %v2793, 16
    %v2930 = vpop.permute.xlu0 %2929
    %2931 = vrot.lane.b32.xlu0 %v2795, 16
    %v2932 = vpop.permute.xlu0 %2931
    %2933 = vrot.lane.b32.xlu0 %v2798, 16
    %v2934 = vpop.permute.xlu0 %2933
    %2935 = vrot.lane.b32.xlu0 %v2800, 16
    %v2936 = vpop.permute.xlu0 %2935
    %2937 = vrot.lane.b32.xlu0 %v2803, 16
    %v2938 = vpop.permute.xlu0 %2937
    %2939 = vrot.lane.b32.xlu0 %v2805, 16
    %v2940 = vpop.permute.xlu0 %2939
    %2941 = vrot.lane.b32.xlu0 %v2808, 16
    %v2942 = vpop.permute.xlu0 %2941
    %2943 = vrot.lane.b32.xlu0 %v2810, 16
    %v2944 = vpop.permute.xlu0 %2943
    %2945 = vrot.lane.b32.xlu0 %v2813, 16
    %v2946 = vpop.permute.xlu0 %2945
    %2947 = vrot.lane.b32.xlu0 %v2815, 16
    %v2948 = vpop.permute.xlu0 %2947
    %2949 = vrot.lane.b32.xlu0 %v2818, 16
    %v2950 = vpop.permute.xlu0 %2949
    %2951 = vrot.lane.b32.xlu0 %v2820, 16
    %v2952 = vpop.permute.xlu0 %2951
    %2953 = vrot.lane.b32.xlu0 %v2823, 16
    %v2954 = vpop.permute.xlu0 %2953
    %2955 = vrot.lane.b32.xlu0 %v2825, 16
    %v2956 = vpop.permute.xlu0 %2955
    %2957 = vrot.lane.b32.xlu0 %v2828, 16
    %v2958 = vpop.permute.xlu0 %2957
    %2959 = vrot.lane.b32.xlu0 %v2830, 16
    %v2960 = vpop.permute.xlu0 %2959
    %2961 = vrot.lane.b32.xlu0 %v2833, 16
    %v2962 = vpop.permute.xlu0 %2961
    %2963 = vrot.lane.b32.xlu0 %v2835, 16
    %v2964 = vpop.permute.xlu0 %2963
    %2965 = vrot.lane.b32.xlu0 %v2838, 16
    %v2966 = vpop.permute.xlu0 %2965
    %2967 = vrot.lane.b32.xlu0 %v2840, 16
    %v2968 = vpop.permute.xlu0 %2967
    %3037 = vrot.lane.b32.xlu0 %v2126, 24
    %v3038 = vpop.permute.xlu0 %3037
    %3039 = vrot.lane.b32.xlu0 %v2127, 24
    %v3040 = vpop.permute.xlu0 %3039
    %3041 = vrot.lane.b32.xlu0 %v2129, 24
    %v3042 = vpop.permute.xlu0 %3041
    %3043 = vrot.lane.b32.xlu0 %v2130, 24
    %v3044 = vpop.permute.xlu0 %3043
    %3045 = vrot.lane.b32.xlu0 %v2132, 24
    %v3046 = vpop.permute.xlu0 %3045
    %3047 = vrot.lane.b32.xlu0 %v2133, 24
    %v3048 = vpop.permute.xlu0 %3047
    %3049 = vrot.lane.b32.xlu0 %v2135, 24
    %v3050 = vpop.permute.xlu0 %3049
    %3051 = vrot.lane.b32.xlu0 %v2136, 24
    %v3052 = vpop.permute.xlu0 %3051
    %3053 = vrot.lane.b32.xlu0 %v2138, 24
    %v3054 = vpop.permute.xlu0 %3053
    %3055 = vrot.lane.b32.xlu0 %v2139, 24
    %v3056 = vpop.permute.xlu0 %3055
    %3057 = vrot.lane.b32.xlu0 %v2141, 24
    %v3058 = vpop.permute.xlu0 %3057
    %3059 = vrot.lane.b32.xlu0 %v2142, 24
    %v3060 = vpop.permute.xlu0 %3059
    %3061 = vrot.lane.b32.xlu0 %v2144, 24
    %v3062 = vpop.permute.xlu0 %3061
    %3063 = vrot.lane.b32.xlu0 %v2145, 24
    %v3064 = vpop.permute.xlu0 %3063
    %3065 = vrot.lane.b32.xlu0 %v2147, 24
    %v3066 = vpop.permute.xlu0 %3065
    %3067 = vrot.lane.b32.xlu0 %v2148, 24
    %v3068 = vpop.permute.xlu0 %3067
    %3069 = vrot.lane.b32.xlu0 %v2150, 24
    %v3070 = vpop.permute.xlu0 %3069
    %3071 = vrot.lane.b32.xlu0 %v2151, 24
    %v3072 = vpop.permute.xlu0 %3071
    %3073 = vrot.lane.b32.xlu0 %v2153, 24
    %v3074 = vpop.permute.xlu0 %3073
    %3075 = vrot.lane.b32.xlu0 %v2154, 24
    %v3076 = vpop.permute.xlu0 %3075
    %3077 = vrot.lane.b32.xlu0 %v2156, 24
    %v3078 = vpop.permute.xlu0 %3077
    %3079 = vrot.lane.b32.xlu0 %v2157, 24
    %v3080 = vpop.permute.xlu0 %3079
    %3081 = vrot.lane.b32.xlu0 %v2159, 24
    %v3082 = vpop.permute.xlu0 %3081
    %3083 = vrot.lane.b32.xlu0 %v2160, 24
    %v3084 = vpop.permute.xlu0 %3083
    %3085 = vrot.lane.b32.xlu0 %v2162, 24
    %v3086 = vpop.permute.xlu0 %3085
    %3087 = vrot.lane.b32.xlu0 %v2163, 24
    %v3088 = vpop.permute.xlu0 %3087
    %3089 = vrot.lane.b32.xlu0 %v2165, 24
    %v3090 = vpop.permute.xlu0 %3089
    %3091 = vrot.lane.b32.xlu0 %v2166, 24
    %v3092 = vpop.permute.xlu0 %3091
    %3093 = vrot.lane.b32.xlu0 %v2168, 24
    %v3094 = vpop.permute.xlu0 %3093
    %3095 = vrot.lane.b32.xlu0 %v2169, 24
    %v3096 = vpop.permute.xlu0 %3095
    %3097 = vrot.lane.b32.xlu0 %v2171, 24
    %v3098 = vpop.permute.xlu0 %3097
    %3099 = vrot.lane.b32.xlu0 %v2172, 24
    %v3100 = vpop.permute.xlu0 %3099
    %3101 = vrot.lane.b32.xlu0 %v2180, 24
    %v3102 = vpop.permute.xlu0 %3101
    %3103 = vrot.lane.b32.xlu0 %v2181, 24
    %v3104 = vpop.permute.xlu0 %3103
    %3105 = vrot.lane.b32.xlu0 %v2183, 24
    %v3106 = vpop.permute.xlu0 %3105
    %3107 = vrot.lane.b32.xlu0 %v2184, 24
    %v3108 = vpop.permute.xlu0 %3107
    %3109 = vrot.lane.b32.xlu0 %v2186, 24
    %v3110 = vpop.permute.xlu0 %3109
    %3111 = vrot.lane.b32.xlu0 %v2187, 24
    %v3112 = vpop.permute.xlu0 %3111
    %3113 = vrot.lane.b32.xlu0 %v2189, 24
    %v3114 = vpop.permute.xlu0 %3113
    %3115 = vrot.lane.b32.xlu0 %v2190, 24
    %v3116 = vpop.permute.xlu0 %3115
    %3117 = vrot.lane.b32.xlu0 %v2192, 24
    %v3118 = vpop.permute.xlu0 %3117
    %3119 = vrot.lane.b32.xlu0 %v2193, 24
    %v3120 = vpop.permute.xlu0 %3119
    %3121 = vrot.lane.b32.xlu0 %v2195, 24
    %v3122 = vpop.permute.xlu0 %3121
    %3123 = vrot.lane.b32.xlu0 %v2196, 24
    %v3124 = vpop.permute.xlu0 %3123
    %3125 = vrot.lane.b32.xlu0 %v2198, 24
    %v3126 = vpop.permute.xlu0 %3125
    %3127 = vrot.lane.b32.xlu0 %v2199, 24
    %v3128 = vpop.permute.xlu0 %3127
    %3129 = vrot.lane.b32.xlu0 %v2201, 24
    %v3130 = vpop.permute.xlu0 %3129
    %3131 = vrot.lane.b32.xlu0 %v2202, 24
    %v3132 = vpop.permute.xlu0 %3131
    %3133 = vrot.lane.b32.xlu0 %v2204, 24
    %v3134 = vpop.permute.xlu0 %3133
    %3135 = vrot.lane.b32.xlu0 %v2205, 24
    %v3136 = vpop.permute.xlu0 %3135
    %3137 = vrot.lane.b32.xlu0 %v2207, 24
    %v3138 = vpop.permute.xlu0 %3137
    %3139 = vrot.lane.b32.xlu0 %v2208, 24
    %v3140 = vpop.permute.xlu0 %3139
    %3141 = vrot.lane.b32.xlu0 %v2210, 24
    %v3142 = vpop.permute.xlu0 %3141
    %3143 = vrot.lane.b32.xlu0 %v2211, 24
    %v3144 = vpop.permute.xlu0 %3143
    %3145 = vrot.lane.b32.xlu0 %v2213, 24
    %v3146 = vpop.permute.xlu0 %3145
    %3147 = vrot.lane.b32.xlu0 %v2214, 24
    %v3148 = vpop.permute.xlu0 %3147
    %3149 = vrot.lane.b32.xlu0 %v2216, 24
    %v3150 = vpop.permute.xlu0 %3149
    %3151 = vrot.lane.b32.xlu0 %v2217, 24
    %v3152 = vpop.permute.xlu0 %3151
    %3153 = vrot.lane.b32.xlu0 %v2219, 24
    %v3154 = vpop.permute.xlu0 %3153
    %3155 = vrot.lane.b32.xlu0 %v2220, 24
    %v3156 = vpop.permute.xlu0 %3155
    %3157 = vrot.lane.b32.xlu0 %v2222, 24
    %v3158 = vpop.permute.xlu0 %3157
    %3159 = vrot.lane.b32.xlu0 %v2223, 24
    %v3160 = vpop.permute.xlu0 %3159
    %3161 = vrot.lane.b32.xlu0 %v2225, 24
    %v3162 = vpop.permute.xlu0 %3161
    %3163 = vrot.lane.b32.xlu0 %v2226, 24
    %v3164 = vpop.permute.xlu0 %3163
    %v3231 = vrot.slane %v2171, 1
    %v3232 = vrot.slane %v2172, 1
    %v3233 = vsel %vm2327, %v3231, %v3232
    %v3234 = vrot.slane %v2173, 1
    %v3235 = vsel %vm2327, %v3232, %v3234
    %v3236 = vrot.slane %v2225, 1
    %v3237 = vrot.slane %v2226, 1
    %v3238 = vsel %vm2327, %v3236, %v3237
    %v3239 = vrot.slane %v2227, 1
    %v3240 = vsel %vm2327, %v3237, %v3239
    %3241 = vrot.lane.b32.xlu0 %v2335, 32
    %v3242 = vpop.permute.xlu0 %3241
    %3243 = vrot.lane.b32.xlu0 %v2337, 32
    %v3244 = vpop.permute.xlu0 %3243
    %3245 = vrot.lane.b32.xlu0 %v2340, 32
    %v3246 = vpop.permute.xlu0 %3245
    %3247 = vrot.lane.b32.xlu0 %v2342, 32
    %v3248 = vpop.permute.xlu0 %3247
    %3249 = vrot.lane.b32.xlu0 %v2345, 32
    %v3250 = vpop.permute.xlu0 %3249
    %3251 = vrot.lane.b32.xlu0 %v2347, 32
    %v3252 = vpop.permute.xlu0 %3251
    %3253 = vrot.lane.b32.xlu0 %v2350, 32
    %v3254 = vpop.permute.xlu0 %3253
    %3255 = vrot.lane.b32.xlu0 %v2352, 32
    %v3256 = vpop.permute.xlu0 %3255
    %3257 = vrot.lane.b32.xlu0 %v2355, 32
    %v3258 = vpop.permute.xlu0 %3257
    %3259 = vrot.lane.b32.xlu0 %v2357, 32
    %v3260 = vpop.permute.xlu0 %3259
    %3261 = vrot.lane.b32.xlu0 %v2360, 32
    %v3262 = vpop.permute.xlu0 %3261
    %3263 = vrot.lane.b32.xlu0 %v2362, 32
    %v3264 = vpop.permute.xlu0 %3263
    %3265 = vrot.lane.b32.xlu0 %v2365, 32
    %v3266 = vpop.permute.xlu0 %3265
    %3267 = vrot.lane.b32.xlu0 %v2367, 32
    %v3268 = vpop.permute.xlu0 %3267
    %3269 = vrot.lane.b32.xlu0 %v2370, 32
    %v3270 = vpop.permute.xlu0 %3269
    %3271 = vrot.lane.b32.xlu0 %v2372, 32
    %v3272 = vpop.permute.xlu0 %3271
    %3273 = vrot.lane.b32.xlu0 %v2375, 32
    %v3274 = vpop.permute.xlu0 %3273
    %3275 = vrot.lane.b32.xlu0 %v2377, 32
    %v3276 = vpop.permute.xlu0 %3275
    %3277 = vrot.lane.b32.xlu0 %v2380, 32
    %v3278 = vpop.permute.xlu0 %3277
    %3279 = vrot.lane.b32.xlu0 %v2382, 32
    %v3280 = vpop.permute.xlu0 %3279
    %3281 = vrot.lane.b32.xlu0 %v2385, 32
    %v3282 = vpop.permute.xlu0 %3281
    %3283 = vrot.lane.b32.xlu0 %v2387, 32
    %v3284 = vpop.permute.xlu0 %3283
    %3285 = vrot.lane.b32.xlu0 %v2390, 32
    %v3286 = vpop.permute.xlu0 %3285
    %3287 = vrot.lane.b32.xlu0 %v2392, 32
    %v3288 = vpop.permute.xlu0 %3287
    %3289 = vrot.lane.b32.xlu0 %v2395, 32
    %v3290 = vpop.permute.xlu0 %3289
    %3291 = vrot.lane.b32.xlu0 %v2397, 32
    %v3292 = vpop.permute.xlu0 %3291
    %3293 = vrot.lane.b32.xlu0 %v2400, 32
    %v3294 = vpop.permute.xlu0 %3293
    %3295 = vrot.lane.b32.xlu0 %v2402, 32
    %v3296 = vpop.permute.xlu0 %3295
    %3297 = vrot.lane.b32.xlu0 %v2405, 32
    %v3298 = vpop.permute.xlu0 %3297
    %3299 = vrot.lane.b32.xlu0 %v2407, 32
    %v3300 = vpop.permute.xlu0 %3299
    %3301 = vrot.lane.b32.xlu0 %v3233, 32
    %v3302 = vpop.permute.xlu0 %3301
    %3303 = vrot.lane.b32.xlu0 %v3235, 32
    %v3304 = vpop.permute.xlu0 %3303
    %3305 = vrot.lane.b32.xlu0 %v2415, 32
    %v3306 = vpop.permute.xlu0 %3305
    %3307 = vrot.lane.b32.xlu0 %v2417, 32
    %v3308 = vpop.permute.xlu0 %3307
    %3309 = vrot.lane.b32.xlu0 %v2420, 32
    %v3310 = vpop.permute.xlu0 %3309
    %3311 = vrot.lane.b32.xlu0 %v2422, 32
    %v3312 = vpop.permute.xlu0 %3311
    %3313 = vrot.lane.b32.xlu0 %v2425, 32
    %v3314 = vpop.permute.xlu0 %3313
    %3315 = vrot.lane.b32.xlu0 %v2427, 32
    %v3316 = vpop.permute.xlu0 %3315
    %3317 = vrot.lane.b32.xlu0 %v2430, 32
    %v3318 = vpop.permute.xlu0 %3317
    %3319 = vrot.lane.b32.xlu0 %v2432, 32
    %v3320 = vpop.permute.xlu0 %3319
    %3321 = vrot.lane.b32.xlu0 %v2435, 32
    %v3322 = vpop.permute.xlu0 %3321
    %3323 = vrot.lane.b32.xlu0 %v2437, 32
    %v3324 = vpop.permute.xlu0 %3323
    %3325 = vrot.lane.b32.xlu0 %v2440, 32
    %v3326 = vpop.permute.xlu0 %3325
    %3327 = vrot.lane.b32.xlu0 %v2442, 32
    %v3328 = vpop.permute.xlu0 %3327
    %3329 = vrot.lane.b32.xlu0 %v2445, 32
    %v3330 = vpop.permute.xlu0 %3329
    %3331 = vrot.lane.b32.xlu0 %v2447, 32
    %v3332 = vpop.permute.xlu0 %3331
    %3333 = vrot.lane.b32.xlu0 %v2450, 32
    %v3334 = vpop.permute.xlu0 %3333
    %3335 = vrot.lane.b32.xlu0 %v2452, 32
    %v3336 = vpop.permute.xlu0 %3335
    %3337 = vrot.lane.b32.xlu0 %v2455, 32
    %v3338 = vpop.permute.xlu0 %3337
    %3339 = vrot.lane.b32.xlu0 %v2457, 32
    %v3340 = vpop.permute.xlu0 %3339
    %3341 = vrot.lane.b32.xlu0 %v2460, 32
    %v3342 = vpop.permute.xlu0 %3341
    %3343 = vrot.lane.b32.xlu0 %v2462, 32
    %v3344 = vpop.permute.xlu0 %3343
    %3345 = vrot.lane.b32.xlu0 %v2465, 32
    %v3346 = vpop.permute.xlu0 %3345
    %3347 = vrot.lane.b32.xlu0 %v2467, 32
    %v3348 = vpop.permute.xlu0 %3347
    %3349 = vrot.lane.b32.xlu0 %v2470, 32
    %v3350 = vpop.permute.xlu0 %3349
    %3351 = vrot.lane.b32.xlu0 %v2472, 32
    %v3352 = vpop.permute.xlu0 %3351
    %3353 = vrot.lane.b32.xlu0 %v2475, 32
    %v3354 = vpop.permute.xlu0 %3353
    %3355 = vrot.lane.b32.xlu0 %v2477, 32
    %v3356 = vpop.permute.xlu0 %3355
    %3357 = vrot.lane.b32.xlu0 %v2480, 32
    %v3358 = vpop.permute.xlu0 %3357
    %3359 = vrot.lane.b32.xlu0 %v2482, 32
    %v3360 = vpop.permute.xlu0 %3359
    %3361 = vrot.lane.b32.xlu0 %v2485, 32
    %v3362 = vpop.permute.xlu0 %3361
    %3363 = vrot.lane.b32.xlu0 %v2487, 32
    %v3364 = vpop.permute.xlu0 %3363
    %3365 = vrot.lane.b32.xlu0 %v3238, 32
    %v3366 = vpop.permute.xlu0 %3365
    %3367 = vrot.lane.b32.xlu0 %v3240, 32
    %v3368 = vpop.permute.xlu0 %3367
    %v3433 = vrot.slane %v2171, 2
    %v3434 = vrot.slane %v2172, 2
    %v3435 = vsel %vm2680, %v3433, %v3434
    %v3436 = vrot.slane %v2173, 2
    %v3437 = vsel %vm2680, %v3434, %v3436
    %v3438 = vrot.slane %v2225, 2
    %v3439 = vrot.slane %v2226, 2
    %v3440 = vsel %vm2680, %v3438, %v3439
    %v3441 = vrot.slane %v2227, 2
    %v3442 = vsel %vm2680, %v3439, %v3441
    %3443 = vrot.lane.b32.xlu0 %v2688, 40
    %v3444 = vpop.permute.xlu0 %3443
    %3445 = vrot.lane.b32.xlu0 %v2690, 40
    %v3446 = vpop.permute.xlu0 %3445
    %3447 = vrot.lane.b32.xlu0 %v2693, 40
    %v3448 = vpop.permute.xlu0 %3447
    %3449 = vrot.lane.b32.xlu0 %v2695, 40
    %v3450 = vpop.permute.xlu0 %3449
    %3451 = vrot.lane.b32.xlu0 %v2698, 40
    %v3452 = vpop.permute.xlu0 %3451
    %3453 = vrot.lane.b32.xlu0 %v2700, 40
    %v3454 = vpop.permute.xlu0 %3453
    %3455 = vrot.lane.b32.xlu0 %v2703, 40
    %v3456 = vpop.permute.xlu0 %3455
    %3457 = vrot.lane.b32.xlu0 %v2705, 40
    %v3458 = vpop.permute.xlu0 %3457
    %3459 = vrot.lane.b32.xlu0 %v2708, 40
    %v3460 = vpop.permute.xlu0 %3459
    %3461 = vrot.lane.b32.xlu0 %v2710, 40
    %v3462 = vpop.permute.xlu0 %3461
    %3463 = vrot.lane.b32.xlu0 %v2713, 40
    %v3464 = vpop.permute.xlu0 %3463
    %3465 = vrot.lane.b32.xlu0 %v2715, 40
    %v3466 = vpop.permute.xlu0 %3465
    %3467 = vrot.lane.b32.xlu0 %v2718, 40
    %v3468 = vpop.permute.xlu0 %3467
    %3469 = vrot.lane.b32.xlu0 %v2720, 40
    %v3470 = vpop.permute.xlu0 %3469
    %3471 = vrot.lane.b32.xlu0 %v2723, 40
    %v3472 = vpop.permute.xlu0 %3471
    %3473 = vrot.lane.b32.xlu0 %v2725, 40
    %v3474 = vpop.permute.xlu0 %3473
    %3475 = vrot.lane.b32.xlu0 %v2728, 40
    %v3476 = vpop.permute.xlu0 %3475
    %3477 = vrot.lane.b32.xlu0 %v2730, 40
    %v3478 = vpop.permute.xlu0 %3477
    %3479 = vrot.lane.b32.xlu0 %v2733, 40
    %v3480 = vpop.permute.xlu0 %3479
    %3481 = vrot.lane.b32.xlu0 %v2735, 40
    %v3482 = vpop.permute.xlu0 %3481
    %3483 = vrot.lane.b32.xlu0 %v2738, 40
    %v3484 = vpop.permute.xlu0 %3483
    %3485 = vrot.lane.b32.xlu0 %v2740, 40
    %v3486 = vpop.permute.xlu0 %3485
    %3487 = vrot.lane.b32.xlu0 %v2743, 40
    %v3488 = vpop.permute.xlu0 %3487
    %3489 = vrot.lane.b32.xlu0 %v2745, 40
    %v3490 = vpop.permute.xlu0 %3489
    %3491 = vrot.lane.b32.xlu0 %v2748, 40
    %v3492 = vpop.permute.xlu0 %3491
    %3493 = vrot.lane.b32.xlu0 %v2750, 40
    %v3494 = vpop.permute.xlu0 %3493
    %3495 = vrot.lane.b32.xlu0 %v2753, 40
    %v3496 = vpop.permute.xlu0 %3495
    %3497 = vrot.lane.b32.xlu0 %v2755, 40
    %v3498 = vpop.permute.xlu0 %3497
    %3499 = vrot.lane.b32.xlu0 %v2758, 40
    %v3500 = vpop.permute.xlu0 %3499
    %3501 = vrot.lane.b32.xlu0 %v2760, 40
    %v3502 = vpop.permute.xlu0 %3501
    %3503 = vrot.lane.b32.xlu0 %v3435, 40
    %v3504 = vpop.permute.xlu0 %3503
    %3505 = vrot.lane.b32.xlu0 %v3437, 40
    %v3506 = vpop.permute.xlu0 %3505
    %3507 = vrot.lane.b32.xlu0 %v2768, 40
    %v3508 = vpop.permute.xlu0 %3507
    %3509 = vrot.lane.b32.xlu0 %v2770, 40
    %v3510 = vpop.permute.xlu0 %3509
    %3511 = vrot.lane.b32.xlu0 %v2773, 40
    %v3512 = vpop.permute.xlu0 %3511
    %3513 = vrot.lane.b32.xlu0 %v2775, 40
    %v3514 = vpop.permute.xlu0 %3513
    %3515 = vrot.lane.b32.xlu0 %v2778, 40
    %v3516 = vpop.permute.xlu0 %3515
    %3517 = vrot.lane.b32.xlu0 %v2780, 40
    %v3518 = vpop.permute.xlu0 %3517
    %3519 = vrot.lane.b32.xlu0 %v2783, 40
    %v3520 = vpop.permute.xlu0 %3519
    %3521 = vrot.lane.b32.xlu0 %v2785, 40
    %v3522 = vpop.permute.xlu0 %3521
    %3523 = vrot.lane.b32.xlu0 %v2788, 40
    %v3524 = vpop.permute.xlu0 %3523
    %3525 = vrot.lane.b32.xlu0 %v2790, 40
    %v3526 = vpop.permute.xlu0 %3525
    %3527 = vrot.lane.b32.xlu0 %v2793, 40
    %v3528 = vpop.permute.xlu0 %3527
    %3529 = vrot.lane.b32.xlu0 %v2795, 40
    %v3530 = vpop.permute.xlu0 %3529
    %3531 = vrot.lane.b32.xlu0 %v2798, 40
    %v3532 = vpop.permute.xlu0 %3531
    %3533 = vrot.lane.b32.xlu0 %v2800, 40
    %v3534 = vpop.permute.xlu0 %3533
    %3535 = vrot.lane.b32.xlu0 %v2803, 40
    %v3536 = vpop.permute.xlu0 %3535
    %3537 = vrot.lane.b32.xlu0 %v2805, 40
    %v3538 = vpop.permute.xlu0 %3537
    %3539 = vrot.lane.b32.xlu0 %v2808, 40
    %v3540 = vpop.permute.xlu0 %3539
    %3541 = vrot.lane.b32.xlu0 %v2810, 40
    %v3542 = vpop.permute.xlu0 %3541
    %3543 = vrot.lane.b32.xlu0 %v2813, 40
    %v3544 = vpop.permute.xlu0 %3543
    %3545 = vrot.lane.b32.xlu0 %v2815, 40
    %v3546 = vpop.permute.xlu0 %3545
    %3547 = vrot.lane.b32.xlu0 %v2818, 40
    %v3548 = vpop.permute.xlu0 %3547
    %3549 = vrot.lane.b32.xlu0 %v2820, 40
    %v3550 = vpop.permute.xlu0 %3549
    %3551 = vrot.lane.b32.xlu0 %v2823, 40
    %v3552 = vpop.permute.xlu0 %3551
    %3553 = vrot.lane.b32.xlu0 %v2825, 40
    %v3554 = vpop.permute.xlu0 %3553
    %3555 = vrot.lane.b32.xlu0 %v2828, 40
    %v3556 = vpop.permute.xlu0 %3555
    %3557 = vrot.lane.b32.xlu0 %v2830, 40
    %v3558 = vpop.permute.xlu0 %3557
    %3559 = vrot.lane.b32.xlu0 %v2833, 40
    %v3560 = vpop.permute.xlu0 %3559
    %3561 = vrot.lane.b32.xlu0 %v2835, 40
    %v3562 = vpop.permute.xlu0 %3561
    %3563 = vrot.lane.b32.xlu0 %v2838, 40
    %v3564 = vpop.permute.xlu0 %3563
    %3565 = vrot.lane.b32.xlu0 %v2840, 40
    %v3566 = vpop.permute.xlu0 %3565
    %3567 = vrot.lane.b32.xlu0 %v3440, 40
    %v3568 = vpop.permute.xlu0 %3567
    %3569 = vrot.lane.b32.xlu0 %v3442, 40
    %v3570 = vpop.permute.xlu0 %3569
    %3639 = vrot.lane.b32.xlu0 %v2129, 48
    %v3640 = vpop.permute.xlu0 %3639
    %3641 = vrot.lane.b32.xlu0 %v2130, 48
    %v3642 = vpop.permute.xlu0 %3641
    %3643 = vrot.lane.b32.xlu0 %v2132, 48
    %v3644 = vpop.permute.xlu0 %3643
    %3645 = vrot.lane.b32.xlu0 %v2133, 48
    %v3646 = vpop.permute.xlu0 %3645
    %3647 = vrot.lane.b32.xlu0 %v2135, 48
    %v3648 = vpop.permute.xlu0 %3647
    %3649 = vrot.lane.b32.xlu0 %v2136, 48
    %v3650 = vpop.permute.xlu0 %3649
    %3651 = vrot.lane.b32.xlu0 %v2138, 48
    %v3652 = vpop.permute.xlu0 %3651
    %3653 = vrot.lane.b32.xlu0 %v2139, 48
    %v3654 = vpop.permute.xlu0 %3653
    %3655 = vrot.lane.b32.xlu0 %v2141, 48
    %v3656 = vpop.permute.xlu0 %3655
    %3657 = vrot.lane.b32.xlu0 %v2142, 48
    %v3658 = vpop.permute.xlu0 %3657
    %3659 = vrot.lane.b32.xlu0 %v2144, 48
    %v3660 = vpop.permute.xlu0 %3659
    %3661 = vrot.lane.b32.xlu0 %v2145, 48
    %v3662 = vpop.permute.xlu0 %3661
    %3663 = vrot.lane.b32.xlu0 %v2147, 48
    %v3664 = vpop.permute.xlu0 %3663
    %3665 = vrot.lane.b32.xlu0 %v2148, 48
    %v3666 = vpop.permute.xlu0 %3665
    %3667 = vrot.lane.b32.xlu0 %v2150, 48
    %v3668 = vpop.permute.xlu0 %3667
    %3669 = vrot.lane.b32.xlu0 %v2151, 48
    %v3670 = vpop.permute.xlu0 %3669
    %3671 = vrot.lane.b32.xlu0 %v2153, 48
    %v3672 = vpop.permute.xlu0 %3671
    %3673 = vrot.lane.b32.xlu0 %v2154, 48
    %v3674 = vpop.permute.xlu0 %3673
    %3675 = vrot.lane.b32.xlu0 %v2156, 48
    %v3676 = vpop.permute.xlu0 %3675
    %3677 = vrot.lane.b32.xlu0 %v2157, 48
    %v3678 = vpop.permute.xlu0 %3677
    %3679 = vrot.lane.b32.xlu0 %v2159, 48
    %v3680 = vpop.permute.xlu0 %3679
    %3681 = vrot.lane.b32.xlu0 %v2160, 48
    %v3682 = vpop.permute.xlu0 %3681
    %3683 = vrot.lane.b32.xlu0 %v2162, 48
    %v3684 = vpop.permute.xlu0 %3683
    %3685 = vrot.lane.b32.xlu0 %v2163, 48
    %v3686 = vpop.permute.xlu0 %3685
    %3687 = vrot.lane.b32.xlu0 %v2165, 48
    %v3688 = vpop.permute.xlu0 %3687
    %3689 = vrot.lane.b32.xlu0 %v2166, 48
    %v3690 = vpop.permute.xlu0 %3689
    %3691 = vrot.lane.b32.xlu0 %v2168, 48
    %v3692 = vpop.permute.xlu0 %3691
    %3693 = vrot.lane.b32.xlu0 %v2169, 48
    %v3694 = vpop.permute.xlu0 %3693
    %3695 = vrot.lane.b32.xlu0 %v2171, 48
    %v3696 = vpop.permute.xlu0 %3695
    %3697 = vrot.lane.b32.xlu0 %v2172, 48
    %v3698 = vpop.permute.xlu0 %3697
    %3699 = vrot.lane.b32.xlu0 %v2174, 48
    %v3700 = vpop.permute.xlu0 %3699
    %3701 = vrot.lane.b32.xlu0 %v2175, 48
    %v3702 = vpop.permute.xlu0 %3701
    %3703 = vrot.lane.b32.xlu0 %v2183, 48
    %v3704 = vpop.permute.xlu0 %3703
    %3705 = vrot.lane.b32.xlu0 %v2184, 48
    %v3706 = vpop.permute.xlu0 %3705
    %3707 = vrot.lane.b32.xlu0 %v2186, 48
    %v3708 = vpop.permute.xlu0 %3707
    %3709 = vrot.lane.b32.xlu0 %v2187, 48
    %v3710 = vpop.permute.xlu0 %3709
    %3711 = vrot.lane.b32.xlu0 %v2189, 48
    %v3712 = vpop.permute.xlu0 %3711
    %3713 = vrot.lane.b32.xlu0 %v2190, 48
    %v3714 = vpop.permute.xlu0 %3713
    %3715 = vrot.lane.b32.xlu0 %v2192, 48
    %v3716 = vpop.permute.xlu0 %3715
    %3717 = vrot.lane.b32.xlu0 %v2193, 48
    %v3718 = vpop.permute.xlu0 %3717
    %3719 = vrot.lane.b32.xlu0 %v2195, 48
    %v3720 = vpop.permute.xlu0 %3719
    %3721 = vrot.lane.b32.xlu0 %v2196, 48
    %v3722 = vpop.permute.xlu0 %3721
    %3723 = vrot.lane.b32.xlu0 %v2198, 48
    %v3724 = vpop.permute.xlu0 %3723
    %3725 = vrot.lane.b32.xlu0 %v2199, 48
    %v3726 = vpop.permute.xlu0 %3725
    %3727 = vrot.lane.b32.xlu0 %v2201, 48
    %v3728 = vpop.permute.xlu0 %3727
    %3729 = vrot.lane.b32.xlu0 %v2202, 48
    %v3730 = vpop.permute.xlu0 %3729
    %3731 = vrot.lane.b32.xlu0 %v2204, 48
    %v3732 = vpop.permute.xlu0 %3731
    %3733 = vrot.lane.b32.xlu0 %v2205, 48
    %v3734 = vpop.permute.xlu0 %3733
    %3735 = vrot.lane.b32.xlu0 %v2207, 48
    %v3736 = vpop.permute.xlu0 %3735
    %3737 = vrot.lane.b32.xlu0 %v2208, 48
    %v3738 = vpop.permute.xlu0 %3737
    %3739 = vrot.lane.b32.xlu0 %v2210, 48
    %v3740 = vpop.permute.xlu0 %3739
    %3741 = vrot.lane.b32.xlu0 %v2211, 48
    %v3742 = vpop.permute.xlu0 %3741
    %3743 = vrot.lane.b32.xlu0 %v2213, 48
    %v3744 = vpop.permute.xlu0 %3743
    %3745 = vrot.lane.b32.xlu0 %v2214, 48
    %v3746 = vpop.permute.xlu0 %3745
    %3747 = vrot.lane.b32.xlu0 %v2216, 48
    %v3748 = vpop.permute.xlu0 %3747
    %3749 = vrot.lane.b32.xlu0 %v2217, 48
    %v3750 = vpop.permute.xlu0 %3749
    %3751 = vrot.lane.b32.xlu0 %v2219, 48
    %v3752 = vpop.permute.xlu0 %3751
    %3753 = vrot.lane.b32.xlu0 %v2220, 48
    %v3754 = vpop.permute.xlu0 %3753
    %3755 = vrot.lane.b32.xlu0 %v2222, 48
    %v3756 = vpop.permute.xlu0 %3755
    %3757 = vrot.lane.b32.xlu0 %v2223, 48
    %v3758 = vpop.permute.xlu0 %3757
    %3759 = vrot.lane.b32.xlu0 %v2225, 48
    %v3760 = vpop.permute.xlu0 %3759
    %3761 = vrot.lane.b32.xlu0 %v2226, 48
    %v3762 = vpop.permute.xlu0 %3761
    %3763 = vrot.lane.b32.xlu0 %v2228, 48
    %v3764 = vpop.permute.xlu0 %3763
    %3765 = vrot.lane.b32.xlu0 %v2229, 48
    %v3766 = vpop.permute.xlu0 %3765
    %v3833 = vrot.slane %v2174, 1
    %v3834 = vrot.slane %v2175, 1
    %v3835 = vsel %vm2327, %v3833, %v3834
    %v3836 = vrot.slane %v2176, 1
    %v3837 = vsel %vm2327, %v3834, %v3836
    %v3838 = vrot.slane %v2228, 1
    %v3839 = vrot.slane %v2229, 1
    %v3840 = vsel %vm2327, %v3838, %v3839
    %v3841 = vrot.slane %v2230, 1
    %v3842 = vsel %vm2327, %v3839, %v3841
    %3843 = vrot.lane.b32.xlu0 %v2340, 56
    %v3844 = vpop.permute.xlu0 %3843
    %3845 = vrot.lane.b32.xlu0 %v2342, 56
    %v3846 = vpop.permute.xlu0 %3845
    %3847 = vrot.lane.b32.xlu0 %v2345, 56
    %v3848 = vpop.permute.xlu0 %3847
    %3849 = vrot.lane.b32.xlu0 %v2347, 56
    %v3850 = vpop.permute.xlu0 %3849
    %3851 = vrot.lane.b32.xlu0 %v2350, 56
    %v3852 = vpop.permute.xlu0 %3851
    %3853 = vrot.lane.b32.xlu0 %v2352, 56
    %v3854 = vpop.permute.xlu0 %3853
    %3855 = vrot.lane.b32.xlu0 %v2355, 56
    %v3856 = vpop.permute.xlu0 %3855
    %3857 = vrot.lane.b32.xlu0 %v2357, 56
    %v3858 = vpop.permute.xlu0 %3857
    %3859 = vrot.lane.b32.xlu0 %v2360, 56
    %v3860 = vpop.permute.xlu0 %3859
    %3861 = vrot.lane.b32.xlu0 %v2362, 56
    %v3862 = vpop.permute.xlu0 %3861
    %3863 = vrot.lane.b32.xlu0 %v2365, 56
    %v3864 = vpop.permute.xlu0 %3863
    %3865 = vrot.lane.b32.xlu0 %v2367, 56
    %v3866 = vpop.permute.xlu0 %3865
    %3867 = vrot.lane.b32.xlu0 %v2370, 56
    %v3868 = vpop.permute.xlu0 %3867
    %3869 = vrot.lane.b32.xlu0 %v2372, 56
    %v3870 = vpop.permute.xlu0 %3869
    %3871 = vrot.lane.b32.xlu0 %v2375, 56
    %v3872 = vpop.permute.xlu0 %3871
    %3873 = vrot.lane.b32.xlu0 %v2377, 56
    %v3874 = vpop.permute.xlu0 %3873
    %3875 = vrot.lane.b32.xlu0 %v2380, 56
    %v3876 = vpop.permute.xlu0 %3875
    %3877 = vrot.lane.b32.xlu0 %v2382, 56
    %v3878 = vpop.permute.xlu0 %3877
    %3879 = vrot.lane.b32.xlu0 %v2385, 56
    %v3880 = vpop.permute.xlu0 %3879
    %3881 = vrot.lane.b32.xlu0 %v2387, 56
    %v3882 = vpop.permute.xlu0 %3881
    %3883 = vrot.lane.b32.xlu0 %v2390, 56
    %v3884 = vpop.permute.xlu0 %3883
    %3885 = vrot.lane.b32.xlu0 %v2392, 56
    %v3886 = vpop.permute.xlu0 %3885
    %3887 = vrot.lane.b32.xlu0 %v2395, 56
    %v3888 = vpop.permute.xlu0 %3887
    %3889 = vrot.lane.b32.xlu0 %v2397, 56
    %v3890 = vpop.permute.xlu0 %3889
    %3891 = vrot.lane.b32.xlu0 %v2400, 56
    %v3892 = vpop.permute.xlu0 %3891
    %3893 = vrot.lane.b32.xlu0 %v2402, 56
    %v3894 = vpop.permute.xlu0 %3893
    %3895 = vrot.lane.b32.xlu0 %v2405, 56
    %v3896 = vpop.permute.xlu0 %3895
    %3897 = vrot.lane.b32.xlu0 %v2407, 56
    %v3898 = vpop.permute.xlu0 %3897
    %3899 = vrot.lane.b32.xlu0 %v3233, 56
    %v3900 = vpop.permute.xlu0 %3899
    %3901 = vrot.lane.b32.xlu0 %v3235, 56
    %v3902 = vpop.permute.xlu0 %3901
    %3903 = vrot.lane.b32.xlu0 %v3835, 56
    %v3904 = vpop.permute.xlu0 %3903
    %3905 = vrot.lane.b32.xlu0 %v3837, 56
    %v3906 = vpop.permute.xlu0 %3905
    %3907 = vrot.lane.b32.xlu0 %v2420, 56
    %v3908 = vpop.permute.xlu0 %3907
    %3909 = vrot.lane.b32.xlu0 %v2422, 56
    %v3910 = vpop.permute.xlu0 %3909
    %3911 = vrot.lane.b32.xlu0 %v2425, 56
    %v3912 = vpop.permute.xlu0 %3911
    %3913 = vrot.lane.b32.xlu0 %v2427, 56
    %v3914 = vpop.permute.xlu0 %3913
    %3915 = vrot.lane.b32.xlu0 %v2430, 56
    %v3916 = vpop.permute.xlu0 %3915
    %3917 = vrot.lane.b32.xlu0 %v2432, 56
    %v3918 = vpop.permute.xlu0 %3917
    %3919 = vrot.lane.b32.xlu0 %v2435, 56
    %v3920 = vpop.permute.xlu0 %3919
    %3921 = vrot.lane.b32.xlu0 %v2437, 56
    %v3922 = vpop.permute.xlu0 %3921
    %3923 = vrot.lane.b32.xlu0 %v2440, 56
    %v3924 = vpop.permute.xlu0 %3923
    %3925 = vrot.lane.b32.xlu0 %v2442, 56
    %v3926 = vpop.permute.xlu0 %3925
    %3927 = vrot.lane.b32.xlu0 %v2445, 56
    %v3928 = vpop.permute.xlu0 %3927
    %3929 = vrot.lane.b32.xlu0 %v2447, 56
    %v3930 = vpop.permute.xlu0 %3929
    %3931 = vrot.lane.b32.xlu0 %v2450, 56
    %v3932 = vpop.permute.xlu0 %3931
    %3933 = vrot.lane.b32.xlu0 %v2452, 56
    %v3934 = vpop.permute.xlu0 %3933
    %3935 = vrot.lane.b32.xlu0 %v2455, 56
    %v3936 = vpop.permute.xlu0 %3935
    %3937 = vrot.lane.b32.xlu0 %v2457, 56
    %v3938 = vpop.permute.xlu0 %3937
    %3939 = vrot.lane.b32.xlu0 %v2460, 56
    %v3940 = vpop.permute.xlu0 %3939
    %3941 = vrot.lane.b32.xlu0 %v2462, 56
    %v3942 = vpop.permute.xlu0 %3941
    %3943 = vrot.lane.b32.xlu0 %v2465, 56
    %v3944 = vpop.permute.xlu0 %3943
    %3945 = vrot.lane.b32.xlu0 %v2467, 56
    %v3946 = vpop.permute.xlu0 %3945
    %3947 = vrot.lane.b32.xlu0 %v2470, 56
    %v3948 = vpop.permute.xlu0 %3947
    %3949 = vrot.lane.b32.xlu0 %v2472, 56
    %v3950 = vpop.permute.xlu0 %3949
    %3951 = vrot.lane.b32.xlu0 %v2475, 56
    %v3952 = vpop.permute.xlu0 %3951
    %3953 = vrot.lane.b32.xlu0 %v2477, 56
    %v3954 = vpop.permute.xlu0 %3953
    %3955 = vrot.lane.b32.xlu0 %v2480, 56
    %v3956 = vpop.permute.xlu0 %3955
    %3957 = vrot.lane.b32.xlu0 %v2482, 56
    %v3958 = vpop.permute.xlu0 %3957
    %3959 = vrot.lane.b32.xlu0 %v2485, 56
    %v3960 = vpop.permute.xlu0 %3959
    %3961 = vrot.lane.b32.xlu0 %v2487, 56
    %v3962 = vpop.permute.xlu0 %3961
    %3963 = vrot.lane.b32.xlu0 %v3238, 56
    %v3964 = vpop.permute.xlu0 %3963
    %3965 = vrot.lane.b32.xlu0 %v3240, 56
    %v3966 = vpop.permute.xlu0 %3965
    %3967 = vrot.lane.b32.xlu0 %v3840, 56
    %v3968 = vpop.permute.xlu0 %3967
    %3969 = vrot.lane.b32.xlu0 %v3842, 56
    %v3970 = vpop.permute.xlu0 %3969
    %v4035 = vrot.slane %v2174, 2
    %v4036 = vrot.slane %v2175, 2
    %v4037 = vsel %vm2680, %v4035, %v4036
    %v4038 = vrot.slane %v2176, 2
    %v4039 = vsel %vm2680, %v4036, %v4038
    %v4040 = vrot.slane %v2228, 2
    %v4041 = vrot.slane %v2229, 2
    %v4042 = vsel %vm2680, %v4040, %v4041
    %v4043 = vrot.slane %v2230, 2
    %v4044 = vsel %vm2680, %v4041, %v4043
    %4045 = vrot.lane.b32.xlu0 %v2693, 64
    %v4046 = vpop.permute.xlu0 %4045
    %4047 = vrot.lane.b32.xlu0 %v2695, 64
    %v4048 = vpop.permute.xlu0 %4047
    %4049 = vrot.lane.b32.xlu0 %v2698, 64
    %v4050 = vpop.permute.xlu0 %4049
    %4051 = vrot.lane.b32.xlu0 %v2700, 64
    %v4052 = vpop.permute.xlu0 %4051
    %4053 = vrot.lane.b32.xlu0 %v2703, 64
    %v4054 = vpop.permute.xlu0 %4053
    %4055 = vrot.lane.b32.xlu0 %v2705, 64
    %v4056 = vpop.permute.xlu0 %4055
    %4057 = vrot.lane.b32.xlu0 %v2708, 64
    %v4058 = vpop.permute.xlu0 %4057
    %4059 = vrot.lane.b32.xlu0 %v2710, 64
    %v4060 = vpop.permute.xlu0 %4059
    %4061 = vrot.lane.b32.xlu0 %v2713, 64
    %v4062 = vpop.permute.xlu0 %4061
    %4063 = vrot.lane.b32.xlu0 %v2715, 64
    %v4064 = vpop.permute.xlu0 %4063
    %4065 = vrot.lane.b32.xlu0 %v2718, 64
    %v4066 = vpop.permute.xlu0 %4065
    %4067 = vrot.lane.b32.xlu0 %v2720, 64
    %v4068 = vpop.permute.xlu0 %4067
    %4069 = vrot.lane.b32.xlu0 %v2723, 64
    %v4070 = vpop.permute.xlu0 %4069
    %4071 = vrot.lane.b32.xlu0 %v2725, 64
    %v4072 = vpop.permute.xlu0 %4071
    %4073 = vrot.lane.b32.xlu0 %v2728, 64
    %v4074 = vpop.permute.xlu0 %4073
    %4075 = vrot.lane.b32.xlu0 %v2730, 64
    %v4076 = vpop.permute.xlu0 %4075
    %4077 = vrot.lane.b32.xlu0 %v2733, 64
    %v4078 = vpop.permute.xlu0 %4077
    %4079 = vrot.lane.b32.xlu0 %v2735, 64
    %v4080 = vpop.permute.xlu0 %4079
    %4081 = vrot.lane.b32.xlu0 %v2738, 64
    %v4082 = vpop.permute.xlu0 %4081
    %4083 = vrot.lane.b32.xlu0 %v2740, 64
    %v4084 = vpop.permute.xlu0 %4083
    %4085 = vrot.lane.b32.xlu0 %v2743, 64
    %v4086 = vpop.permute.xlu0 %4085
    %4087 = vrot.lane.b32.xlu0 %v2745, 64
    %v4088 = vpop.permute.xlu0 %4087
    %4089 = vrot.lane.b32.xlu0 %v2748, 64
    %v4090 = vpop.permute.xlu0 %4089
    %4091 = vrot.lane.b32.xlu0 %v2750, 64
    %v4092 = vpop.permute.xlu0 %4091
    %4093 = vrot.lane.b32.xlu0 %v2753, 64
    %v4094 = vpop.permute.xlu0 %4093
    %4095 = vrot.lane.b32.xlu0 %v2755, 64
    %v4096 = vpop.permute.xlu0 %4095
    %4097 = vrot.lane.b32.xlu0 %v2758, 64
    %v4098 = vpop.permute.xlu0 %4097
    %4099 = vrot.lane.b32.xlu0 %v2760, 64
    %v4100 = vpop.permute.xlu0 %4099
    %4101 = vrot.lane.b32.xlu0 %v3435, 64
    %v4102 = vpop.permute.xlu0 %4101
    %4103 = vrot.lane.b32.xlu0 %v3437, 64
    %v4104 = vpop.permute.xlu0 %4103
    %4105 = vrot.lane.b32.xlu0 %v4037, 64
    %v4106 = vpop.permute.xlu0 %4105
    %4107 = vrot.lane.b32.xlu0 %v4039, 64
    %v4108 = vpop.permute.xlu0 %4107
    %4109 = vrot.lane.b32.xlu0 %v2773, 64
    %v4110 = vpop.permute.xlu0 %4109
    %4111 = vrot.lane.b32.xlu0 %v2775, 64
    %v4112 = vpop.permute.xlu0 %4111
    %4113 = vrot.lane.b32.xlu0 %v2778, 64
    %v4114 = vpop.permute.xlu0 %4113
    %4115 = vrot.lane.b32.xlu0 %v2780, 64
    %v4116 = vpop.permute.xlu0 %4115
    %4117 = vrot.lane.b32.xlu0 %v2783, 64
    %v4118 = vpop.permute.xlu0 %4117
    %4119 = vrot.lane.b32.xlu0 %v2785, 64
    %v4120 = vpop.permute.xlu0 %4119
    %4121 = vrot.lane.b32.xlu0 %v2788, 64
    %v4122 = vpop.permute.xlu0 %4121
    %4123 = vrot.lane.b32.xlu0 %v2790, 64
    %v4124 = vpop.permute.xlu0 %4123
    %4125 = vrot.lane.b32.xlu0 %v2793, 64
    %v4126 = vpop.permute.xlu0 %4125
    %4127 = vrot.lane.b32.xlu0 %v2795, 64
    %v4128 = vpop.permute.xlu0 %4127
    %4129 = vrot.lane.b32.xlu0 %v2798, 64
    %v4130 = vpop.permute.xlu0 %4129
    %4131 = vrot.lane.b32.xlu0 %v2800, 64
    %v4132 = vpop.permute.xlu0 %4131
    %4133 = vrot.lane.b32.xlu0 %v2803, 64
    %v4134 = vpop.permute.xlu0 %4133
    %4135 = vrot.lane.b32.xlu0 %v2805, 64
    %v4136 = vpop.permute.xlu0 %4135
    %4137 = vrot.lane.b32.xlu0 %v2808, 64
    %v4138 = vpop.permute.xlu0 %4137
    %4139 = vrot.lane.b32.xlu0 %v2810, 64
    %v4140 = vpop.permute.xlu0 %4139
    %4141 = vrot.lane.b32.xlu0 %v2813, 64
    %v4142 = vpop.permute.xlu0 %4141
    %4143 = vrot.lane.b32.xlu0 %v2815, 64
    %v4144 = vpop.permute.xlu0 %4143
    %4145 = vrot.lane.b32.xlu0 %v2818, 64
    %v4146 = vpop.permute.xlu0 %4145
    %4147 = vrot.lane.b32.xlu0 %v2820, 64
    %v4148 = vpop.permute.xlu0 %4147
    %4149 = vrot.lane.b32.xlu0 %v2823, 64
    %v4150 = vpop.permute.xlu0 %4149
    %4151 = vrot.lane.b32.xlu0 %v2825, 64
    %v4152 = vpop.permute.xlu0 %4151
    %4153 = vrot.lane.b32.xlu0 %v2828, 64
    %v4154 = vpop.permute.xlu0 %4153
    %4155 = vrot.lane.b32.xlu0 %v2830, 64
    %v4156 = vpop.permute.xlu0 %4155
    %4157 = vrot.lane.b32.xlu0 %v2833, 64
    %v4158 = vpop.permute.xlu0 %4157
    %4159 = vrot.lane.b32.xlu0 %v2835, 64
    %v4160 = vpop.permute.xlu0 %4159
    %4161 = vrot.lane.b32.xlu0 %v2838, 64
    %v4162 = vpop.permute.xlu0 %4161
    %4163 = vrot.lane.b32.xlu0 %v2840, 64
    %v4164 = vpop.permute.xlu0 %4163
    %4165 = vrot.lane.b32.xlu0 %v3440, 64
    %v4166 = vpop.permute.xlu0 %4165
    %4167 = vrot.lane.b32.xlu0 %v3442, 64
    %v4168 = vpop.permute.xlu0 %4167
    %4169 = vrot.lane.b32.xlu0 %v4042, 64
    %v4170 = vpop.permute.xlu0 %4169
    %4171 = vrot.lane.b32.xlu0 %v4044, 64
    %v4172 = vpop.permute.xlu0 %4171
    %v4237 = vsel %vm1416, %v2123, %v2489
    %v4238 = vsel %vm1416, %v2124, %v2491
    %v4239 = vsel %vm1416, %v2126, %v2493
    %v4240 = vsel %vm1416, %v2127, %v2495
    %v4241 = vsel %vm1416, %v2129, %v2497
    %v4242 = vsel %vm1416, %v2130, %v2499
    %v4243 = vsel %vm1416, %v2132, %v2501
    %v4244 = vsel %vm1416, %v2133, %v2503
    %v4245 = vsel %vm1416, %v2135, %v2505
    %v4246 = vsel %vm1416, %v2136, %v2507
    %v4247 = vsel %vm1416, %v2138, %v2509
    %v4248 = vsel %vm1416, %v2139, %v2511
    %v4249 = vsel %vm1416, %v2141, %v2513
    %v4250 = vsel %vm1416, %v2142, %v2515
    %v4251 = vsel %vm1416, %v2144, %v2517
    %v4252 = vsel %vm1416, %v2145, %v2519
    %v4253 = vsel %vm1416, %v2147, %v2521
    %v4254 = vsel %vm1416, %v2148, %v2523
    %v4255 = vsel %vm1416, %v2150, %v2525
    %v4256 = vsel %vm1416, %v2151, %v2527
    %v4257 = vsel %vm1416, %v2153, %v2529
    %v4258 = vsel %vm1416, %v2154, %v2531
    %v4259 = vsel %vm1416, %v2156, %v2533
    %v4260 = vsel %vm1416, %v2157, %v2535
    %v4261 = vsel %vm1416, %v2159, %v2537
    %v4262 = vsel %vm1416, %v2160, %v2539
    %v4263 = vsel %vm1416, %v2162, %v2541
    %v4264 = vsel %vm1416, %v2163, %v2543
    %v4265 = vsel %vm1416, %v2165, %v2545
    %v4266 = vsel %vm1416, %v2166, %v2547
    %v4267 = vsel %vm1416, %v2168, %v2549
    %v4268 = vsel %vm1416, %v2169, %v2551
    %v4269 = vsel %vm1416, %v2177, %v2553
    %v4270 = vsel %vm1416, %v2178, %v2555
    %v4271 = vsel %vm1416, %v2180, %v2557
    %v4272 = vsel %vm1416, %v2181, %v2559
    %v4273 = vsel %vm1416, %v2183, %v2561
    %v4274 = vsel %vm1416, %v2184, %v2563
    %v4275 = vsel %vm1416, %v2186, %v2565
    %v4276 = vsel %vm1416, %v2187, %v2567
    %v4277 = vsel %vm1416, %v2189, %v2569
    %v4278 = vsel %vm1416, %v2190, %v2571
    %v4279 = vsel %vm1416, %v2192, %v2573
    %v4280 = vsel %vm1416, %v2193, %v2575
    %v4281 = vsel %vm1416, %v2195, %v2577
    %v4282 = vsel %vm1416, %v2196, %v2579
    %v4283 = vsel %vm1416, %v2198, %v2581
    %v4284 = vsel %vm1416, %v2199, %v2583
    %v4285 = vsel %vm1416, %v2201, %v2585
    %v4286 = vsel %vm1416, %v2202, %v2587
    %v4287 = vsel %vm1416, %v2204, %v2589
    %v4288 = vsel %vm1416, %v2205, %v2591
    %v4289 = vsel %vm1416, %v2207, %v2593
    %v4290 = vsel %vm1416, %v2208, %v2595
    %v4291 = vsel %vm1416, %v2210, %v2597
    %v4292 = vsel %vm1416, %v2211, %v2599
    %v4293 = vsel %vm1416, %v2213, %v2601
    %v4294 = vsel %vm1416, %v2214, %v2603
    %v4295 = vsel %vm1416, %v2216, %v2605
    %v4296 = vsel %vm1416, %v2217, %v2607
    %v4297 = vsel %vm1416, %v2219, %v2609
    %v4298 = vsel %vm1416, %v2220, %v2611
    %v4299 = vsel %vm1416, %v2222, %v2613
    %v4300 = vsel %vm1416, %v2223, %v2615
    %vm4301 = vcmask 130048
    %v4302 = vsel %vm4301, %v4237, %v2842
    %v4303 = vsel %vm4301, %v4238, %v2844
    %v4304 = vsel %vm4301, %v4239, %v2846
    %v4305 = vsel %vm4301, %v4240, %v2848
    %v4306 = vsel %vm4301, %v4241, %v2850
    %v4307 = vsel %vm4301, %v4242, %v2852
    %v4308 = vsel %vm4301, %v4243, %v2854
    %v4309 = vsel %vm4301, %v4244, %v2856
    %v4310 = vsel %vm4301, %v4245, %v2858
    %v4311 = vsel %vm4301, %v4246, %v2860
    %v4312 = vsel %vm4301, %v4247, %v2862
    %v4313 = vsel %vm4301, %v4248, %v2864
    %v4314 = vsel %vm4301, %v4249, %v2866
    %v4315 = vsel %vm4301, %v4250, %v2868
    %v4316 = vsel %vm4301, %v4251, %v2870
    %v4317 = vsel %vm4301, %v4252, %v2872
    %v4318 = vsel %vm4301, %v4253, %v2874
    %v4319 = vsel %vm4301, %v4254, %v2876
    %v4320 = vsel %vm4301, %v4255, %v2878
    %v4321 = vsel %vm4301, %v4256, %v2880
    %v4322 = vsel %vm4301, %v4257, %v2882
    %v4323 = vsel %vm4301, %v4258, %v2884
    %v4324 = vsel %vm4301, %v4259, %v2886
    %v4325 = vsel %vm4301, %v4260, %v2888
    %v4326 = vsel %vm4301, %v4261, %v2890
    %v4327 = vsel %vm4301, %v4262, %v2892
    %v4328 = vsel %vm4301, %v4263, %v2894
    %v4329 = vsel %vm4301, %v4264, %v2896
    %v4330 = vsel %vm4301, %v4265, %v2898
    %v4331 = vsel %vm4301, %v4266, %v2900
    %v4332 = vsel %vm4301, %v4267, %v2902
    %v4333 = vsel %vm4301, %v4268, %v2904
    %v4334 = vsel %vm4301, %v4269, %v2906
    %v4335 = vsel %vm4301, %v4270, %v2908
    %v4336 = vsel %vm4301, %v4271, %v2910
    %v4337 = vsel %vm4301, %v4272, %v2912
    %v4338 = vsel %vm4301, %v4273, %v2914
    %v4339 = vsel %vm4301, %v4274, %v2916
    %v4340 = vsel %vm4301, %v4275, %v2918
    %v4341 = vsel %vm4301, %v4276, %v2920
    %v4342 = vsel %vm4301, %v4277, %v2922
    %v4343 = vsel %vm4301, %v4278, %v2924
    %v4344 = vsel %vm4301, %v4279, %v2926
    %v4345 = vsel %vm4301, %v4280, %v2928
    %v4346 = vsel %vm4301, %v4281, %v2930
    %v4347 = vsel %vm4301, %v4282, %v2932
    %v4348 = vsel %vm4301, %v4283, %v2934
    %v4349 = vsel %vm4301, %v4284, %v2936
    %v4350 = vsel %vm4301, %v4285, %v2938
    %v4351 = vsel %vm4301, %v4286, %v2940
    %v4352 = vsel %vm4301, %v4287, %v2942
    %v4353 = vsel %vm4301, %v4288, %v2944
    %v4354 = vsel %vm4301, %v4289, %v2946
    %v4355 = vsel %vm4301, %v4290, %v2948
    %v4356 = vsel %vm4301, %v4291, %v2950
    %v4357 = vsel %vm4301, %v4292, %v2952
    %v4358 = vsel %vm4301, %v4293, %v2954
    %v4359 = vsel %vm4301, %v4294, %v2956
    %v4360 = vsel %vm4301, %v4295, %v2958
    %v4361 = vsel %vm4301, %v4296, %v2960
    %v4362 = vsel %vm4301, %v4297, %v2962
    %v4363 = vsel %vm4301, %v4298, %v2964
    %v4364 = vsel %vm4301, %v4299, %v2966
    %v4365 = vsel %vm4301, %v4300, %v2968
    %vm4366 = vcmask 195584
    %v4367 = vsel %vm4366, %v4302, %v3038
    %v4368 = vsel %vm4366, %v4303, %v3040
    %v4369 = vsel %vm4366, %v4304, %v3042
    %v4370 = vsel %vm4366, %v4305, %v3044
    %v4371 = vsel %vm4366, %v4306, %v3046
    %v4372 = vsel %vm4366, %v4307, %v3048
    %v4373 = vsel %vm4366, %v4308, %v3050
    %v4374 = vsel %vm4366, %v4309, %v3052
    %v4375 = vsel %vm4366, %v4310, %v3054
    %v4376 = vsel %vm4366, %v4311, %v3056
    %v4377 = vsel %vm4366, %v4312, %v3058
    %v4378 = vsel %vm4366, %v4313, %v3060
    %v4379 = vsel %vm4366, %v4314, %v3062
    %v4380 = vsel %vm4366, %v4315, %v3064
    %v4381 = vsel %vm4366, %v4316, %v3066
    %v4382 = vsel %vm4366, %v4317, %v3068
    %v4383 = vsel %vm4366, %v4318, %v3070
    %v4384 = vsel %vm4366, %v4319, %v3072
    %v4385 = vsel %vm4366, %v4320, %v3074
    %v4386 = vsel %vm4366, %v4321, %v3076
    %v4387 = vsel %vm4366, %v4322, %v3078
    %v4388 = vsel %vm4366, %v4323, %v3080
    %v4389 = vsel %vm4366, %v4324, %v3082
    %v4390 = vsel %vm4366, %v4325, %v3084
    %v4391 = vsel %vm4366, %v4326, %v3086
    %v4392 = vsel %vm4366, %v4327, %v3088
    %v4393 = vsel %vm4366, %v4328, %v3090
    %v4394 = vsel %vm4366, %v4329, %v3092
    %v4395 = vsel %vm4366, %v4330, %v3094
    %v4396 = vsel %vm4366, %v4331, %v3096
    %v4397 = vsel %vm4366, %v4332, %v3098
    %v4398 = vsel %vm4366, %v4333, %v3100
    %v4399 = vsel %vm4366, %v4334, %v3102
    %v4400 = vsel %vm4366, %v4335, %v3104
    %v4401 = vsel %vm4366, %v4336, %v3106
    %v4402 = vsel %vm4366, %v4337, %v3108
    %v4403 = vsel %vm4366, %v4338, %v3110
    %v4404 = vsel %vm4366, %v4339, %v3112
    %v4405 = vsel %vm4366, %v4340, %v3114
    %v4406 = vsel %vm4366, %v4341, %v3116
    %v4407 = vsel %vm4366, %v4342, %v3118
    %v4408 = vsel %vm4366, %v4343, %v3120
    %v4409 = vsel %vm4366, %v4344, %v3122
    %v4410 = vsel %vm4366, %v4345, %v3124
    %v4411 = vsel %vm4366, %v4346, %v3126
    %v4412 = vsel %vm4366, %v4347, %v3128
    %v4413 = vsel %vm4366, %v4348, %v3130
    %v4414 = vsel %vm4366, %v4349, %v3132
    %v4415 = vsel %vm4366, %v4350, %v3134
    %v4416 = vsel %vm4366, %v4351, %v3136
    %v4417 = vsel %vm4366, %v4352, %v3138
    %v4418 = vsel %vm4366, %v4353, %v3140
    %v4419 = vsel %vm4366, %v4354, %v3142
    %v4420 = vsel %vm4366, %v4355, %v3144
    %v4421 = vsel %vm4366, %v4356, %v3146
    %v4422 = vsel %vm4366, %v4357, %v3148
    %v4423 = vsel %vm4366, %v4358, %v3150
    %v4424 = vsel %vm4366, %v4359, %v3152
    %v4425 = vsel %vm4366, %v4360, %v3154
    %v4426 = vsel %vm4366, %v4361, %v3156
    %v4427 = vsel %vm4366, %v4362, %v3158
    %v4428 = vsel %vm4366, %v4363, %v3160
    %v4429 = vsel %vm4366, %v4364, %v3162
    %v4430 = vsel %vm4366, %v4365, %v3164
    %vm4431 = vcmask 261120
    %v4432 = vsel %vm4431, %v4367, %v3242
    %v4433 = vsel %vm4431, %v4368, %v3244
    %v4434 = vsel %vm4431, %v4369, %v3246
    %v4435 = vsel %vm4431, %v4370, %v3248
    %v4436 = vsel %vm4431, %v4371, %v3250
    %v4437 = vsel %vm4431, %v4372, %v3252
    %v4438 = vsel %vm4431, %v4373, %v3254
    %v4439 = vsel %vm4431, %v4374, %v3256
    %v4440 = vsel %vm4431, %v4375, %v3258
    %v4441 = vsel %vm4431, %v4376, %v3260
    %v4442 = vsel %vm4431, %v4377, %v3262
    %v4443 = vsel %vm4431, %v4378, %v3264
    %v4444 = vsel %vm4431, %v4379, %v3266
    %v4445 = vsel %vm4431, %v4380, %v3268
    %v4446 = vsel %vm4431, %v4381, %v3270
    %v4447 = vsel %vm4431, %v4382, %v3272
    %v4448 = vsel %vm4431, %v4383, %v3274
    %v4449 = vsel %vm4431, %v4384, %v3276
    %v4450 = vsel %vm4431, %v4385, %v3278
    %v4451 = vsel %vm4431, %v4386, %v3280
    %v4452 = vsel %vm4431, %v4387, %v3282
    %v4453 = vsel %vm4431, %v4388, %v3284
    %v4454 = vsel %vm4431, %v4389, %v3286
    %v4455 = vsel %vm4431, %v4390, %v3288
    %v4456 = vsel %vm4431, %v4391, %v3290
    %v4457 = vsel %vm4431, %v4392, %v3292
    %v4458 = vsel %vm4431, %v4393, %v3294
    %v4459 = vsel %vm4431, %v4394, %v3296
    %v4460 = vsel %vm4431, %v4395, %v3298
    %v4461 = vsel %vm4431, %v4396, %v3300
    %v4462 = vsel %vm4431, %v4397, %v3302
    %v4463 = vsel %vm4431, %v4398, %v3304
    %v4464 = vsel %vm4431, %v4399, %v3306
    %v4465 = vsel %vm4431, %v4400, %v3308
    %v4466 = vsel %vm4431, %v4401, %v3310
    %v4467 = vsel %vm4431, %v4402, %v3312
    %v4468 = vsel %vm4431, %v4403, %v3314
    %v4469 = vsel %vm4431, %v4404, %v3316
    %v4470 = vsel %vm4431, %v4405, %v3318
    %v4471 = vsel %vm4431, %v4406, %v3320
    %v4472 = vsel %vm4431, %v4407, %v3322
    %v4473 = vsel %vm4431, %v4408, %v3324
    %v4474 = vsel %vm4431, %v4409, %v3326
    %v4475 = vsel %vm4431, %v4410, %v3328
    %v4476 = vsel %vm4431, %v4411, %v3330
    %v4477 = vsel %vm4431, %v4412, %v3332
    %v4478 = vsel %vm4431, %v4413, %v3334
    %v4479 = vsel %vm4431, %v4414, %v3336
    %v4480 = vsel %vm4431, %v4415, %v3338
    %v4481 = vsel %vm4431, %v4416, %v3340
    %v4482 = vsel %vm4431, %v4417, %v3342
    %v4483 = vsel %vm4431, %v4418, %v3344
    %v4484 = vsel %vm4431, %v4419, %v3346
    %v4485 = vsel %vm4431, %v4420, %v3348
    %v4486 = vsel %vm4431, %v4421, %v3350
    %v4487 = vsel %vm4431, %v4422, %v3352
    %v4488 = vsel %vm4431, %v4423, %v3354
    %v4489 = vsel %vm4431, %v4424, %v3356
    %v4490 = vsel %vm4431, %v4425, %v3358
    %v4491 = vsel %vm4431, %v4426, %v3360
    %v4492 = vsel %vm4431, %v4427, %v3362
    %v4493 = vsel %vm4431, %v4428, %v3364
    %v4494 = vsel %vm4431, %v4429, %v3366
    %v4495 = vsel %vm4431, %v4430, %v3368
    %vm4496 = vcmask 326656
    %v4497 = vsel %vm4496, %v4432, %v3444
    %v4498 = vsel %vm4496, %v4433, %v3446
    %v4499 = vsel %vm4496, %v4434, %v3448
    %v4500 = vsel %vm4496, %v4435, %v3450
    %v4501 = vsel %vm4496, %v4436, %v3452
    %v4502 = vsel %vm4496, %v4437, %v3454
    %v4503 = vsel %vm4496, %v4438, %v3456
    %v4504 = vsel %vm4496, %v4439, %v3458
    %v4505 = vsel %vm4496, %v4440, %v3460
    %v4506 = vsel %vm4496, %v4441, %v3462
    %v4507 = vsel %vm4496, %v4442, %v3464
    %v4508 = vsel %vm4496, %v4443, %v3466
    %v4509 = vsel %vm4496, %v4444, %v3468
    %v4510 = vsel %vm4496, %v4445, %v3470
    %v4511 = vsel %vm4496, %v4446, %v3472
    %v4512 = vsel %vm4496, %v4447, %v3474
    %v4513 = vsel %vm4496, %v4448, %v3476
    %v4514 = vsel %vm4496, %v4449, %v3478
    %v4515 = vsel %vm4496, %v4450, %v3480
    %v4516 = vsel %vm4496, %v4451, %v3482
    %v4517 = vsel %vm4496, %v4452, %v3484
    %v4518 = vsel %vm4496, %v4453, %v3486
    %v4519 = vsel %vm4496, %v4454, %v3488
    %v4520 = vsel %vm4496, %v4455, %v3490
    %v4521 = vsel %vm4496, %v4456, %v3492
    %v4522 = vsel %vm4496, %v4457, %v3494
    %v4523 = vsel %vm4496, %v4458, %v3496
    %v4524 = vsel %vm4496, %v4459, %v3498
    %v4525 = vsel %vm4496, %v4460, %v3500
    %v4526 = vsel %vm4496, %v4461, %v3502
    %v4527 = vsel %vm4496, %v4462, %v3504
    %v4528 = vsel %vm4496, %v4463, %v3506
    %v4529 = vsel %vm4496, %v4464, %v3508
    %v4530 = vsel %vm4496, %v4465, %v3510
    %v4531 = vsel %vm4496, %v4466, %v3512
    %v4532 = vsel %vm4496, %v4467, %v3514
    %v4533 = vsel %vm4496, %v4468, %v3516
    %v4534 = vsel %vm4496, %v4469, %v3518
    %v4535 = vsel %vm4496, %v4470, %v3520
    %v4536 = vsel %vm4496, %v4471, %v3522
    %v4537 = vsel %vm4496, %v4472, %v3524
    %v4538 = vsel %vm4496, %v4473, %v3526
    %v4539 = vsel %vm4496, %v4474, %v3528
    %v4540 = vsel %vm4496, %v4475, %v3530
    %v4541 = vsel %vm4496, %v4476, %v3532
    %v4542 = vsel %vm4496, %v4477, %v3534
    %v4543 = vsel %vm4496, %v4478, %v3536
    %v4544 = vsel %vm4496, %v4479, %v3538
    %v4545 = vsel %vm4496, %v4480, %v3540
    %v4546 = vsel %vm4496, %v4481, %v3542
    %v4547 = vsel %vm4496, %v4482, %v3544
    %v4548 = vsel %vm4496, %v4483, %v3546
    %v4549 = vsel %vm4496, %v4484, %v3548
    %v4550 = vsel %vm4496, %v4485, %v3550
    %v4551 = vsel %vm4496, %v4486, %v3552
    %v4552 = vsel %vm4496, %v4487, %v3554
    %v4553 = vsel %vm4496, %v4488, %v3556
    %v4554 = vsel %vm4496, %v4489, %v3558
    %v4555 = vsel %vm4496, %v4490, %v3560
    %v4556 = vsel %vm4496, %v4491, %v3562
    %v4557 = vsel %vm4496, %v4492, %v3564
    %v4558 = vsel %vm4496, %v4493, %v3566
    %v4559 = vsel %vm4496, %v4494, %v3568
    %v4560 = vsel %vm4496, %v4495, %v3570
    %vm4561 = vcmask 392192
    %v4562 = vsel %vm4561, %v4497, %v3640
    %v4563 = vsel %vm4561, %v4498, %v3642
    %v4564 = vsel %vm4561, %v4499, %v3644
    %v4565 = vsel %vm4561, %v4500, %v3646
    %v4566 = vsel %vm4561, %v4501, %v3648
    %v4567 = vsel %vm4561, %v4502, %v3650
    %v4568 = vsel %vm4561, %v4503, %v3652
    %v4569 = vsel %vm4561, %v4504, %v3654
    %v4570 = vsel %vm4561, %v4505, %v3656
    %v4571 = vsel %vm4561, %v4506, %v3658
    %v4572 = vsel %vm4561, %v4507, %v3660
    %v4573 = vsel %vm4561, %v4508, %v3662
    %v4574 = vsel %vm4561, %v4509, %v3664
    %v4575 = vsel %vm4561, %v4510, %v3666
    %v4576 = vsel %vm4561, %v4511, %v3668
    %v4577 = vsel %vm4561, %v4512, %v3670
    %v4578 = vsel %vm4561, %v4513, %v3672
    %v4579 = vsel %vm4561, %v4514, %v3674
    %v4580 = vsel %vm4561, %v4515, %v3676
    %v4581 = vsel %vm4561, %v4516, %v3678
    %v4582 = vsel %vm4561, %v4517, %v3680
    %v4583 = vsel %vm4561, %v4518, %v3682
    %v4584 = vsel %vm4561, %v4519, %v3684
    %v4585 = vsel %vm4561, %v4520, %v3686
    %v4586 = vsel %vm4561, %v4521, %v3688
    %v4587 = vsel %vm4561, %v4522, %v3690
    %v4588 = vsel %vm4561, %v4523, %v3692
    %v4589 = vsel %vm4561, %v4524, %v3694
    %v4590 = vsel %vm4561, %v4525, %v3696
    %v4591 = vsel %vm4561, %v4526, %v3698
    %v4592 = vsel %vm4561, %v4527, %v3700
    %v4593 = vsel %vm4561, %v4528, %v3702
    %v4594 = vsel %vm4561, %v4529, %v3704
    %v4595 = vsel %vm4561, %v4530, %v3706
    %v4596 = vsel %vm4561, %v4531, %v3708
    %v4597 = vsel %vm4561, %v4532, %v3710
    %v4598 = vsel %vm4561, %v4533, %v3712
    %v4599 = vsel %vm4561, %v4534, %v3714
    %v4600 = vsel %vm4561, %v4535, %v3716
    %v4601 = vsel %vm4561, %v4536, %v3718
    %v4602 = vsel %vm4561, %v4537, %v3720
    %v4603 = vsel %vm4561, %v4538, %v3722
    %v4604 = vsel %vm4561, %v4539, %v3724
    %v4605 = vsel %vm4561, %v4540, %v3726
    %v4606 = vsel %vm4561, %v4541, %v3728
    %v4607 = vsel %vm4561, %v4542, %v3730
    %v4608 = vsel %vm4561, %v4543, %v3732
    %v4609 = vsel %vm4561, %v4544, %v3734
    %v4610 = vsel %vm4561, %v4545, %v3736
    %v4611 = vsel %vm4561, %v4546, %v3738
    %v4612 = vsel %vm4561, %v4547, %v3740
    %v4613 = vsel %vm4561, %v4548, %v3742
    %v4614 = vsel %vm4561, %v4549, %v3744
    %v4615 = vsel %vm4561, %v4550, %v3746
    %v4616 = vsel %vm4561, %v4551, %v3748
    %v4617 = vsel %vm4561, %v4552, %v3750
    %v4618 = vsel %vm4561, %v4553, %v3752
    %v4619 = vsel %vm4561, %v4554, %v3754
    %v4620 = vsel %vm4561, %v4555, %v3756
    %v4621 = vsel %vm4561, %v4556, %v3758
    %v4622 = vsel %vm4561, %v4557, %v3760
    %v4623 = vsel %vm4561, %v4558, %v3762
    %v4624 = vsel %vm4561, %v4559, %v3764
    %v4625 = vsel %vm4561, %v4560, %v3766
    %vm4626 = vcmask 457728
    %v4627 = vsel %vm4626, %v4562, %v3844
    %v4628 = vsel %vm4626, %v4563, %v3846
    %v4629 = vsel %vm4626, %v4564, %v3848
    %v4630 = vsel %vm4626, %v4565, %v3850
    %v4631 = vsel %vm4626, %v4566, %v3852
    %v4632 = vsel %vm4626, %v4567, %v3854
    %v4633 = vsel %vm4626, %v4568, %v3856
    %v4634 = vsel %vm4626, %v4569, %v3858
    %v4635 = vsel %vm4626, %v4570, %v3860
    %v4636 = vsel %vm4626, %v4571, %v3862
    %v4637 = vsel %vm4626, %v4572, %v3864
    %v4638 = vsel %vm4626, %v4573, %v3866
    %v4639 = vsel %vm4626, %v4574, %v3868
    %v4640 = vsel %vm4626, %v4575, %v3870
    %v4641 = vsel %vm4626, %v4576, %v3872
    %v4642 = vsel %vm4626, %v4577, %v3874
    %v4643 = vsel %vm4626, %v4578, %v3876
    %v4644 = vsel %vm4626, %v4579, %v3878
    %v4645 = vsel %vm4626, %v4580, %v3880
    %v4646 = vsel %vm4626, %v4581, %v3882
    %v4647 = vsel %vm4626, %v4582, %v3884
    %v4648 = vsel %vm4626, %v4583, %v3886
    %v4649 = vsel %vm4626, %v4584, %v3888
    %v4650 = vsel %vm4626, %v4585, %v3890
    %v4651 = vsel %vm4626, %v4586, %v3892
    %v4652 = vsel %vm4626, %v4587, %v3894
    %v4653 = vsel %vm4626, %v4588, %v3896
    %v4654 = vsel %vm4626, %v4589, %v3898
    %v4655 = vsel %vm4626, %v4590, %v3900
    %v4656 = vsel %vm4626, %v4591, %v3902
    %v4657 = vsel %vm4626, %v4592, %v3904
    %v4658 = vsel %vm4626, %v4593, %v3906
    %v4659 = vsel %vm4626, %v4594, %v3908
    %v4660 = vsel %vm4626, %v4595, %v3910
    %v4661 = vsel %vm4626, %v4596, %v3912
    %v4662 = vsel %vm4626, %v4597, %v3914
    %v4663 = vsel %vm4626, %v4598, %v3916
    %v4664 = vsel %vm4626, %v4599, %v3918
    %v4665 = vsel %vm4626, %v4600, %v3920
    %v4666 = vsel %vm4626, %v4601, %v3922
    %v4667 = vsel %vm4626, %v4602, %v3924
    %v4668 = vsel %vm4626, %v4603, %v3926
    %v4669 = vsel %vm4626, %v4604, %v3928
    %v4670 = vsel %vm4626, %v4605, %v3930
    %v4671 = vsel %vm4626, %v4606, %v3932
    %v4672 = vsel %vm4626, %v4607, %v3934
    %v4673 = vsel %vm4626, %v4608, %v3936
    %v4674 = vsel %vm4626, %v4609, %v3938
    %v4675 = vsel %vm4626, %v4610, %v3940
    %v4676 = vsel %vm4626, %v4611, %v3942
    %v4677 = vsel %vm4626, %v4612, %v3944
    %v4678 = vsel %vm4626, %v4613, %v3946
    %v4679 = vsel %vm4626, %v4614, %v3948
    %v4680 = vsel %vm4626, %v4615, %v3950
    %v4681 = vsel %vm4626, %v4616, %v3952
    %v4682 = vsel %vm4626, %v4617, %v3954
    %v4683 = vsel %vm4626, %v4618, %v3956
    %v4684 = vsel %vm4626, %v4619, %v3958
    %v4685 = vsel %vm4626, %v4620, %v3960
    %v4686 = vsel %vm4626, %v4621, %v3962
    %v4687 = vsel %vm4626, %v4622, %v3964
    %v4688 = vsel %vm4626, %v4623, %v3966
    %v4689 = vsel %vm4626, %v4624, %v3968
    %v4690 = vsel %vm4626, %v4625, %v3970
    %vm4691 = vcmask 523264
    %v4692 = vsel %vm4691, %v4627, %v4046
    %v4693 = vsel %vm4691, %v4628, %v4048
    %v4694 = vsel %vm4691, %v4629, %v4050
    %v4695 = vsel %vm4691, %v4630, %v4052
    %v4696 = vsel %vm4691, %v4631, %v4054
    %v4697 = vsel %vm4691, %v4632, %v4056
    %v4698 = vsel %vm4691, %v4633, %v4058
    %v4699 = vsel %vm4691, %v4634, %v4060
    %v4700 = vsel %vm4691, %v4635, %v4062
    %v4701 = vsel %vm4691, %v4636, %v4064
    %v4702 = vsel %vm4691, %v4637, %v4066
    %v4703 = vsel %vm4691, %v4638, %v4068
    %v4704 = vsel %vm4691, %v4639, %v4070
    %v4705 = vsel %vm4691, %v4640, %v4072
    %v4706 = vsel %vm4691, %v4641, %v4074
    %v4707 = vsel %vm4691, %v4642, %v4076
    %v4708 = vsel %vm4691, %v4643, %v4078
    %v4709 = vsel %vm4691, %v4644, %v4080
    %v4710 = vsel %vm4691, %v4645, %v4082
    %v4711 = vsel %vm4691, %v4646, %v4084
    %v4712 = vsel %vm4691, %v4647, %v4086
    %v4713 = vsel %vm4691, %v4648, %v4088
    %v4714 = vsel %vm4691, %v4649, %v4090
    %v4715 = vsel %vm4691, %v4650, %v4092
    %v4716 = vsel %vm4691, %v4651, %v4094
    %v4717 = vsel %vm4691, %v4652, %v4096
    %v4718 = vsel %vm4691, %v4653, %v4098
    %v4719 = vsel %vm4691, %v4654, %v4100
    %v4720 = vsel %vm4691, %v4655, %v4102
    %v4721 = vsel %vm4691, %v4656, %v4104
    %v4722 = vsel %vm4691, %v4657, %v4106
    %v4723 = vsel %vm4691, %v4658, %v4108
    %v4724 = vsel %vm4691, %v4659, %v4110
    %v4725 = vsel %vm4691, %v4660, %v4112
    %v4726 = vsel %vm4691, %v4661, %v4114
    %v4727 = vsel %vm4691, %v4662, %v4116
    %v4728 = vsel %vm4691, %v4663, %v4118
    %v4729 = vsel %vm4691, %v4664, %v4120
    %v4730 = vsel %vm4691, %v4665, %v4122
    %v4731 = vsel %vm4691, %v4666, %v4124
    %v4732 = vsel %vm4691, %v4667, %v4126
    %v4733 = vsel %vm4691, %v4668, %v4128
    %v4734 = vsel %vm4691, %v4669, %v4130
    %v4735 = vsel %vm4691, %v4670, %v4132
    %v4736 = vsel %vm4691, %v4671, %v4134
    %v4737 = vsel %vm4691, %v4672, %v4136
    %v4738 = vsel %vm4691, %v4673, %v4138
    %v4739 = vsel %vm4691, %v4674, %v4140
    %v4740 = vsel %vm4691, %v4675, %v4142
    %v4741 = vsel %vm4691, %v4676, %v4144
    %v4742 = vsel %vm4691, %v4677, %v4146
    %v4743 = vsel %vm4691, %v4678, %v4148
    %v4744 = vsel %vm4691, %v4679, %v4150
    %v4745 = vsel %vm4691, %v4680, %v4152
    %v4746 = vsel %vm4691, %v4681, %v4154
    %v4747 = vsel %vm4691, %v4682, %v4156
    %v4748 = vsel %vm4691, %v4683, %v4158
    %v4749 = vsel %vm4691, %v4684, %v4160
    %v4750 = vsel %vm4691, %v4685, %v4162
    %v4751 = vsel %vm4691, %v4686, %v4164
    %v4752 = vsel %vm4691, %v4687, %v4166
    %v4753 = vsel %vm4691, %v4688, %v4168
    %v4754 = vsel %vm4691, %v4689, %v4170
    %v4755 = vsel %vm4691, %v4690, %v4172
    %vm4756 = vcmask 588800
    %v4758 = vsel %vm4756, %v4692, 0
    %v4761 = vsel %vm4756, %v4693, 0
    %v4764 = vsel %vm4756, %v4694, 0
    %v4767 = vsel %vm4756, %v4695, 0
    %v4770 = vsel %vm4756, %v4696, 0
    %v4773 = vsel %vm4756, %v4697, 0
    %v4776 = vsel %vm4756, %v4698, 0
    %v4779 = vsel %vm4756, %v4699, 0
    %v4782 = vsel %vm4756, %v4700, 0
    %v4785 = vsel %vm4756, %v4701, 0
    %v4788 = vsel %vm4756, %v4702, 0
    %v4791 = vsel %vm4756, %v4703, 0
    %v4794 = vsel %vm4756, %v4704, 0
    %v4797 = vsel %vm4756, %v4705, 0
    %v4800 = vsel %vm4756, %v4706, 0
    %v4803 = vsel %vm4756, %v4707, 0
    %v4806 = vsel %vm4756, %v4708, 0
    %v4809 = vsel %vm4756, %v4709, 0
    %v4812 = vsel %vm4756, %v4710, 0
    %v4815 = vsel %vm4756, %v4711, 0
    %v4818 = vsel %vm4756, %v4712, 0
    %v4821 = vsel %vm4756, %v4713, 0
    %v4824 = vsel %vm4756, %v4714, 0
    %v4827 = vsel %vm4756, %v4715, 0
    %v4830 = vsel %vm4756, %v4716, 0
    %v4833 = vsel %vm4756, %v4717, 0
    %v4836 = vsel %vm4756, %v4718, 0
    %v4839 = vsel %vm4756, %v4719, 0
    %v4842 = vsel %vm4756, %v4720, 0
    %v4845 = vsel %vm4756, %v4721, 0
    %v4848 = vsel %vm4756, %v4722, 0
    %v4851 = vsel %vm4756, %v4723, 0
    %v4854 = vsel %vm4756, %v4724, 0
    %v4857 = vsel %vm4756, %v4725, 0
    %v4860 = vsel %vm4756, %v4726, 0
    %v4863 = vsel %vm4756, %v4727, 0
    %v4866 = vsel %vm4756, %v4728, 0
    %v4869 = vsel %vm4756, %v4729, 0
    %v4872 = vsel %vm4756, %v4730, 0
    %v4875 = vsel %vm4756, %v4731, 0
    %v4878 = vsel %vm4756, %v4732, 0
    %v4881 = vsel %vm4756, %v4733, 0
    %v4884 = vsel %vm4756, %v4734, 0
    %v4887 = vsel %vm4756, %v4735, 0
    %v4890 = vsel %vm4756, %v4736, 0
    %v4893 = vsel %vm4756, %v4737, 0
    %v4896 = vsel %vm4756, %v4738, 0
    %v4899 = vsel %vm4756, %v4739, 0
    %v4902 = vsel %vm4756, %v4740, 0
    %v4905 = vsel %vm4756, %v4741, 0
    %v4908 = vsel %vm4756, %v4742, 0
    %v4911 = vsel %vm4756, %v4743, 0
    %v4914 = vsel %vm4756, %v4744, 0
    %v4917 = vsel %vm4756, %v4745, 0
    %v4920 = vsel %vm4756, %v4746, 0
    %v4923 = vsel %vm4756, %v4747, 0
    %v4926 = vsel %vm4756, %v4748, 0
    %v4929 = vsel %vm4756, %v4749, 0
    %v4932 = vsel %vm4756, %v4750, 0
    %v4935 = vsel %vm4756, %v4751, 0
    %v4938 = vsel %vm4756, %v4752, 0
    %v4941 = vsel %vm4756, %v4753, 0
    %v4944 = vsel %vm4756, %v4754, 0
    %v4947 = vsel %vm4756, %v4755, 0
    %4949 = vmatpush.msra.mxu0 0.0
    %4950 = vmatpush.msra.mxu0 0.0
    %4951 = vmatpush.msra.mxu0 0.0
    %4952 = vmatpush.msra.mxu0 0.0
    %4953 = vmatpush.msra.mxu0 0.0
    %4954 = vmatpush.msra.mxu0 0.0
    %4955 = vmatpush.msra.mxu0 0.0
    %4956 = vmatpush.msra.mxu0 %v160
    %4957 = vmatpush.msra.mxu0 %v159
    %4958 = vmatpush.msra.mxu0 %v158
    %4959 = vmatpush.msra.mxu0 %v157
    %4960 = vmatpush.msra.mxu0 %v156
    %4961 = vmatpush.msra.mxu0 %v155
    %4962 = vmatpush.msra.mxu0 %v154
    %4963 = vmatpush.msra.mxu0 %v153
    %4964 = vmatpush.msra.mxu0 %v152
    %4965 = vmatmul.f32.gmra.mxu0 %v4758
    %v4966 = vpop.f32.mrf.mxu0
    %v4967 = vadd.f32 0.0, %v4966
    %4968 = vmatmul.f32.gmra.mxu0 %v4761
    %v4969 = vpop.f32.mrf.mxu0
    %v4970 = vadd.f32 0.0, %v4969
    %4971 = vmatmul.f32.gmra.mxu0 %v4764
    %v4972 = vpop.f32.mrf.mxu0
    %v4973 = vadd.f32 0.0, %v4972
    %4974 = vmatmul.f32.gmra.mxu0 %v4767
    %v4975 = vpop.f32.mrf.mxu0
    %v4976 = vadd.f32 0.0, %v4975
    %4977 = vmatmul.f32.gmra.mxu0 %v4770
    %v4978 = vpop.f32.mrf.mxu0
    %v4979 = vadd.f32 0.0, %v4978
    %4980 = vmatmul.f32.gmra.mxu0 %v4773
    %v4981 = vpop.f32.mrf.mxu0
    %v4982 = vadd.f32 0.0, %v4981
    %4983 = vmatmul.f32.gmra.mxu0 %v4776
    %v4984 = vpop.f32.mrf.mxu0
    %v4985 = vadd.f32 0.0, %v4984
    %4986 = vmatmul.f32.gmra.mxu0 %v4779
    %v4987 = vpop.f32.mrf.mxu0
    %v4988 = vadd.f32 0.0, %v4987
    %4989 = vmatmul.f32.gmra.mxu0 %v4782
    %v4990 = vpop.f32.mrf.mxu0
    %v4991 = vadd.f32 0.0, %v4990
    %4992 = vmatmul.f32.gmra.mxu0 %v4785
    %v4993 = vpop.f32.mrf.mxu0
    %v4994 = vadd.f32 0.0, %v4993
    %4995 = vmatmul.f32.gmra.mxu0 %v4788
    %v4996 = vpop.f32.mrf.mxu0
    %v4997 = vadd.f32 0.0, %v4996
    %4998 = vmatmul.f32.gmra.mxu0 %v4791
    %v4999 = vpop.f32.mrf.mxu0
    %v5000 = vadd.f32 0.0, %v4999
    %5001 = vmatmul.f32.gmra.mxu0 %v4794
    %v5002 = vpop.f32.mrf.mxu0
    %v5003 = vadd.f32 0.0, %v5002
    %5004 = vmatmul.f32.gmra.mxu0 %v4797
    %v5005 = vpop.f32.mrf.mxu0
    %v5006 = vadd.f32 0.0, %v5005
    %5007 = vmatmul.f32.gmra.mxu0 %v4800
    %v5008 = vpop.f32.mrf.mxu0
    %v5009 = vadd.f32 0.0, %v5008
    %5010 = vmatmul.f32.gmra.mxu0 %v4803
    %v5011 = vpop.f32.mrf.mxu0
    %v5012 = vadd.f32 0.0, %v5011
    %5013 = vmatmul.f32.gmra.mxu0 %v4806
    %v5014 = vpop.f32.mrf.mxu0
    %v5015 = vadd.f32 0.0, %v5014
    %5016 = vmatmul.f32.gmra.mxu0 %v4809
    %v5017 = vpop.f32.mrf.mxu0
    %v5018 = vadd.f32 0.0, %v5017
    %5019 = vmatmul.f32.gmra.mxu0 %v4812
    %v5020 = vpop.f32.mrf.mxu0
    %v5021 = vadd.f32 0.0, %v5020
    %5022 = vmatmul.f32.gmra.mxu0 %v4815
    %v5023 = vpop.f32.mrf.mxu0
    %v5024 = vadd.f32 0.0, %v5023
    %5025 = vmatmul.f32.gmra.mxu0 %v4818
    %v5026 = vpop.f32.mrf.mxu0
    %v5027 = vadd.f32 0.0, %v5026
    %5028 = vmatmul.f32.gmra.mxu0 %v4821
    %v5029 = vpop.f32.mrf.mxu0
    %v5030 = vadd.f32 0.0, %v5029
    %5031 = vmatmul.f32.gmra.mxu0 %v4824
    %v5032 = vpop.f32.mrf.mxu0
    %v5033 = vadd.f32 0.0, %v5032
    %5034 = vmatmul.f32.gmra.mxu0 %v4827
    %v5035 = vpop.f32.mrf.mxu0
    %v5036 = vadd.f32 0.0, %v5035
    %5037 = vmatmul.f32.gmra.mxu0 %v4830
    %v5038 = vpop.f32.mrf.mxu0
    %v5039 = vadd.f32 0.0, %v5038
    %5040 = vmatmul.f32.gmra.mxu0 %v4833
    %v5041 = vpop.f32.mrf.mxu0
    %v5042 = vadd.f32 0.0, %v5041
    %5043 = vmatmul.f32.gmra.mxu0 %v4836
    %v5044 = vpop.f32.mrf.mxu0
    %v5045 = vadd.f32 0.0, %v5044
    %5046 = vmatmul.f32.gmra.mxu0 %v4839
    %v5047 = vpop.f32.mrf.mxu0
    %v5048 = vadd.f32 0.0, %v5047
    %5049 = vmatmul.f32.gmra.mxu0 %v4842
    %v5050 = vpop.f32.mrf.mxu0
    %v5051 = vadd.f32 0.0, %v5050
    %5052 = vmatmul.f32.gmra.mxu0 %v4845
    %v5053 = vpop.f32.mrf.mxu0
    %v5054 = vadd.f32 0.0, %v5053
    %5055 = vmatmul.f32.gmra.mxu0 %v4848
    %v5056 = vpop.f32.mrf.mxu0
    %v5057 = vadd.f32 0.0, %v5056
    %5058 = vmatmul.f32.gmra.mxu0 %v4851
    %v5059 = vpop.f32.mrf.mxu0
    %v5060 = vadd.f32 0.0, %v5059
    %5061 = vmatmul.f32.gmra.mxu0 %v4854
    %v5062 = vpop.f32.mrf.mxu0
    %v5063 = vadd.f32 0.0, %v5062
    %5064 = vmatmul.f32.gmra.mxu0 %v4857
    %v5065 = vpop.f32.mrf.mxu0
    %v5066 = vadd.f32 0.0, %v5065
    %5067 = vmatmul.f32.gmra.mxu0 %v4860
    %v5068 = vpop.f32.mrf.mxu0
    %v5069 = vadd.f32 0.0, %v5068
    %5070 = vmatmul.f32.gmra.mxu0 %v4863
    %v5071 = vpop.f32.mrf.mxu0
    %v5072 = vadd.f32 0.0, %v5071
    %5073 = vmatmul.f32.gmra.mxu0 %v4866
    %v5074 = vpop.f32.mrf.mxu0
    %v5075 = vadd.f32 0.0, %v5074
    %5076 = vmatmul.f32.gmra.mxu0 %v4869
    %v5077 = vpop.f32.mrf.mxu0
    %v5078 = vadd.f32 0.0, %v5077
    %5079 = vmatmul.f32.gmra.mxu0 %v4872
    %v5080 = vpop.f32.mrf.mxu0
    %v5081 = vadd.f32 0.0, %v5080
    %5082 = vmatmul.f32.gmra.mxu0 %v4875
    %v5083 = vpop.f32.mrf.mxu0
    %v5084 = vadd.f32 0.0, %v5083
    %5085 = vmatmul.f32.gmra.mxu0 %v4878
    %v5086 = vpop.f32.mrf.mxu0
    %v5087 = vadd.f32 0.0, %v5086
    %5088 = vmatmul.f32.gmra.mxu0 %v4881
    %v5089 = vpop.f32.mrf.mxu0
    %v5090 = vadd.f32 0.0, %v5089
    %5091 = vmatmul.f32.gmra.mxu0 %v4884
    %v5092 = vpop.f32.mrf.mxu0
    %v5093 = vadd.f32 0.0, %v5092
    %5094 = vmatmul.f32.gmra.mxu0 %v4887
    %v5095 = vpop.f32.mrf.mxu0
    %v5096 = vadd.f32 0.0, %v5095
    %5097 = vmatmul.f32.gmra.mxu0 %v4890
    %v5098 = vpop.f32.mrf.mxu0
    %v5099 = vadd.f32 0.0, %v5098
    %5100 = vmatmul.f32.gmra.mxu0 %v4893
    %v5101 = vpop.f32.mrf.mxu0
    %v5102 = vadd.f32 0.0, %v5101
    %5103 = vmatmul.f32.gmra.mxu0 %v4896
    %v5104 = vpop.f32.mrf.mxu0
    %v5105 = vadd.f32 0.0, %v5104
    %5106 = vmatmul.f32.gmra.mxu0 %v4899
    %v5107 = vpop.f32.mrf.mxu0
    %v5108 = vadd.f32 0.0, %v5107
    %5109 = vmatmul.f32.gmra.mxu0 %v4902
    %v5110 = vpop.f32.mrf.mxu0
    %v5111 = vadd.f32 0.0, %v5110
    %5112 = vmatmul.f32.gmra.mxu0 %v4905
    %v5113 = vpop.f32.mrf.mxu0
    %v5114 = vadd.f32 0.0, %v5113
    %5115 = vmatmul.f32.gmra.mxu0 %v4908
    %v5116 = vpop.f32.mrf.mxu0
    %v5117 = vadd.f32 0.0, %v5116
    %5118 = vmatmul.f32.gmra.mxu0 %v4911
    %v5119 = vpop.f32.mrf.mxu0
    %v5120 = vadd.f32 0.0, %v5119
    %5121 = vmatmul.f32.gmra.mxu0 %v4914
    %v5122 = vpop.f32.mrf.mxu0
    %v5123 = vadd.f32 0.0, %v5122
    %5124 = vmatmul.f32.gmra.mxu0 %v4917
    %v5125 = vpop.f32.mrf.mxu0
    %v5126 = vadd.f32 0.0, %v5125
    %5127 = vmatmul.f32.gmra.mxu0 %v4920
    %v5128 = vpop.f32.mrf.mxu0
    %v5129 = vadd.f32 0.0, %v5128
    %5130 = vmatmul.f32.gmra.mxu0 %v4923
    %v5131 = vpop.f32.mrf.mxu0
    %v5132 = vadd.f32 0.0, %v5131
    %5133 = vmatmul.f32.gmra.mxu0 %v4926
    %v5134 = vpop.f32.mrf.mxu0
    %v5135 = vadd.f32 0.0, %v5134
    %5136 = vmatmul.f32.gmra.mxu0 %v4929
    %v5137 = vpop.f32.mrf.mxu0
    %v5138 = vadd.f32 0.0, %v5137
    %5139 = vmatmul.f32.gmra.mxu0 %v4932
    %v5140 = vpop.f32.mrf.mxu0
    %v5141 = vadd.f32 0.0, %v5140
    %5142 = vmatmul.f32.gmra.mxu0 %v4935
    %v5143 = vpop.f32.mrf.mxu0
    %v5144 = vadd.f32 0.0, %v5143
    %5145 = vmatmul.f32.gmra.mxu0 %v4938
    %v5146 = vpop.f32.mrf.mxu0
    %v5147 = vadd.f32 0.0, %v5146
    %5148 = vmatmul.f32.gmra.mxu0 %v4941
    %v5149 = vpop.f32.mrf.mxu0
    %v5150 = vadd.f32 0.0, %v5149
    %5151 = vmatmul.f32.gmra.mxu0 %v4944
    %v5152 = vpop.f32.mrf.mxu0
    %v5153 = vadd.f32 0.0, %v5152
    %5154 = vmatmul.f32.gmra.mxu0 %v4947
    %v5155 = vpop.f32.mrf.mxu0
    %v5156 = vadd.f32 0.0, %v5155
    %5157 = vdwg.mxu0
    %v5158 = vmul.f32 %v4967, %v4967
    %v5159 = vmul.f32 %v4970, %v4970
    %v5160 = vmul.f32 %v4973, %v4973
    %v5161 = vmul.f32 %v4976, %v4976
    %v5162 = vmul.f32 %v4979, %v4979
    %v5163 = vmul.f32 %v4982, %v4982
    %v5164 = vmul.f32 %v4985, %v4985
    %v5165 = vmul.f32 %v4988, %v4988
    %v5166 = vmul.f32 %v4991, %v4991
    %v5167 = vmul.f32 %v4994, %v4994
    %v5168 = vmul.f32 %v4997, %v4997
    %v5169 = vmul.f32 %v5000, %v5000
    %v5170 = vmul.f32 %v5003, %v5003
    %v5171 = vmul.f32 %v5006, %v5006
    %v5172 = vmul.f32 %v5009, %v5009
    %v5173 = vmul.f32 %v5012, %v5012
    %v5174 = vmul.f32 %v5015, %v5015
    %v5175 = vmul.f32 %v5018, %v5018
    %v5176 = vmul.f32 %v5021, %v5021
    %v5177 = vmul.f32 %v5024, %v5024
    %v5178 = vmul.f32 %v5027, %v5027
    %v5179 = vmul.f32 %v5030, %v5030
    %v5180 = vmul.f32 %v5033, %v5033
    %v5181 = vmul.f32 %v5036, %v5036
    %v5182 = vmul.f32 %v5039, %v5039
    %v5183 = vmul.f32 %v5042, %v5042
    %v5184 = vmul.f32 %v5045, %v5045
    %v5185 = vmul.f32 %v5048, %v5048
    %v5186 = vmul.f32 %v5051, %v5051
    %v5187 = vmul.f32 %v5054, %v5054
    %v5188 = vmul.f32 %v5057, %v5057
    %v5189 = vmul.f32 %v5060, %v5060
    %v5190 = vmul.f32 %v5063, %v5063
    %v5191 = vmul.f32 %v5066, %v5066
    %v5192 = vmul.f32 %v5069, %v5069
    %v5193 = vmul.f32 %v5072, %v5072
    %v5194 = vmul.f32 %v5075, %v5075
    %v5195 = vmul.f32 %v5078, %v5078
    %v5196 = vmul.f32 %v5081, %v5081
    %v5197 = vmul.f32 %v5084, %v5084
    %v5198 = vmul.f32 %v5087, %v5087
    %v5199 = vmul.f32 %v5090, %v5090
    %v5200 = vmul.f32 %v5093, %v5093
    %v5201 = vmul.f32 %v5096, %v5096
    %v5202 = vmul.f32 %v5099, %v5099
    %v5203 = vmul.f32 %v5102, %v5102
    %v5204 = vmul.f32 %v5105, %v5105
    %v5205 = vmul.f32 %v5108, %v5108
    %v5206 = vmul.f32 %v5111, %v5111
    %v5207 = vmul.f32 %v5114, %v5114
    %v5208 = vmul.f32 %v5117, %v5117
    %v5209 = vmul.f32 %v5120, %v5120
    %v5210 = vmul.f32 %v5123, %v5123
    %v5211 = vmul.f32 %v5126, %v5126
    %v5212 = vmul.f32 %v5129, %v5129
    %v5213 = vmul.f32 %v5132, %v5132
    %v5214 = vmul.f32 %v5135, %v5135
    %v5215 = vmul.f32 %v5138, %v5138
    %v5216 = vmul.f32 %v5141, %v5141
    %v5217 = vmul.f32 %v5144, %v5144
    %v5218 = vmul.f32 %v5147, %v5147
    %v5219 = vmul.f32 %v5150, %v5150
    %v5220 = vmul.f32 %v5153, %v5153
    %v5221 = vmul.f32 %v5156, %v5156
    %v5222 = vsel %vm4301, %v5158, 0.0
    %v5223 = vsel %vm4301, %v5159, 0.0
    %v5224 = vadd.f32 %v5222, %v5223
    %v5225 = vsel %vm4301, %v5160, 0.0
    %v5226 = vadd.f32 %v5224, %v5225
    %v5227 = vsel %vm4301, %v5161, 0.0
    %v5228 = vadd.f32 %v5226, %v5227
    %v5229 = vsel %vm4301, %v5162, 0.0
    %v5230 = vadd.f32 %v5228, %v5229
    %v5231 = vsel %vm4301, %v5163, 0.0
    %v5232 = vadd.f32 %v5230, %v5231
    %v5233 = vsel %vm4301, %v5164, 0.0
    %v5234 = vadd.f32 %v5232, %v5233
    %v5235 = vsel %vm4301, %v5165, 0.0
    %v5236 = vadd.f32 %v5234, %v5235
    %v5237 = vsel %vm4301, %v5166, 0.0
    %v5238 = vadd.f32 %v5236, %v5237
    %v5239 = vsel %vm4301, %v5167, 0.0
    %v5240 = vadd.f32 %v5238, %v5239
    %v5241 = vsel %vm4301, %v5168, 0.0
    %v5242 = vadd.f32 %v5240, %v5241
    %v5243 = vsel %vm4301, %v5169, 0.0
    %v5244 = vadd.f32 %v5242, %v5243
    %v5245 = vsel %vm4301, %v5170, 0.0
    %v5246 = vadd.f32 %v5244, %v5245
    %v5247 = vsel %vm4301, %v5171, 0.0
    %v5248 = vadd.f32 %v5246, %v5247
    %v5249 = vsel %vm4301, %v5172, 0.0
    %v5250 = vadd.f32 %v5248, %v5249
    %v5251 = vsel %vm4301, %v5173, 0.0
    %v5252 = vadd.f32 %v5250, %v5251
    %v5253 = vsel %vm4301, %v5174, 0.0
    %v5254 = vadd.f32 %v5252, %v5253
    %v5255 = vsel %vm4301, %v5175, 0.0
    %v5256 = vadd.f32 %v5254, %v5255
    %v5257 = vsel %vm4301, %v5176, 0.0
    %v5258 = vadd.f32 %v5256, %v5257
    %v5259 = vsel %vm4301, %v5177, 0.0
    %v5260 = vadd.f32 %v5258, %v5259
    %v5261 = vsel %vm4301, %v5178, 0.0
    %v5262 = vadd.f32 %v5260, %v5261
    %v5263 = vsel %vm4301, %v5179, 0.0
    %v5264 = vadd.f32 %v5262, %v5263
    %v5265 = vsel %vm4301, %v5180, 0.0
    %v5266 = vadd.f32 %v5264, %v5265
    %v5267 = vsel %vm4301, %v5181, 0.0
    %v5268 = vadd.f32 %v5266, %v5267
    %v5269 = vsel %vm4301, %v5182, 0.0
    %v5270 = vadd.f32 %v5268, %v5269
    %v5271 = vsel %vm4301, %v5183, 0.0
    %v5272 = vadd.f32 %v5270, %v5271
    %v5273 = vsel %vm4301, %v5184, 0.0
    %v5274 = vadd.f32 %v5272, %v5273
    %v5275 = vsel %vm4301, %v5185, 0.0
    %v5276 = vadd.f32 %v5274, %v5275
    %v5277 = vsel %vm4301, %v5186, 0.0
    %v5278 = vadd.f32 %v5276, %v5277
    %v5279 = vsel %vm4301, %v5187, 0.0
    %v5280 = vadd.f32 %v5278, %v5279
    %v5281 = vsel %vm4301, %v5188, 0.0
    %v5282 = vadd.f32 %v5280, %v5281
    %v5283 = vsel %vm4301, %v5189, 0.0
    %v5284 = vadd.f32 %v5282, %v5283
    %v5285 = vsel %vm4301, %v5190, 0.0
    %v5286 = vadd.f32 %v5284, %v5285
    %v5287 = vsel %vm4301, %v5191, 0.0
    %v5288 = vadd.f32 %v5286, %v5287
    %v5289 = vsel %vm4301, %v5192, 0.0
    %v5290 = vadd.f32 %v5288, %v5289
    %v5291 = vsel %vm4301, %v5193, 0.0
    %v5292 = vadd.f32 %v5290, %v5291
    %v5293 = vsel %vm4301, %v5194, 0.0
    %v5294 = vadd.f32 %v5292, %v5293
    %v5295 = vsel %vm4301, %v5195, 0.0
    %v5296 = vadd.f32 %v5294, %v5295
    %v5297 = vsel %vm4301, %v5196, 0.0
    %v5298 = vadd.f32 %v5296, %v5297
    %v5299 = vsel %vm4301, %v5197, 0.0
    %v5300 = vadd.f32 %v5298, %v5299
    %v5301 = vsel %vm4301, %v5198, 0.0
    %v5302 = vadd.f32 %v5300, %v5301
    %v5303 = vsel %vm4301, %v5199, 0.0
    %v5304 = vadd.f32 %v5302, %v5303
    %v5305 = vsel %vm4301, %v5200, 0.0
    %v5306 = vadd.f32 %v5304, %v5305
    %v5307 = vsel %vm4301, %v5201, 0.0
    %v5308 = vadd.f32 %v5306, %v5307
    %v5309 = vsel %vm4301, %v5202, 0.0
    %v5310 = vadd.f32 %v5308, %v5309
    %v5311 = vsel %vm4301, %v5203, 0.0
    %v5312 = vadd.f32 %v5310, %v5311
    %v5313 = vsel %vm4301, %v5204, 0.0
    %v5314 = vadd.f32 %v5312, %v5313
    %v5315 = vsel %vm4301, %v5205, 0.0
    %v5316 = vadd.f32 %v5314, %v5315
    %v5317 = vsel %vm4301, %v5206, 0.0
    %v5318 = vadd.f32 %v5316, %v5317
    %v5319 = vsel %vm4301, %v5207, 0.0
    %v5320 = vadd.f32 %v5318, %v5319
    %v5321 = vsel %vm4301, %v5208, 0.0
    %v5322 = vadd.f32 %v5320, %v5321
    %v5323 = vsel %vm4301, %v5209, 0.0
    %v5324 = vadd.f32 %v5322, %v5323
    %v5325 = vsel %vm4301, %v5210, 0.0
    %v5326 = vadd.f32 %v5324, %v5325
    %v5327 = vsel %vm4301, %v5211, 0.0
    %v5328 = vadd.f32 %v5326, %v5327
    %v5329 = vsel %vm4301, %v5212, 0.0
    %v5330 = vadd.f32 %v5328, %v5329
    %v5331 = vsel %vm4301, %v5213, 0.0
    %v5332 = vadd.f32 %v5330, %v5331
    %v5333 = vsel %vm4301, %v5214, 0.0
    %v5334 = vadd.f32 %v5332, %v5333
    %v5335 = vsel %vm4301, %v5215, 0.0
    %v5336 = vadd.f32 %v5334, %v5335
    %v5337 = vsel %vm4301, %v5216, 0.0
    %v5338 = vadd.f32 %v5336, %v5337
    %v5339 = vsel %vm4301, %v5217, 0.0
    %v5340 = vadd.f32 %v5338, %v5339
    %v5341 = vsel %vm4301, %v5218, 0.0
    %v5342 = vadd.f32 %v5340, %v5341
    %v5343 = vsel %vm4301, %v5219, 0.0
    %v5344 = vadd.f32 %v5342, %v5343
    %v5345 = vsel %vm4301, %v5220, 0.0
    %v5346 = vadd.f32 %v5344, %v5345
    %v5347 = vsel %vm4301, %v5221, 0.0
    %v5348 = vadd.f32 %v5346, %v5347
    %5349 = vadd.xlane.f32.xlu0 %v5348
    %v5350 = vpop.xlane.xlu0 %5349
    %v5351 = vrot.slane %v5350, 4
    %v5352 = vadd.f32 %v5350, %v5351
    %v5353 = vrot.slane %v5352, 2
    %v5354 = vadd.f32 %v5352, %v5353
    %v5355 = vrot.slane %v5354, 1
    %v5356 = vadd.f32 %v5354, %v5355
    %s5357 = vtos %v5356
    %s5358 = smul.f32 %s5357, 0.00012207031
    %s5359 = sadd.f32 %s1948, %s5358
    %v5360 = vstv %s5359
    %v5361 = vadd.f32 %v5360, 0.0
    %vm5362 = vcmask 0
    %5363 = vst.msk [vmem:[#allocation3] sm:$0x1] %vm5362, %v5361
    // Predicated region
    $region18: #{self_loss.1} parent=1 // pred_check
      _
    $region19: #{self_loss.1} parent=1 // pred_check_branch
      %5365 = sbr.rel (0) target = $region21
    $region20: #{self_loss.1} parent=1 // pred_region
      %5367 = vsyncadd [#allocation4], 0
      %s5369 = sshll.u32 [#allocation3], 4
      %s5370 = int_to_ptr.vmem [resolvable:$true] %s5369
      %s5371 = sshll.u32 %s4, 4
      %s5372 = int_to_ptr.hbm [resolvable:$true] %s5371
      %5374 = dma.vmem_to_hbm [thread:$0]  %s5370, 16, %s5372, [#allocation4]
    $region21: #{self_loss.1} parent=1 // pred_fallthru
      _
    // Predicated region
    $region22: #{self_loss.1} parent=1 // pred_check
      _
    $region23: #{self_loss.1} parent=1 // pred_check_branch
      %5376 = sbr.rel (0) target = $region25
    $region24: #{self_loss.1} parent=1 // pred_region
      %5378 = dma.done [#allocation4], 16
    $region25: #{self_loss.1} parent=1 // pred_fallthru
      _
    %5379 = vsyncpa [#allocation4], 1

</llo_original>
